<compile_context>
chip_gen: v7x
topology: tpu7x:2x2x1
jax: 0.10.0
libtpu: 0.0.40
codegen_flags: <defaults>
</compile_context>

<pallas_src>
import functools
import math

import jax
import jax.numpy as jnp
from jax import lax
from jax.experimental import pallas as pl
from jax.experimental.pallas import tpu as pltpu

_BF16 = jnp.bfloat16
_F32 = jnp.float32


# ----------------------------------------------------------------------------
# In-kernel helpers
# ----------------------------------------------------------------------------
def _gelu(x):
    # TODO(synk): HF BERT 'gelu' is erf-based; tanh approximation used here (EUP tanh).
    c = 0.7978845608028654  # sqrt(2/pi)
    return 0.5 * x * (1.0 + jnp.tanh(c * (x + 0.044715 * x * x * x)))


def _layernorm(x, g, b, eps=1e-12):
    mu = jnp.mean(x, axis=-1, keepdims=True)
    var = jnp.mean(jnp.square(x - mu), axis=-1, keepdims=True)
    return (x - mu) * lax.rsqrt(var + eps) * g + b


def _mm(a, b):
    # bf16 MXU matmul with f32 accumulation.
    return jnp.dot(a.astype(_BF16), b.astype(_BF16), preferred_element_type=_F32)


# ----------------------------------------------------------------------------
# Fused BERT forward kernel: embeddings + LN, all encoder layers, pooler + classifier.
# grid = (B, n_layers); batch axis "parallel" (v7x megacore), layer axis "arbitrary".
# The (S, H) residual stream stays resident in a VMEM scratch across all layer steps.
# ----------------------------------------------------------------------------
def _fused_bert_kernel(word_ref, pt_ref, ht_ref, mask_ref, misc_ref,
                       wqkv_ref, wo_ref, vecs_ref, wi_ref, wo2_ref,
                       pool_w_ref, cls_w_ref, out_ref, act_ref, ctx_ref,
                       *, seq, hidden, inter, num_heads, num_labels):
    l = pl.program_id(1)
    n_layers = pl.num_programs(1)
    S, H, I = seq, hidden, inter
    dh = H // num_heads

    misc = misc_ref[...]                        # (8, max(H, NL)): emb LN g/b, pool_b, cls_b

    # ---- layer-0 phase: word[1]=head_embed, word[2]=tail_embed, + pos + type, LayerNorm ----
    @pl.when(l == 0)
    def _init():
        w = word_ref[...]                                   # (S, H) token embeddings
        ht = ht_ref[...]                                    # (2, H) graph head/tail embeds
        row = lax.broadcasted_iota(jnp.int32, (S, 1), 0)
        w = jnp.where(row == 1, ht[0:1, :], w)              # input_embed[:, 1] = head_embed
        w = jnp.where(row == 2, ht[1:2, :], w)              # input_embed[:, 2] = tail_embed
        x0 = w + pt_ref[...]                                # + position + token_type embeds
        act_ref[...] = _layernorm(x0, misc[0:1, :H], misc[1:2, :H])
        # TODO(synk): dropout layers omitted (deterministic forward).

    x = act_ref[...]                                        # (S, H) residual stream (VMEM)

    vecs = vecs_ref[...]                                    # (8, W) per-layer bias / LN slab
    bqkv = vecs[0:1, 0:3 * H]
    bo = vecs[1:2, 0:H]
    ln1g, ln1b = vecs[2:3, 0:H], vecs[3:4, 0:H]
    bi = vecs[4:5, 0:I]
    bo2 = vecs[5:6, 0:H]
    ln2g, ln2b = vecs[6:7, 0:H], vecs[7:8, 0:H]

    # fused QKV projection; 1/sqrt(dh) already folded into the Q third of wqkv at init
    xb = x.astype(_BF16)
    qkv = jnp.dot(xb, wqkv_ref[...], preferred_element_type=_F32) + bqkv   # (S, 3H)
    qkv_b = qkv.astype(_BF16)                               # cast once (v5e: casts cost VALU)

    add_mask = (1.0 - mask_ref[...]) * (-1e9)               # (1, S) additive key mask

    # per-head softmax attention; head contexts land at lane offsets of the ctx scratch so
    # head-merge + out-projection is a single full-width (S,H)@(H,H) MXU matmul (K=128).
    for h in range(num_heads):
        c0 = h * dh
        qh = qkv_b[:, c0:c0 + dh]
        kh = qkv_b[:, H + c0:H + c0 + dh]
        vh = qkv_b[:, 2 * H + c0:2 * H + c0 + dh]
        s = lax.dot_general(qh, kh, (((1,), (1,)), ((), ())),
                            preferred_element_type=_F32)    # (S, S)
        s = s + add_mask
        s = s - jnp.max(s, axis=-1, keepdims=True)
        p = jnp.exp(s)
        p = p * pl.reciprocal(jnp.sum(p, axis=-1, keepdims=True), approx=True)  # EUP slot
        ctx_ref[:, c0:c0 + dh] = jnp.dot(p.astype(_BF16), vh,
                                         preferred_element_type=_F32)           # (S, dh)

    attn = jnp.dot(ctx_ref[...].astype(_BF16), wo_ref[...],
                   preferred_element_type=_F32) + bo        # merged-head out-projection
    y1 = _layernorm(attn + x, ln1g, ln1b)                   # residual + LN1

    hmid = _gelu(jnp.dot(y1.astype(_BF16), wi_ref[...],
                         preferred_element_type=_F32) + bi)               # (S, I)
    ffn = jnp.dot(hmid.astype(_BF16), wo2_ref[...],
                  preferred_element_type=_F32) + bo2
    y2 = _layernorm(ffn + y1, ln2g, ln2b)                   # residual + LN2
    act_ref[...] = y2

    # ---- last-layer phase: pooler (tanh on CLS row) + classifier ----
    @pl.when(l == n_layers - 1)
    def _head():
        cls_row = y2[0:1, :].astype(_BF16)                  # CLS token of this batch element
        pooled = jnp.tanh(jnp.dot(cls_row, pool_w_ref[...],
                                  preferred_element_type=_F32) + misc[2:3, :H])
        logits = jnp.dot(pooled.astype(_BF16), cls_w_ref[...],
                         preferred_element_type=_F32) + misc[3:4, :num_labels]
        out_ref[...] = logits                               # (1, NL)


@functools.lru_cache(maxsize=None)
def _fused_bert_fn(B, S, H, I, NH, NL, L):
    W = max(3 * H, I)
    W2 = max(H, NL)
    kernel = functools.partial(_fused_bert_kernel, seq=S, hidden=H, inter=I,
                               num_heads=NH, num_labels=NL)
    return pl.pallas_call(
        kernel,
        out_shape=jax.ShapeDtypeStruct((B, 1, NL), _F32),
        grid_spec=pltpu.PrefetchScalarGridSpec(
            num_scalar_prefetch=0,
            grid=(B, L),
            in_specs=[
                pl.BlockSpec((None, S, H), lambda b, l: (b, 0, 0)),        # word embeds
                pl.BlockSpec((None, S, H), lambda b, l: (b, 0, 0)),        # pos+type embeds
                pl.BlockSpec((None, 2, H), lambda b, l: (b, 0, 0)),        # head/tail rows
                pl.BlockSpec((None, 1, S), lambda b, l: (b, 0, 0)),        # attention mask
                pl.BlockSpec((8, W2), lambda b, l: (0, 0)),                # misc vector slab
                pl.BlockSpec((None, H, 3 * H), lambda b, l: (l, 0, 0)),    # fused QKV weight
                pl.BlockSpec((None, H, H), lambda b, l: (l, 0, 0)),        # attn out-proj
                pl.BlockSpec((None, 8, W), lambda b, l: (l, 0, 0)),        # per-layer vec slab
                pl.BlockSpec((None, H, I), lambda b, l: (l, 0, 0)),        # FFN in weight
                pl.BlockSpec((None, I, H), lambda b, l: (l, 0, 0)),        # FFN out weight
                pl.BlockSpec((H, H), lambda b, l: (0, 0)),                 # pooler weight
                pl.BlockSpec((H, NL), lambda b, l: (0, 0)),                # classifier weight
            ],
            out_specs=pl.BlockSpec((None, 1, NL), lambda b, l: (b, 0, 0)),
            scratch_shapes=[pltpu.VMEM((S, H), _F32),                      # residual stream
                            pltpu.VMEM((S, H), _F32)],                     # merged head ctx
        ),
        compiler_params=pltpu.CompilerParams(
            dimension_semantics=("parallel", "arbitrary"),
            vmem_limit_bytes=32 * 1024 * 1024),
    )


def bert_classifier(params, word, pt, ht, attention_mask, num_heads):
    B, S, H = word.shape
    L = params["wqkv_all"].shape[0]
    I = params["wi_all"].shape[2]
    NL = params["cls_w"].shape[1]
    mask = attention_mask.astype(_F32).reshape(B, 1, S)
    fn = _fused_bert_fn(B, S, H, I, num_heads, NL, L)
    logits = fn(word, pt, ht, mask, params["misc"],
                params["wqkv_all"], params["wo_all"], params["vecs_all"],
                params["wi_all"], params["wo2_all"],
                params["pool_w"], params["cls_w"])
    return logits.reshape(B, NL)


# ----------------------------------------------------------------------------
# Fused GraphEncoder kernel for BOTH graphs at once (disjoint-union batching):
#   ConvAT edge attention + max-shifted per-dst-node softmax aggregation +
#   MultiHeadGATLayer(1 head) scalar mean + ReLU + dgl.sum_nodes readout.
# ----------------------------------------------------------------------------
def _graph_kernel(hsrc_ref, hdst_ref, pat_ref, hnode_ref, adj_ref, adjt_ref,
                  macro_ref, macrot_ref, sub_ref, w_ref, a1_ref, a2_ref, o_ref):
    hs = hsrc_ref[...]
    hd = hdst_ref[...]
    pt = pat_ref[...]
    hn = hnode_ref[...]
    adj = adj_ref[...]                                       # (N, E) dst one-hot
    adj_t = adjt_ref[...]                                    # (E, N)

    # edge_attention: z1 = fc(h_src * p), zd = fc(h_dst), e = relu(attn_fc([z1, zd]))
    z1 = _mm(hs * pt, w_ref[...])                            # (E, H)
    zd = _mm(hd, w_ref[...])                                 # (E, H)
    # VPU multiply + lane reduce instead of two (E,H)@(H,1) MXU passes
    e = jnp.maximum(jnp.sum(z1 * a1_ref[...], axis=-1, keepdims=True)
                    + jnp.sum(zd * a2_ref[...], axis=-1, keepdims=True), 0.0)   # (E, 1)

    # per-dst-node softmax over incoming edges, max-shifted for numerical safety
    masked = jnp.where(adj_t > 0.0, e, -1e30)                # (E, N)
    node_max = jnp.max(masked, axis=0, keepdims=True)        # (1, N)
    edge_max = jnp.sum(adj_t * node_max, axis=1, keepdims=True)        # (E, 1)
    exp_e = jnp.exp(e - edge_max)                            # (E, 1)
    denom = jnp.dot(adj, exp_e, preferred_element_type=_F32)           # (N, 1)
    agg = jnp.dot(adj, exp_e * z1, preferred_element_type=_F32)        # (N, H)
    indeg = jnp.sum(adj, axis=-1, keepdims=True)             # (N, 1)
    h_gat = jnp.where(indeg > 0.0,
                      agg * pl.reciprocal(jnp.maximum(denom, 1e-30), approx=True),
                      0.0)                                   # DGL: 0-in-degree nodes -> zeros

    # MultiHeadGATLayer(1 head): torch.mean over the whole (N_m, H) macro-graph, then ReLU
    H = hn.shape[1]
    row_sum = jnp.sum(h_gat, axis=-1, keepdims=True)                   # (N, 1)
    macro = macro_ref[...]                                             # (2, N)
    h1 = jnp.maximum(jnp.dot(macro, row_sum, preferred_element_type=_F32)
                     / (jnp.sum(macro, axis=-1, keepdims=True) * float(H)), 0.0)   # (2, 1)

    # g.ndata['f'] = rel_h + h_1 ; dgl.sum_nodes per sub-graph (segment-sum matmul)
    f = hn + jnp.dot(macrot_ref[...], h1, preferred_element_type=_F32)  # (N, H)
    o_ref[...] = jnp.dot(sub_ref[...], f, preferred_element_type=_F32).astype(o_ref.dtype)


@functools.lru_cache(maxsize=None)
def _graph_fn(N, E, H, G):
    del N, E
    return pl.pallas_call(_graph_kernel, out_shape=jax.ShapeDtypeStruct((G, H), _F32))


def graph_encoder_batched(params, h_graph, t_graph, num_graphs):
    """Runs GraphEncoder on h_graph and t_graph as ONE kernel on their disjoint union.
    Returns (B, 2, H): [:, 0] = head embeds, [:, 1] = tail embeds."""
    n_h = h_graph[0].shape[0]
    nidx = jnp.concatenate([h_graph[0], t_graph[0]])
    eidx = jnp.concatenate([h_graph[1], t_graph[1]])
    src = jnp.concatenate([h_graph[2], t_graph[2] + n_h])
    dst = jnp.concatenate([h_graph[3], t_graph[3] + n_h])
    # interleave sub-graph ids so the readout lands directly in (B, 2, H) row order
    gid = jnp.concatenate([2 * h_graph[4], 2 * t_graph[4] + 1])
    N, E, G = nidx.shape[0], eidx.shape[0], 2 * num_graphs

    rel_h = params["rel_emb"][nidx]                          # (N, H) gather (glue); const-0
    pat_h = params["pat_emb"][eidx]                          # (E, H)
    H = rel_h.shape[1]

    node_r = jnp.arange(N, dtype=jnp.int32)
    adj = (dst[None, :] == node_r[:, None]).astype(_F32)     # (N, E) dst one-hot
    adj_t = jnp.transpose(adj)                               # (E, N)
    macro_id = (node_r >= n_h).astype(jnp.int32)             # 0 = h-graph nodes, 1 = t-graph
    macro = (macro_id[None, :] == jnp.arange(2)[:, None]).astype(_F32)       # (2, N)
    macro_t = jnp.transpose(macro)                                           # (N, 2)
    sub = (gid[None, :] == jnp.arange(G)[:, None]).astype(_F32)              # (G, N)

    out = _graph_fn(N, E, H, G)(
        rel_h[src], rel_h[dst], pat_h, rel_h, adj, adj_t, macro, macro_t, sub,
        params["gat_fc_w"], params["gat_a1"], params["gat_a2"])             # (G, H)
    return out.reshape(num_graphs, 2, H)


# ----------------------------------------------------------------------------
# FewRelTrainModel.forward (jitted): 2 pallas_calls + embedding gathers + loss glue
# ----------------------------------------------------------------------------
@functools.partial(jax.jit, static_argnames=("num_heads",))
def fewrel_forward(params, input_ids, token_type_ids, attention_mask, labels,
                   h_graph, t_graph, h_pos, t_pos, num_heads):
    B, S = input_ids.shape
    pos_cls = jnp.zeros((B, 1), _F32)
    pos_tail = jnp.broadcast_to(jnp.arange(1, 126, dtype=_F32), (B, 125))
    pos_id = jnp.concatenate([pos_cls, h_pos, t_pos, pos_tail], axis=1).astype(jnp.int32)

    word = params["word_emb"][input_ids]                     # (B,S,H) token embedding gather
    pt = params["pos_emb"][pos_id] + params["type_emb"][token_type_ids]   # (B,S,H)
    ht = graph_encoder_batched(params, h_graph, t_graph, B)  # (B,2,H) head/tail graph embeds

    logits = bert_classifier(params, word, pt, ht, attention_mask, num_heads)

    # single-label cross-entropy on tiny (B, num_labels) logits (glue)
    logp = jax.nn.log_softmax(logits, axis=-1)
    loss = -jnp.mean(jnp.take_along_axis(logp, labels[:, None], axis=1))
    return loss, logits


# ----------------------------------------------------------------------------
# Deterministic parameter init (synthetic; no checkpoint load)
# ----------------------------------------------------------------------------
def init_params(key, H, n_layers, inter, vocab, type_vocab, max_pos, num_labels,
                rel_vocab, pat_vocab, num_heads):
    keys = iter(jax.random.split(key, 128))
    scale = 1.0 / math.sqrt(H // num_heads)
    W = max(3 * H, inter)
    W2 = max(H, num_labels)

    def nrm(shape):
        return jax.random.normal(next(keys), shape, _F32) * 0.02

    wqkv, wo, wi, wo2, vecs = [], [], [], [], []
    for _ in range(n_layers):
        wq = nrm((H, H)) * scale                 # fold 1/sqrt(dh) into the Q projection
        wk = nrm((H, H))
        wv = nrm((H, H))
        wqkv.append(jnp.concatenate([wq, wk, wv], axis=1).astype(_BF16))
        wo.append(nrm((H, H)).astype(_BF16))
        wi.append(nrm((H, inter)).astype(_BF16))
        wo2.append(nrm((inter, H)).astype(_BF16))
        # per-layer vector slab rows: bqkv, bo, ln1_g, ln1_b, bi, bo2, ln2_g, ln2_b
        v = jnp.zeros((8, W), _F32)
        v = v.at[2, :H].set(1.0)                 # ln1 gamma
        v = v.at[6, :H].set(1.0)                 # ln2 gamma
        vecs.append(v)

    # misc slab rows: emb_ln_g, emb_ln_b, pooler_b, classifier_b (rest unused)
    misc = jnp.zeros((8, W2), _F32).at[0, :H].set(1.0)

    return {
        "word_emb": nrm((vocab, H)),
        "pos_emb": nrm((max_pos, H)),
        "type_emb": nrm((type_vocab, H)),
        "misc": misc,
        "wqkv_all": jnp.stack(wqkv),             # (L, H, 3H) bf16
        "wo_all": jnp.stack(wo),                 # (L, H, H)  bf16
        "vecs_all": jnp.stack(vecs),             # (L, 8, W)  f32
        "wi_all": jnp.stack(wi),                 # (L, H, I)  bf16
        "wo2_all": jnp.stack(wo2),               # (L, I, H)  bf16
        "pool_w": nrm((H, H)).astype(_BF16),
        "cls_w": nrm((H, num_labels)).astype(_BF16),
        # GraphEncoder embeddings constant-0 exactly like nn.init.constant_(..., 0.0)
        "rel_emb": jnp.zeros((rel_vocab, H), _F32),
        "pat_emb": jnp.zeros((pat_vocab, H), _F32),
        "gat_fc_w": nrm((H, H)).astype(_BF16),   # ConvAT.fc (no bias), stored (in, out)
        "gat_a1": nrm((1, H)),                   # ConvAT.attn_fc split: z1 half (row vector)
        "gat_a2": nrm((1, H)),                   # ConvAT.attn_fc split: dst half
    }


if __name__ == "__main__":
    # seq=128 is forced by the reference forward; H=128 keeps every store 128-lane dense.
    B, S, H, NH, N_LAYERS, INTER = 2, 128, 128, 2, 2, 256
    VOCAB, TYPE_VOCAB, MAX_POS, NUM_LABELS = 128, 2, 256, 128
    REL_VOCAB, PAT_VOCAB = 32, 10

    root = jax.random.PRNGKey(0)
    k_param, k_ids, k_lbl, k_gh, k_gt = jax.random.split(root, 5)
    params = init_params(k_param, H, N_LAYERS, INTER, VOCAB, TYPE_VOCAB, MAX_POS,
                         NUM_LABELS, REL_VOCAB, PAT_VOCAB, NH)

    input_ids = jax.random.randint(k_ids, (B, S), 0, VOCAB, dtype=jnp.int32)
    token_type_ids = jnp.zeros((B, S), jnp.int32)
    attention_mask = jnp.ones((B, S), jnp.int32)
    labels = jax.random.randint(k_lbl, (B,), 0, NUM_LABELS, dtype=jnp.int32)
    h_pos = jnp.array([[5.0], [7.0]], _F32)
    t_pos = jnp.array([[9.0], [11.0]], _F32)

    # batched DGL graph stand-in: B graphs, each a 4-node directed ring (in-degree 1 nodes)
    def make_graph(key, n_per=4):
        N, E = B * n_per, B * n_per
        node_idx = jax.random.randint(key, (N,), 1, REL_VOCAB, dtype=jnp.int32)   # ndata['idx']
        edge_idx = jax.random.randint(jax.random.fold_in(key, 1), (E,), 0, PAT_VOCAB,
                                      dtype=jnp.int32)                            # edata['idx']
        base = jnp.repeat(jnp.arange(B, dtype=jnp.int32) * n_per, n_per)
        local = jnp.tile(jnp.arange(n_per, dtype=jnp.int32), B)
        src = base + local
        dst = base + (local + 1) % n_per
        node_gid = jnp.repeat(jnp.arange(B, dtype=jnp.int32), n_per)
        return (node_idx, edge_idx, src, dst, node_gid)

    h_graph = make_graph(k_gh)
    t_graph = make_graph(k_gt)

    loss, logits = fewrel_forward(params, input_ids, token_type_ids, attention_mask,
                                  labels, h_graph, t_graph, h_pos, t_pos, num_heads=NH)
    jax.block_until_ready((loss, logits))
    assert logits.shape == (B, NUM_LABELS) and loss.shape == ()
    assert bool(jnp.isfinite(loss))
    print("KERNEL_OK")
</pallas_src>

<mosaic_0001>
module attributes {stable_mosaic.version = 11 : i64} {
  func.func @_graph_kernel(%arg0: memref<16x128xf32, #tpu.memory_space<vmem>>, %arg1: memref<16x128xf32, #tpu.memory_space<vmem>>, %arg2: memref<16x128xf32, #tpu.memory_space<vmem>>, %arg3: memref<16x128xf32, #tpu.memory_space<vmem>>, %arg4: memref<16x16xf32, #tpu.memory_space<vmem>>, %arg5: memref<16x16xf32, #tpu.memory_space<vmem>>, %arg6: memref<2x16xf32, #tpu.memory_space<vmem>>, %arg7: memref<16x2xf32, #tpu.memory_space<vmem>>, %arg8: memref<4x16xf32, #tpu.memory_space<vmem>>, %arg9: memref<128x128xbf16, #tpu.memory_space<vmem>>, %arg10: memref<1x128xf32, #tpu.memory_space<vmem>>, %arg11: memref<1x128xf32, #tpu.memory_space<vmem>>, %arg12: memref<4x128xf32, #tpu.memory_space<vmem>>) attributes {dimension_semantics = [], scalar_prefetch = 0 : i64, scratch_operands = 0 : i64, tpu.core_type = #tpu.core_type<tc>} {
    %c0 = arith.constant 0 : index
    %c0_0 = arith.constant 0 : index
    %0 = vector.load %arg0[%c0, %c0_0] : memref<16x128xf32, #tpu.memory_space<vmem>>, vector<16x128xf32>
    %c0_1 = arith.constant 0 : index
    %c0_2 = arith.constant 0 : index
    %1 = vector.load %arg1[%c0_1, %c0_2] : memref<16x128xf32, #tpu.memory_space<vmem>>, vector<16x128xf32>
    %c0_3 = arith.constant 0 : index
    %c0_4 = arith.constant 0 : index
    %2 = vector.load %arg2[%c0_3, %c0_4] : memref<16x128xf32, #tpu.memory_space<vmem>>, vector<16x128xf32>
    %c0_5 = arith.constant 0 : index
    %c0_6 = arith.constant 0 : index
    %3 = vector.load %arg3[%c0_5, %c0_6] : memref<16x128xf32, #tpu.memory_space<vmem>>, vector<16x128xf32>
    %c0_7 = arith.constant 0 : index
    %c0_8 = arith.constant 0 : index
    %4 = vector.load %arg4[%c0_7, %c0_8] : memref<16x16xf32, #tpu.memory_space<vmem>>, vector<16x16xf32>
    %c0_9 = arith.constant 0 : index
    %c0_10 = arith.constant 0 : index
    %5 = vector.load %arg5[%c0_9, %c0_10] : memref<16x16xf32, #tpu.memory_space<vmem>>, vector<16x16xf32>
    %6 = arith.mulf %0, %2 : vector<16x128xf32>
    %c0_11 = arith.constant 0 : index
    %c0_12 = arith.constant 0 : index
    %7 = vector.load %arg9[%c0_11, %c0_12] : memref<128x128xbf16, #tpu.memory_space<vmem>>, vector<128x128xbf16>
    %8 = arith.truncf %6 : vector<16x128xf32> to vector<16x128xbf16>
    %cst = arith.constant dense<0.000000e+00> : vector<16x128xf32>
    %9 = tpu.matmul %8, %7, %cst {dimension_numbers = #tpu.dot_dimension_numbers<[1], [0], [0], [1], [0, 0, 1, 1], [], []>} : vector<16x128xbf16>, vector<128x128xbf16>, vector<16x128xf32> -> vector<16x128xf32>
    %c0_13 = arith.constant 0 : index
    %c0_14 = arith.constant 0 : index
    %10 = vector.load %arg9[%c0_13, %c0_14] : memref<128x128xbf16, #tpu.memory_space<vmem>>, vector<128x128xbf16>
    %11 = arith.truncf %1 : vector<16x128xf32> to vector<16x128xbf16>
    %cst_15 = arith.constant dense<0.000000e+00> : vector<16x128xf32>
    %12 = tpu.matmul %11, %10, %cst_15 {dimension_numbers = #tpu.dot_dimension_numbers<[1], [0], [0], [1], [0, 0, 1, 1], [], []>} : vector<16x128xbf16>, vector<128x128xbf16>, vector<16x128xf32> -> vector<16x128xf32>
    %c0_16 = arith.constant 0 : index
    %c0_17 = arith.constant 0 : index
    %13 = vector.load %arg10[%c0_16, %c0_17] : memref<1x128xf32, #tpu.memory_space<vmem>>, vector<1x128xf32>
    %14 = vector.broadcast %13 : vector<1x128xf32> to vector<16x128xf32>
    %15 = arith.mulf %9, %14 : vector<16x128xf32>
    %cst_18 = arith.constant dense<0.000000e+00> : vector<16xf32>
    %16 = vector.multi_reduction <add>, %15, %cst_18 [1] : vector<16x128xf32> to vector<16xf32>
    %17 = vector.shape_cast %16 : vector<16xf32> to vector<16x1xf32>
    %c0_19 = arith.constant 0 : index
    %c0_20 = arith.constant 0 : index
    %18 = vector.load %arg11[%c0_19, %c0_20] : memref<1x128xf32, #tpu.memory_space<vmem>>, vector<1x128xf32>
    %19 = vector.broadcast %18 : vector<1x128xf32> to vector<16x128xf32>
    %20 = arith.mulf %12, %19 : vector<16x128xf32>
    %cst_21 = arith.constant dense<0.000000e+00> : vector<16xf32>
    %21 = vector.multi_reduction <add>, %20, %cst_21 [1] : vector<16x128xf32> to vector<16xf32>
    %22 = vector.shape_cast %21 : vector<16xf32> to vector<16x1xf32>
    %23 = arith.addf %17, %22 : vector<16x1xf32>
    %cst_22 = arith.constant 0.000000e+00 : f32
    %24 = vector.broadcast %cst_22 : f32 to vector<16x1xf32>
    %25 = arith.maximumf %23, %24 : vector<16x1xf32>
    %cst_23 = arith.constant 0.000000e+00 : f32
    %26 = vector.broadcast %cst_23 : f32 to vector<16x16xf32>
    %27 = arith.cmpf ogt, %5, %26 : vector<16x16xf32>
    %cst_24 = arith.constant -1.000000e+30 : f32
    %28 = vector.shape_cast %25 : vector<16x1xf32> to vector<16x1xf32>
    %29 = vector.broadcast %28 : vector<16x1xf32> to vector<16x16xf32>
    %30 = vector.broadcast %cst_24 : f32 to vector<16x16xf32>
    %31 = arith.select %27, %29, %30 : vector<16x16xi1>, vector<16x16xf32>
    %cst_25 = arith.constant dense<0xFF800000> : vector<16xf32>
    %32 = vector.multi_reduction <maximumf>, %31, %cst_25 [0] : vector<16x16xf32> to vector<16xf32>
    %33 = vector.shape_cast %32 : vector<16xf32> to vector<1x16xf32>
    %34 = vector.broadcast %33 : vector<1x16xf32> to vector<16x16xf32>
    %35 = arith.mulf %5, %34 : vector<16x16xf32>
    %cst_26 = arith.constant dense<0.000000e+00> : vector<16xf32>
    %36 = vector.multi_reduction <add>, %35, %cst_26 [1] : vector<16x16xf32> to vector<16xf32>
    %37 = vector.shape_cast %36 : vector<16xf32> to vector<16x1xf32>
    %38 = arith.subf %25, %37 : vector<16x1xf32>
    %39 = math.exp %38 : vector<16x1xf32>
    %cst_27 = arith.constant dense<0.000000e+00> : vector<16x1xf32>
    %40 = tpu.matmul %4, %39, %cst_27 {dimension_numbers = #tpu.dot_dimension_numbers<[1], [0], [0], [1], [0, 0, 1, 1], [], []>} : vector<16x16xf32>, vector<16x1xf32>, vector<16x1xf32> -> vector<16x1xf32>
    %41 = vector.broadcast %39 : vector<16x1xf32> to vector<16x128xf32>
    %42 = arith.mulf %41, %9 : vector<16x128xf32>
    %cst_28 = arith.constant dense<0.000000e+00> : vector<16x128xf32>
    %43 = tpu.matmul %4, %42, %cst_28 {dimension_numbers = #tpu.dot_dimension_numbers<[1], [0], [0], [1], [0, 0, 1, 1], [], []>} : vector<16x16xf32>, vector<16x128xf32>, vector<16x128xf32> -> vector<16x128xf32>
    %cst_29 = arith.constant dense<0.000000e+00> : vector<16xf32>
    %44 = vector.multi_reduction <add>, %4, %cst_29 [1] : vector<16x16xf32> to vector<16xf32>
    %45 = vector.shape_cast %44 : vector<16xf32> to vector<16x1xf32>
    %cst_30 = arith.constant 0.000000e+00 : f32
    %46 = vector.broadcast %cst_30 : f32 to vector<16x1xf32>
    %47 = arith.cmpf ogt, %45, %46 : vector<16x1xf32>
    %cst_31 = arith.constant 1.000000e-30 : f32
    %48 = vector.broadcast %cst_31 : f32 to vector<16x1xf32>
    %49 = arith.maximumf %40, %48 : vector<16x1xf32>
    %50 = tpu.reciprocal %49 {approx = true} : vector<16x1xf32> -> vector<16x1xf32>
    %51 = vector.broadcast %50 : vector<16x1xf32> to vector<16x128xf32>
    %52 = arith.mulf %43, %51 : vector<16x128xf32>
    %cst_32 = arith.constant 0.000000e+00 : f32
    %53 = vector.shape_cast %47 : vector<16x1xi1> to vector<16x1xi1>
    %54 = vector.broadcast %53 : vector<16x1xi1> to vector<16x128xi1>
    %55 = vector.broadcast %cst_32 : f32 to vector<16x128xf32>
    %56 = arith.select %54, %52, %55 : vector<16x128xi1>, vector<16x128xf32>
    %cst_33 = arith.constant dense<0.000000e+00> : vector<16xf32>
    %57 = vector.multi_reduction <add>, %56, %cst_33 [1] : vector<16x128xf32> to vector<16xf32>
    %58 = vector.shape_cast %57 : vector<16xf32> to vector<16x1xf32>
    %c0_34 = arith.constant 0 : index
    %c0_35 = arith.constant 0 : index
    %59 = vector.load %arg6[%c0_34, %c0_35] : memref<2x16xf32, #tpu.memory_space<vmem>>, vector<2x16xf32>
    %cst_36 = arith.constant dense<0.000000e+00> : vector<2x1xf32>
    %60 = tpu.matmul %59, %58, %cst_36 {dimension_numbers = #tpu.dot_dimension_numbers<[1], [0], [0], [1], [0, 0, 1, 1], [], []>} : vector<2x16xf32>, vector<16x1xf32>, vector<2x1xf32> -> vector<2x1xf32>
    %cst_37 = arith.constant dense<0.000000e+00> : vector<2xf32>
    %61 = vector.multi_reduction <add>, %59, %cst_37 [1] : vector<2x16xf32> to vector<2xf32>
    %62 = vector.shape_cast %61 : vector<2xf32> to vector<2x1xf32>
    %cst_38 = arith.constant 1.280000e+02 : f32
    %63 = vector.broadcast %cst_38 : f32 to vector<2x1xf32>
    %64 = arith.mulf %62, %63 : vector<2x1xf32>
    %65 = arith.divf %60, %64 : vector<2x1xf32>
    %cst_39 = arith.constant 0.000000e+00 : f32
    %66 = vector.broadcast %cst_39 : f32 to vector<2x1xf32>
    %67 = arith.maximumf %65, %66 : vector<2x1xf32>
    %c0_40 = arith.constant 0 : index
    %c0_41 = arith.constant 0 : index
    %68 = vector.load %arg7[%c0_40, %c0_41] : memref<16x2xf32, #tpu.memory_space<vmem>>, vector<16x2xf32>
    %cst_42 = arith.constant dense<0.000000e+00> : vector<16x1xf32>
    %69 = tpu.matmul %68, %67, %cst_42 {dimension_numbers = #tpu.dot_dimension_numbers<[1], [0], [0], [1], [0, 0, 1, 1], [], []>} : vector<16x2xf32>, vector<2x1xf32>, vector<16x1xf32> -> vector<16x1xf32>
    %70 = vector.broadcast %69 : vector<16x1xf32> to vector<16x128xf32>
    %71 = arith.addf %3, %70 : vector<16x128xf32>
    %c0_43 = arith.constant 0 : index
    %c0_44 = arith.constant 0 : index
    %72 = vector.load %arg8[%c0_43, %c0_44] : memref<4x16xf32, #tpu.memory_space<vmem>>, vector<4x16xf32>
    %cst_45 = arith.constant dense<0.000000e+00> : vector<4x128xf32>
    %73 = tpu.matmul %72, %71, %cst_45 {dimension_numbers = #tpu.dot_dimension_numbers<[1], [0], [0], [1], [0, 0, 1, 1], [], []>} : vector<4x16xf32>, vector<16x128xf32>, vector<4x128xf32> -> vector<4x128xf32>
    %c0_46 = arith.constant 0 : index
    %c0_47 = arith.constant 0 : index
    %74 = vector.load %arg12[%c0_46, %c0_47] : memref<4x128xf32, #tpu.memory_space<vmem>>, vector<4x128xf32>
    tpu.vector_store %arg12[%c0_46, %c0_47], %73 {strides = array<i32>} : memref<4x128xf32, #tpu.memory_space<vmem>>, vector<4x128xf32>,
    return
  }
}

module attributes {stable_mosaic.version = 11 : i64} {
  func.func @_fused_bert_kernel(%arg0: i32, %arg1: i32, %arg2: memref<1x128x128xf32, #tpu.memory_space<vmem>>, %arg3: memref<1x128x128xf32, #tpu.memory_space<vmem>>, %arg4: memref<1x2x128xf32, #tpu.memory_space<vmem>>, %arg5: memref<1x1x128xf32, #tpu.memory_space<vmem>>, %arg6: memref<8x128xf32, #tpu.memory_space<vmem>>, %arg7: memref<1x128x384xbf16, #tpu.memory_space<vmem>>, %arg8: memref<1x128x128xbf16, #tpu.memory_space<vmem>>, %arg9: memref<1x8x384xf32, #tpu.memory_space<vmem>>, %arg10: memref<1x128x256xbf16, #tpu.memory_space<vmem>>, %arg11: memref<1x256x128xbf16, #tpu.memory_space<vmem>>, %arg12: memref<128x128xbf16, #tpu.memory_space<vmem>>, %arg13: memref<128x128xbf16, #tpu.memory_space<vmem>>, %arg14: memref<1x1x128xf32, #tpu.memory_space<vmem>>, %arg15: memref<128x128xf32, #tpu.memory_space<vmem>>, %arg16: memref<128x128xf32, #tpu.memory_space<vmem>>) attributes {dimension_semantics = [#tpu.dimension_semantics<parallel>, #tpu.dimension_semantics<arbitrary>], iteration_bounds = array<i64: 2, 2>, scalar_prefetch = 0 : i64, scratch_operands = 2 : i64, tpu.core_type = #tpu.core_type<tc>, window_params = [{transform_indices = @transform_0, window_bounds = array<i64: 1, 128, 128>}, {transform_indices = @transform_1, window_bounds = array<i64: 1, 128, 128>}, {transform_indices = @transform_2, window_bounds = array<i64: 1, 2, 128>}, {transform_indices = @transform_3, window_bounds = array<i64: 1, 1, 128>}, {pipeline_mode = #tpu.pipeline_mode<synchronous>, transform_indices = @transform_4, window_bounds = array<i64: 8, 128>}, {transform_indices = @transform_5, window_bounds = array<i64: 1, 128, 384>}, {transform_indices = @transform_6, window_bounds = array<i64: 1, 128, 128>}, {transform_indices = @transform_7, window_bounds = array<i64: 1, 8, 384>}, {transform_indices = @transform_8, window_bounds = array<i64: 1, 128, 256>}, {transform_indices = @transform_9, window_bounds = array<i64: 1, 256, 128>}, {pipeline_mode = #tpu.pipeline_mode<synchronous>, transform_indices = @transform_10, window_bounds = array<i64: 128, 128>}, {pipeline_mode = #tpu.pipeline_mode<synchronous>, transform_indices = @transform_11, window_bounds = array<i64: 128, 128>}, {transform_indices = @transform_12, window_bounds = array<i64: 1, 1, 128>}]} {
    %c0 = arith.constant 0 : index
    %c0_0 = arith.constant 0 : index
    %0 = vector.load %arg6[%c0, %c0_0] : memref<8x128xf32, #tpu.memory_space<vmem>>, vector<8x128xf32>
    %c0_i32 = arith.constant 0 : i32
    %1 = arith.cmpi eq, %arg1, %c0_i32 : i32
    %2 = arith.extui %1 : i1 to i32
    %c0_i32_1 = arith.constant 0 : i32
    %3 = arith.cmpi ne, %2, %c0_i32_1 : i32
    scf.if %3 {
      %c0_57 = arith.constant 0 : index
      %c0_58 = arith.constant 0 : index
      %c0_59 = arith.constant 0 : index
      %148 = vector.load %arg2[%c0_57, %c0_58, %c0_59] : memref<1x128x128xf32, #tpu.memory_space<vmem>>, vector<1x128x128xf32>
      %149 = vector.shape_cast %148 : vector<1x128x128xf32> to vector<128x128xf32>
      %c0_60 = arith.constant 0 : index
      %c0_61 = arith.constant 0 : index
      %c0_62 = arith.constant 0 : index
      %150 = vector.load %arg4[%c0_60, %c0_61, %c0_62] : memref<1x2x128xf32, #tpu.memory_space<vmem>>, vector<1x2x128xf32>
      %151 = vector.shape_cast %150 : vector<1x2x128xf32> to vector<2x128xf32>
      %152 = tpu.iota {dimensions = array<i32: 0>} : vector<128x1xi32>
      %c1_i32_63 = arith.constant 1 : i32
      %153 = vector.broadcast %c1_i32_63 : i32 to vector<128x1xi32>
      %154 = arith.cmpi eq, %152, %153 : vector<128x1xi32>
      %155 = vector.extract_strided_slice %151 {offsets = [0, 0], sizes = [1, 128], strides = [1, 1]} : vector<2x128xf32> to vector<1x128xf32>
      %156 = vector.shape_cast %154 : vector<128x1xi1> to vector<128x1xi1>
      %157 = vector.broadcast %156 : vector<128x1xi1> to vector<128x128xi1>
      %158 = vector.shape_cast %155 : vector<1x128xf32> to vector<1x128xf32>
      %159 = vector.broadcast %158 : vector<1x128xf32> to vector<128x128xf32>
      %160 = arith.select %157, %159, %149 : vector<128x128xi1>, vector<128x128xf32>
      %c2_i32 = arith.constant 2 : i32
      %161 = vector.broadcast %c2_i32 : i32 to vector<128x1xi32>
      %162 = arith.cmpi eq, %152, %161 : vector<128x1xi32>
      %163 = vector.extract_strided_slice %151 {offsets = [1, 0], sizes = [1, 128], strides = [1, 1]} : vector<2x128xf32> to vector<1x128xf32>
      %164 = vector.shape_cast %162 : vector<128x1xi1> to vector<128x1xi1>
      %165 = vector.broadcast %164 : vector<128x1xi1> to vector<128x128xi1>
      %166 = vector.shape_cast %163 : vector<1x128xf32> to vector<1x128xf32>
      %167 = vector.broadcast %166 : vector<1x128xf32> to vector<128x128xf32>
      %168 = arith.select %165, %167, %160 : vector<128x128xi1>, vector<128x128xf32>
      %c0_64 = arith.constant 0 : index
      %c0_65 = arith.constant 0 : index
      %c0_66 = arith.constant 0 : index
      %169 = vector.load %arg3[%c0_64, %c0_65, %c0_66] : memref<1x128x128xf32, #tpu.memory_space<vmem>>, vector<1x128x128xf32>
      %170 = vector.shape_cast %169 : vector<1x128x128xf32> to vector<128x128xf32>
      %171 = arith.addf %168, %170 : vector<128x128xf32>
      %172 = vector.extract_strided_slice %0 {offsets = [0, 0], sizes = [1, 128], strides = [1, 1]} : vector<8x128xf32> to vector<1x128xf32>
      %173 = vector.extract_strided_slice %0 {offsets = [1, 0], sizes = [1, 128], strides = [1, 1]} : vector<8x128xf32> to vector<1x128xf32>
      %cst_67 = arith.constant dense<0.000000e+00> : vector<128xf32>
      %174 = vector.multi_reduction <add>, %171, %cst_67 [1] : vector<128x128xf32> to vector<128xf32>
      %175 = vector.shape_cast %174 : vector<128xf32> to vector<128x1xf32>
      %cst_68 = arith.constant 1.280000e+02 : f32
      %176 = vector.broadcast %cst_68 : f32 to vector<128x1xf32>
      %177 = arith.divf %175, %176 : vector<128x1xf32>
      %178 = vector.broadcast %177 : vector<128x1xf32> to vector<128x128xf32>
      %179 = arith.subf %171, %178 : vector<128x128xf32>
      %180 = arith.mulf %179, %179 : vector<128x128xf32>
      %cst_69 = arith.constant dense<0.000000e+00> : vector<128xf32>
      %181 = vector.multi_reduction <add>, %180, %cst_69 [1] : vector<128x128xf32> to vector<128xf32>
      %182 = vector.shape_cast %181 : vector<128xf32> to vector<128x1xf32>
      %cst_70 = arith.constant 1.280000e+02 : f32
      %183 = vector.broadcast %cst_70 : f32 to vector<128x1xf32>
      %184 = arith.divf %182, %183 : vector<128x1xf32>
      %185 = vector.broadcast %177 : vector<128x1xf32> to vector<128x128xf32>
      %186 = arith.subf %171, %185 : vector<128x128xf32>
      %cst_71 = arith.constant 9.99999996E-13 : f32
      %187 = vector.broadcast %cst_71 : f32 to vector<128x1xf32>
      %188 = arith.addf %184, %187 : vector<128x1xf32>
      %189 = math.rsqrt %188 : vector<128x1xf32>
      %190 = vector.broadcast %189 : vector<128x1xf32> to vector<128x128xf32>
      %191 = arith.mulf %186, %190 : vector<128x128xf32>
      %192 = vector.broadcast %172 : vector<1x128xf32> to vector<128x128xf32>
      %193 = arith.mulf %191, %192 : vector<128x128xf32>
      %194 = vector.broadcast %173 : vector<1x128xf32> to vector<128x128xf32>
      %195 = arith.addf %193, %194 : vector<128x128xf32>
      %c0_72 = arith.constant 0 : index
      %c0_73 = arith.constant 0 : index
      %196 = vector.load %arg15[%c0_72, %c0_73] : memref<128x128xf32, #tpu.memory_space<vmem>>, vector<128x128xf32>
      tpu.vector_store %arg15[%c0_72, %c0_73], %195 {strides = array<i32>} : memref<128x128xf32, #tpu.memory_space<vmem>>, vector<128x128xf32>,
    } else {
    }
    %c0_2 = arith.constant 0 : index
    %c0_3 = arith.constant 0 : index
    %4 = vector.load %arg15[%c0_2, %c0_3] : memref<128x128xf32, #tpu.memory_space<vmem>>, vector<128x128xf32>
    %c0_4 = arith.constant 0 : index
    %c0_5 = arith.constant 0 : index
    %c0_6 = arith.constant 0 : index
    %5 = vector.load %arg9[%c0_4, %c0_5, %c0_6] : memref<1x8x384xf32, #tpu.memory_space<vmem>>, vector<1x8x384xf32>
    %6 = vector.shape_cast %5 : vector<1x8x384xf32> to vector<8x384xf32>
    %7 = vector.extract_strided_slice %6 {offsets = [0, 0], sizes = [1, 384], strides = [1, 1]} : vector<8x384xf32> to vector<1x384xf32>
    %8 = vector.extract_strided_slice %6 {offsets = [1, 0], sizes = [1, 128], strides = [1, 1]} : vector<8x384xf32> to vector<1x128xf32>
    %9 = vector.extract_strided_slice %6 {offsets = [2, 0], sizes = [1, 128], strides = [1, 1]} : vector<8x384xf32> to vector<1x128xf32>
    %10 = vector.extract_strided_slice %6 {offsets = [3, 0], sizes = [1, 128], strides = [1, 1]} : vector<8x384xf32> to vector<1x128xf32>
    %11 = vector.extract_strided_slice %6 {offsets = [4, 0], sizes = [1, 256], strides = [1, 1]} : vector<8x384xf32> to vector<1x256xf32>
    %12 = vector.extract_strided_slice %6 {offsets = [5, 0], sizes = [1, 128], strides = [1, 1]} : vector<8x384xf32> to vector<1x128xf32>
    %13 = vector.extract_strided_slice %6 {offsets = [6, 0], sizes = [1, 128], strides = [1, 1]} : vector<8x384xf32> to vector<1x128xf32>
    %14 = vector.extract_strided_slice %6 {offsets = [7, 0], sizes = [1, 128], strides = [1, 1]} : vector<8x384xf32> to vector<1x128xf32>
    %15 = arith.truncf %4 : vector<128x128xf32> to vector<128x128xbf16>
    %c0_7 = arith.constant 0 : index
    %c0_8 = arith.constant 0 : index
    %c0_9 = arith.constant 0 : index
    %16 = vector.load %arg7[%c0_7, %c0_8, %c0_9] : memref<1x128x384xbf16, #tpu.memory_space<vmem>>, vector<1x128x384xbf16>
    %17 = vector.shape_cast %16 : vector<1x128x384xbf16> to vector<128x384xbf16>
    %cst = arith.constant dense<0.000000e+00> : vector<128x384xf32>
    %18 = tpu.matmul %15, %17, %cst {dimension_numbers = #tpu.dot_dimension_numbers<[1], [0], [0], [1], [0, 0, 1, 1], [], []>} : vector<128x128xbf16>, vector<128x384xbf16>, vector<128x384xf32> -> vector<128x384xf32>
    %19 = vector.broadcast %7 : vector<1x384xf32> to vector<128x384xf32>
    %20 = arith.addf %18, %19 : vector<128x384xf32>
    %21 = arith.truncf %20 : vector<128x384xf32> to vector<128x384xbf16>
    %c0_10 = arith.constant 0 : index
    %c0_11 = arith.constant 0 : index
    %c0_12 = arith.constant 0 : index
    %22 = vector.load %arg5[%c0_10, %c0_11, %c0_12] : memref<1x1x128xf32, #tpu.memory_space<vmem>>, vector<1x1x128xf32>
    %23 = vector.shape_cast %22 : vector<1x1x128xf32> to vector<1x128xf32>
    %cst_13 = arith.constant 1.000000e+00 : f32
    %24 = vector.broadcast %cst_13 : f32 to vector<1x128xf32>
    %25 = arith.subf %24, %23 : vector<1x128xf32>
    %cst_14 = arith.constant -1.000000e+09 : f32
    %26 = vector.broadcast %cst_14 : f32 to vector<1x128xf32>
    %27 = arith.mulf %25, %26 : vector<1x128xf32>
    %28 = vector.extract_strided_slice %21 {offsets = [0, 0], sizes = [128, 64], strides = [1, 1]} : vector<128x384xbf16> to vector<128x64xbf16>
    %29 = vector.extract_strided_slice %21 {offsets = [0, 128], sizes = [128, 64], strides = [1, 1]} : vector<128x384xbf16> to vector<128x64xbf16>
    %30 = vector.extract_strided_slice %21 {offsets = [0, 256], sizes = [128, 64], strides = [1, 1]} : vector<128x384xbf16> to vector<128x64xbf16>
    %cst_15 = arith.constant dense<0.000000e+00> : vector<128x128xf32>
    %31 = tpu.matmul %28, %29, %cst_15 {dimension_numbers = #tpu.dot_dimension_numbers<[1], [1], [0], [0], [0, 0, 1, 0], [], []>} : vector<128x64xbf16>, vector<128x64xbf16>, vector<128x128xf32> -> vector<128x128xf32>
    %32 = vector.broadcast %27 : vector<1x128xf32> to vector<128x128xf32>
    %33 = arith.addf %31, %32 : vector<128x128xf32>
    %cst_16 = arith.constant dense<0xFF800000> : vector<128xf32>
    %34 = vector.multi_reduction <maximumf>, %33, %cst_16 [1] : vector<128x128xf32> to vector<128xf32>
    %35 = vector.shape_cast %34 : vector<128xf32> to vector<128x1xf32>
    %36 = vector.broadcast %35 : vector<128x1xf32> to vector<128x128xf32>
    %37 = arith.subf %33, %36 : vector<128x128xf32>
    %38 = math.exp %37 : vector<128x128xf32>
    %cst_17 = arith.constant dense<0.000000e+00> : vector<128xf32>
    %39 = vector.multi_reduction <add>, %38, %cst_17 [1] : vector<128x128xf32> to vector<128xf32>
    %40 = vector.shape_cast %39 : vector<128xf32> to vector<128x1xf32>
    %41 = tpu.reciprocal %40 {approx = true} : vector<128x1xf32> -> vector<128x1xf32>
    %42 = vector.broadcast %41 : vector<128x1xf32> to vector<128x128xf32>
    %43 = arith.mulf %38, %42 : vector<128x128xf32>
    %44 = arith.truncf %43 : vector<128x128xf32> to vector<128x128xbf16>
    %cst_18 = arith.constant dense<0.000000e+00> : vector<128x64xf32>
    %45 = tpu.matmul %44, %30, %cst_18 {dimension_numbers = #tpu.dot_dimension_numbers<[1], [0], [0], [1], [0, 0, 1, 1], [], []>} : vector<128x128xbf16>, vector<128x64xbf16>, vector<128x64xf32> -> vector<128x64xf32>
    %c0_19 = arith.constant 0 : index
    %c0_20 = arith.constant 0 : index
    %46 = vector.load %arg16[%c0_19, %c0_20] : memref<128x128xf32, #tpu.memory_space<vmem>>, vector<128x64xf32>
    tpu.vector_store %arg16[%c0_19, %c0_20], %45 {strides = array<i32>} : memref<128x128xf32, #tpu.memory_space<vmem>>, vector<128x64xf32>,
    %47 = vector.extract_strided_slice %21 {offsets = [0, 64], sizes = [128, 64], strides = [1, 1]} : vector<128x384xbf16> to vector<128x64xbf16>
    %48 = vector.extract_strided_slice %21 {offsets = [0, 192], sizes = [128, 64], strides = [1, 1]} : vector<128x384xbf16> to vector<128x64xbf16>
    %49 = vector.extract_strided_slice %21 {offsets = [0, 320], sizes = [128, 64], strides = [1, 1]} : vector<128x384xbf16> to vector<128x64xbf16>
    %cst_21 = arith.constant dense<0.000000e+00> : vector<128x128xf32>
    %50 = tpu.matmul %47, %48, %cst_21 {dimension_numbers = #tpu.dot_dimension_numbers<[1], [1], [0], [0], [0, 0, 1, 0], [], []>} : vector<128x64xbf16>, vector<128x64xbf16>, vector<128x128xf32> -> vector<128x128xf32>
    %51 = vector.broadcast %27 : vector<1x128xf32> to vector<128x128xf32>
    %52 = arith.addf %50, %51 : vector<128x128xf32>
    %cst_22 = arith.constant dense<0xFF800000> : vector<128xf32>
    %53 = vector.multi_reduction <maximumf>, %52, %cst_22 [1] : vector<128x128xf32> to vector<128xf32>
    %54 = vector.shape_cast %53 : vector<128xf32> to vector<128x1xf32>
    %55 = vector.broadcast %54 : vector<128x1xf32> to vector<128x128xf32>
    %56 = arith.subf %52, %55 : vector<128x128xf32>
    %57 = math.exp %56 : vector<128x128xf32>
    %cst_23 = arith.constant dense<0.000000e+00> : vector<128xf32>
    %58 = vector.multi_reduction <add>, %57, %cst_23 [1] : vector<128x128xf32> to vector<128xf32>
    %59 = vector.shape_cast %58 : vector<128xf32> to vector<128x1xf32>
    %60 = tpu.reciprocal %59 {approx = true} : vector<128x1xf32> -> vector<128x1xf32>
    %61 = vector.broadcast %60 : vector<128x1xf32> to vector<128x128xf32>
    %62 = arith.mulf %57, %61 : vector<128x128xf32>
    %63 = arith.truncf %62 : vector<128x128xf32> to vector<128x128xbf16>
    %cst_24 = arith.constant dense<0.000000e+00> : vector<128x64xf32>
    %64 = tpu.matmul %63, %49, %cst_24 {dimension_numbers = #tpu.dot_dimension_numbers<[1], [0], [0], [1], [0, 0, 1, 1], [], []>} : vector<128x128xbf16>, vector<128x64xbf16>, vector<128x64xf32> -> vector<128x64xf32>
    %c0_25 = arith.constant 0 : index
    %c64 = arith.constant 64 : index
    %65 = vector.load %arg16[%c0_25, %c64] : memref<128x128xf32, #tpu.memory_space<vmem>>, vector<128x64xf32>
    tpu.vector_store %arg16[%c0_25, %c64], %64 {strides = array<i32>} : memref<128x128xf32, #tpu.memory_space<vmem>>, vector<128x64xf32>,
    %c0_26 = arith.constant 0 : index
    %c0_27 = arith.constant 0 : index
    %66 = vector.load %arg16[%c0_26, %c0_27] : memref<128x128xf32, #tpu.memory_space<vmem>>, vector<128x128xf32>
    %67 = arith.truncf %66 : vector<128x128xf32> to vector<128x128xbf16>
    %c0_28 = arith.constant 0 : index
    %c0_29 = arith.constant 0 : index
    %c0_30 = arith.constant 0 : index
    %68 = vector.load %arg8[%c0_28, %c0_29, %c0_30] : memref<1x128x128xbf16, #tpu.memory_space<vmem>>, vector<1x128x128xbf16>
    %69 = vector.shape_cast %68 : vector<1x128x128xbf16> to vector<128x128xbf16>
    %cst_31 = arith.constant dense<0.000000e+00> : vector<128x128xf32>
    %70 = tpu.matmul %67, %69, %cst_31 {dimension_numbers = #tpu.dot_dimension_numbers<[1], [0], [0], [1], [0, 0, 1, 1], [], []>} : vector<128x128xbf16>, vector<128x128xbf16>, vector<128x128xf32> -> vector<128x128xf32>
    %71 = vector.broadcast %8 : vector<1x128xf32> to vector<128x128xf32>
    %72 = arith.addf %70, %71 : vector<128x128xf32>
    %73 = arith.addf %72, %4 : vector<128x128xf32>
    %cst_32 = arith.constant dense<0.000000e+00> : vector<128xf32>
    %74 = vector.multi_reduction <add>, %73, %cst_32 [1] : vector<128x128xf32> to vector<128xf32>
    %75 = vector.shape_cast %74 : vector<128xf32> to vector<128x1xf32>
    %cst_33 = arith.constant 1.280000e+02 : f32
    %76 = vector.broadcast %cst_33 : f32 to vector<128x1xf32>
    %77 = arith.divf %75, %76 : vector<128x1xf32>
    %78 = vector.broadcast %77 : vector<128x1xf32> to vector<128x128xf32>
    %79 = arith.subf %73, %78 : vector<128x128xf32>
    %80 = arith.mulf %79, %79 : vector<128x128xf32>
    %cst_34 = arith.constant dense<0.000000e+00> : vector<128xf32>
    %81 = vector.multi_reduction <add>, %80, %cst_34 [1] : vector<128x128xf32> to vector<128xf32>
    %82 = vector.shape_cast %81 : vector<128xf32> to vector<128x1xf32>
    %cst_35 = arith.constant 1.280000e+02 : f32
    %83 = vector.broadcast %cst_35 : f32 to vector<128x1xf32>
    %84 = arith.divf %82, %83 : vector<128x1xf32>
    %85 = vector.broadcast %77 : vector<128x1xf32> to vector<128x128xf32>
    %86 = arith.subf %73, %85 : vector<128x128xf32>
    %cst_36 = arith.constant 9.99999996E-13 : f32
    %87 = vector.broadcast %cst_36 : f32 to vector<128x1xf32>
    %88 = arith.addf %84, %87 : vector<128x1xf32>
    %89 = math.rsqrt %88 : vector<128x1xf32>
    %90 = vector.broadcast %89 : vector<128x1xf32> to vector<128x128xf32>
    %91 = arith.mulf %86, %90 : vector<128x128xf32>
    %92 = vector.broadcast %9 : vector<1x128xf32> to vector<128x128xf32>
    %93 = arith.mulf %91, %92 : vector<128x128xf32>
    %94 = vector.broadcast %10 : vector<1x128xf32> to vector<128x128xf32>
    %95 = arith.addf %93, %94 : vector<128x128xf32>
    %96 = arith.truncf %95 : vector<128x128xf32> to vector<128x128xbf16>
    %c0_37 = arith.constant 0 : index
    %c0_38 = arith.constant 0 : index
    %c0_39 = arith.constant 0 : index
    %97 = vector.load %arg10[%c0_37, %c0_38, %c0_39] : memref<1x128x256xbf16, #tpu.memory_space<vmem>>, vector<1x128x256xbf16>
    %98 = vector.shape_cast %97 : vector<1x128x256xbf16> to vector<128x256xbf16>
    %cst_40 = arith.constant dense<0.000000e+00> : vector<128x256xf32>
    %99 = tpu.matmul %96, %98, %cst_40 {dimension_numbers = #tpu.dot_dimension_numbers<[1], [0], [0], [1], [0, 0, 1, 1], [], []>} : vector<128x128xbf16>, vector<128x256xbf16>, vector<128x256xf32> -> vector<128x256xf32>
    %100 = vector.broadcast %11 : vector<1x256xf32> to vector<128x256xf32>
    %101 = arith.addf %99, %100 : vector<128x256xf32>
    %cst_41 = arith.constant 5.000000e-01 : f32
    %102 = vector.broadcast %cst_41 : f32 to vector<128x256xf32>
    %103 = arith.mulf %102, %101 : vector<128x256xf32>
    %cst_42 = arith.constant 4.471500e-02 : f32
    %104 = vector.broadcast %cst_42 : f32 to vector<128x256xf32>
    %105 = arith.mulf %104, %101 : vector<128x256xf32>
    %106 = arith.mulf %105, %101 : vector<128x256xf32>
    %107 = arith.mulf %106, %101 : vector<128x256xf32>
    %108 = arith.addf %101, %107 : vector<128x256xf32>
    %cst_43 = arith.constant 0.797884583 : f32
    %109 = vector.broadcast %cst_43 : f32 to vector<128x256xf32>
    %110 = arith.mulf %109, %108 : vector<128x256xf32>
    %111 = math.tanh %110 : vector<128x256xf32>
    %cst_44 = arith.constant 1.000000e+00 : f32
    %112 = vector.broadcast %cst_44 : f32 to vector<128x256xf32>
    %113 = arith.addf %112, %111 : vector<128x256xf32>
    %114 = arith.mulf %103, %113 : vector<128x256xf32>
    %115 = arith.truncf %114 : vector<128x256xf32> to vector<128x256xbf16>
    %c0_45 = arith.constant 0 : index
    %c0_46 = arith.constant 0 : index
    %c0_47 = arith.constant 0 : index
    %116 = vector.load %arg11[%c0_45, %c0_46, %c0_47] : memref<1x256x128xbf16, #tpu.memory_space<vmem>>, vector<1x256x128xbf16>
    %117 = vector.shape_cast %116 : vector<1x256x128xbf16> to vector<256x128xbf16>
    %cst_48 = arith.constant dense<0.000000e+00> : vector<128x128xf32>
    %118 = tpu.matmul %115, %117, %cst_48 {dimension_numbers = #tpu.dot_dimension_numbers<[1], [0], [0], [1], [0, 0, 1, 1], [], []>} : vector<128x256xbf16>, vector<256x128xbf16>, vector<128x128xf32> -> vector<128x128xf32>
    %119 = vector.broadcast %12 : vector<1x128xf32> to vector<128x128xf32>
    %120 = arith.addf %118, %119 : vector<128x128xf32>
    %121 = arith.addf %120, %95 : vector<128x128xf32>
    %cst_49 = arith.constant dense<0.000000e+00> : vector<128xf32>
    %122 = vector.multi_reduction <add>, %121, %cst_49 [1] : vector<128x128xf32> to vector<128xf32>
    %123 = vector.shape_cast %122 : vector<128xf32> to vector<128x1xf32>
    %cst_50 = arith.constant 1.280000e+02 : f32
    %124 = vector.broadcast %cst_50 : f32 to vector<128x1xf32>
    %125 = arith.divf %123, %124 : vector<128x1xf32>
    %126 = vector.broadcast %125 : vector<128x1xf32> to vector<128x128xf32>
    %127 = arith.subf %121, %126 : vector<128x128xf32>
    %128 = arith.mulf %127, %127 : vector<128x128xf32>
    %cst_51 = arith.constant dense<0.000000e+00> : vector<128xf32>
    %129 = vector.multi_reduction <add>, %128, %cst_51 [1] : vector<128x128xf32> to vector<128xf32>
    %130 = vector.shape_cast %129 : vector<128xf32> to vector<128x1xf32>
    %cst_52 = arith.constant 1.280000e+02 : f32
    %131 = vector.broadcast %cst_52 : f32 to vector<128x1xf32>
    %132 = arith.divf %130, %131 : vector<128x1xf32>
    %133 = vector.broadcast %125 : vector<128x1xf32> to vector<128x128xf32>
    %134 = arith.subf %121, %133 : vector<128x128xf32>
    %cst_53 = arith.constant 9.99999996E-13 : f32
    %135 = vector.broadcast %cst_53 : f32 to vector<128x1xf32>
    %136 = arith.addf %132, %135 : vector<128x1xf32>
    %137 = math.rsqrt %136 : vector<128x1xf32>
    %138 = vector.broadcast %137 : vector<128x1xf32> to vector<128x128xf32>
    %139 = arith.mulf %134, %138 : vector<128x128xf32>
    %140 = vector.broadcast %13 : vector<1x128xf32> to vector<128x128xf32>
    %141 = arith.mulf %139, %140 : vector<128x128xf32>
    %142 = vector.broadcast %14 : vector<1x128xf32> to vector<128x128xf32>
    %143 = arith.addf %141, %142 : vector<128x128xf32>
    %c0_54 = arith.constant 0 : index
    %c0_55 = arith.constant 0 : index
    %144 = vector.load %arg15[%c0_54, %c0_55] : memref<128x128xf32, #tpu.memory_space<vmem>>, vector<128x128xf32>
    tpu.vector_store %arg15[%c0_54, %c0_55], %143 {strides = array<i32>} : memref<128x128xf32, #tpu.memory_space<vmem>>, vector<128x128xf32>,
    %c1_i32 = arith.constant 1 : i32
    %145 = arith.cmpi eq, %arg1, %c1_i32 : i32
    %146 = arith.extui %145 : i1 to i32
    %c0_i32_56 = arith.constant 0 : i32
    %147 = arith.cmpi ne, %146, %c0_i32_56 : i32
    scf.if %147 {
      %148 = vector.extract_strided_slice %143 {offsets = [0, 0], sizes = [1, 128], strides = [1, 1]} : vector<128x128xf32> to vector<1x128xf32>
      %149 = arith.truncf %148 : vector<1x128xf32> to vector<1x128xbf16>
      %c0_57 = arith.constant 0 : index
      %c0_58 = arith.constant 0 : index
      %150 = vector.load %arg12[%c0_57, %c0_58] : memref<128x128xbf16, #tpu.memory_space<vmem>>, vector<128x128xbf16>
      %cst_59 = arith.constant dense<0.000000e+00> : vector<1x128xf32>
      %151 = tpu.matmul %149, %150, %cst_59 {dimension_numbers = #tpu.dot_dimension_numbers<[1], [0], [0], [1], [0, 0, 1, 1], [], []>} : vector<1x128xbf16>, vector<128x128xbf16>, vector<1x128xf32> -> vector<1x128xf32>
      %152 = vector.extract_strided_slice %0 {offsets = [2, 0], sizes = [1, 128], strides = [1, 1]} : vector<8x128xf32> to vector<1x128xf32>
      %153 = arith.addf %151, %152 : vector<1x128xf32>
      %154 = math.tanh %153 : vector<1x128xf32>
      %155 = arith.truncf %154 : vector<1x128xf32> to vector<1x128xbf16>
      %c0_60 = arith.constant 0 : index
      %c0_61 = arith.constant 0 : index
      %156 = vector.load %arg13[%c0_60, %c0_61] : memref<128x128xbf16, #tpu.memory_space<vmem>>, vector<128x128xbf16>
      %cst_62 = arith.constant dense<0.000000e+00> : vector<1x128xf32>
      %157 = tpu.matmul %155, %156, %cst_62 {dimension_numbers = #tpu.dot_dimension_numbers<[1], [0], [0], [1], [0, 0, 1, 1], [], []>} : vector<1x128xbf16>, vector<128x128xbf16>, vector<1x128xf32> -> vector<1x128xf32>
      %158 = vector.extract_strided_slice %0 {offsets = [3, 0], sizes = [1, 128], strides = [1, 1]} : vector<8x128xf32> to vector<1x128xf32>
      %159 = arith.addf %157, %158 : vector<1x128xf32>
      %c0_63 = arith.constant 0 : index
      %c0_64 = arith.constant 0 : index
      %c0_65 = arith.constant 0 : index
      %160 = vector.load %arg14[%c0_63, %c0_64, %c0_65] : memref<1x1x128xf32, #tpu.memory_space<vmem>>, vector<1x1x128xf32>
      %161 = vector.shape_cast %160 : vector<1x1x128xf32> to vector<1x128xf32>
      %162 = vector.shape_cast %159 : vector<1x128xf32> to vector<1x1x128xf32>
      tpu.vector_store %arg14[%c0_63, %c0_64, %c0_65], %162 {strides = array<i32>} : memref<1x1x128xf32, #tpu.memory_space<vmem>>, vector<1x1x128xf32>,
    } else {
    }
    return
  }
  func.func @transform_0(%arg0: i32, %arg1: i32) -> (i32, i32, i32) {
    %c0_i32 = arith.constant 0 : i32
    %c0_i32_0 = arith.constant 0 : i32
    %c0_i32_1 = arith.constant 0 : i32
    return %arg0, %c0_i32, %c0_i32_0 : i32, i32, i32
  }
  func.func @transform_1(%arg0: i32, %arg1: i32) -> (i32, i32, i32) {
    %c0_i32 = arith.constant 0 : i32
    %c0_i32_0 = arith.constant 0 : i32
    %c0_i32_1 = arith.constant 0 : i32
    return %arg0, %c0_i32, %c0_i32_0 : i32, i32, i32
  }
  func.func @transform_2(%arg0: i32, %arg1: i32) -> (i32, i32, i32) {
    %c0_i32 = arith.constant 0 : i32
    %c0_i32_0 = arith.constant 0 : i32
    %c0_i32_1 = arith.constant 0 : i32
    return %arg0, %c0_i32, %c0_i32_0 : i32, i32, i32
  }
  func.func @transform_3(%arg0: i32, %arg1: i32) -> (i32, i32, i32) {
    %c0_i32 = arith.constant 0 : i32
    %c0_i32_0 = arith.constant 0 : i32
    %c0_i32_1 = arith.constant 0 : i32
    return %arg0, %c0_i32, %c0_i32_0 : i32, i32, i32
  }
  func.func @transform_4(%arg0: i32, %arg1: i32) -> (i32, i32) {
    %c0_i32 = arith.constant 0 : i32
    %c0_i32_0 = arith.constant 0 : i32
    %c0_i32_1 = arith.constant 0 : i32
    return %c0_i32, %c0_i32_0 : i32, i32
  }
  func.func @transform_5(%arg0: i32, %arg1: i32) -> (i32, i32, i32) {
    %c0_i32 = arith.constant 0 : i32
    %c0_i32_0 = arith.constant 0 : i32
    %c0_i32_1 = arith.constant 0 : i32
    return %arg1, %c0_i32, %c0_i32_0 : i32, i32, i32
  }
  func.func @transform_6(%arg0: i32, %arg1: i32) -> (i32, i32, i32) {
    %c0_i32 = arith.constant 0 : i32
    %c0_i32_0 = arith.constant 0 : i32
    %c0_i32_1 = arith.constant 0 : i32
    return %arg1, %c0_i32, %c0_i32_0 : i32, i32, i32
  }
  func.func @transform_7(%arg0: i32, %arg1: i32) -> (i32, i32, i32) {
    %c0_i32 = arith.constant 0 : i32
    %c0_i32_0 = arith.constant 0 : i32
    %c0_i32_1 = arith.constant 0 : i32
    return %arg1, %c0_i32, %c0_i32_0 : i32, i32, i32
  }
  func.func @transform_8(%arg0: i32, %arg1: i32) -> (i32, i32, i32) {
    %c0_i32 = arith.constant 0 : i32
    %c0_i32_0 = arith.constant 0 : i32
    %c0_i32_1 = arith.constant 0 : i32
    return %arg1, %c0_i32, %c0_i32_0 : i32, i32, i32
  }
  func.func @transform_9(%arg0: i32, %arg1: i32) -> (i32, i32, i32) {
    %c0_i32 = arith.constant 0 : i32
    %c0_i32_0 = arith.constant 0 : i32
    %c0_i32_1 = arith.constant 0 : i32
    return %arg1, %c0_i32, %c0_i32_0 : i32, i32, i32
  }
  func.func @transform_10(%arg0: i32, %arg1: i32) -> (i32, i32) {
    %c0_i32 = arith.constant 0 : i32
    %c0_i32_0 = arith.constant 0 : i32
    %c0_i32_1 = arith.constant 0 : i32
    return %c0_i32, %c0_i32_0 : i32, i32
  }
  func.func @transform_11(%arg0: i32, %arg1: i32) -> (i32, i32) {
    %c0_i32 = arith.constant 0 : i32
    %c0_i32_0 = arith.constant 0 : i32
    %c0_i32_1 = arith.constant 0 : i32
    return %c0_i32, %c0_i32_0 : i32, i32
  }
  func.func @transform_12(%arg0: i32, %arg1: i32) -> (i32, i32, i32) {
    %c0_i32 = arith.constant 0 : i32
    %c0_i32_0 = arith.constant 0 : i32
    %c0_i32_1 = arith.constant 0 : i32
    return %arg0, %c0_i32, %c0_i32_0 : i32, i32, i32
  }
}

</mosaic_0001>

<llo_original>
// kernel: fewrel_forward.2
$region0: #{fewrel_forward.2}
  #allocation0 [shape = 'u32[]', space=smem, size = 0x4, offset = 0x4, fixed_abs, tag = 'smem constant byte address 0x4 - core index']
  #allocation1 [shape = 'u32[144,128]{1,0:T(1,128)}', space=vmem, size = 0x12000, scoped, tag = 'internal scratch']
  %s0 = inlined_call_operand.vmem [shape: f32[16,128], index: 0, kind: input, shape index: {}]
  %s1 = inlined_call_operand.vmem [shape: f32[16,128], index: 1, kind: input, shape index: {}]
  %s2 = inlined_call_operand.vmem [shape: f32[16,128], index: 2, kind: input, shape index: {}]
  %s3 = inlined_call_operand.vmem [shape: f32[16,128], index: 3, kind: input, shape index: {}]
  %s4 = inlined_call_operand.vmem [shape: f32[16,16], index: 4, kind: input, shape index: {}]
  %s5 = inlined_call_operand.vmem [shape: f32[16,16], index: 5, kind: input, shape index: {}]
  %s6 = inlined_call_operand.vmem [shape: f32[2,16], index: 6, kind: input, shape index: {}]
  %s7 = inlined_call_operand.vmem [shape: f32[16,2], index: 7, kind: input, shape index: {}]
  %s8 = inlined_call_operand.vmem [shape: f32[4,16], index: 8, kind: input, shape index: {}]
  %s9 = inlined_call_operand.vmem [shape: bf16[128,128], index: 9, kind: input, shape index: {}]
  %s10 = inlined_call_operand.vmem [shape: f32[1,128], index: 10, kind: input, shape index: {}]
  %s11 = inlined_call_operand.vmem [shape: f32[1,128], index: 11, kind: input, shape index: {}]
  %s12 = inlined_call_operand.vmem [shape: f32[4,128], index: 12, kind: output, shape index: {}]
  %s13 = sld [smem:[#allocation0]]
  $region58: #{fewrel_forward.2} parent=0
    _
  %s15 = ssub.s32 1, %s13
  %s16 = scalar_select 0, %s15, %s13
  // Predicated region
  $region2: #{fewrel_forward.2} parent=0 // pred_check
    _
  $region3: #{fewrel_forward.2} parent=0 // pred_check_branch
    %18 = sbr.rel (0) target = $region5
  $region4: #{fewrel_forward.2} parent=0 // pred_region
    _
  $region5: #{fewrel_forward.2} parent=0 // pred_fallthru
    _
  // Predicated region
  $region6: #{fewrel_forward.2} parent=0 // pred_check
    _
  $region7: #{fewrel_forward.2} parent=0 // pred_check_branch
    %20 = sbr.rel (0) target = $region9
  $region8: #{fewrel_forward.2} parent=0 // pred_region
    _
  $region9: #{fewrel_forward.2} parent=0 // pred_fallthru
    _
  // Predicated region
  $region10: #{fewrel_forward.2} parent=0 // pred_check
    _
  $region11: #{fewrel_forward.2} parent=0 // pred_check_branch
    %22 = sbr.rel (0) target = $region13
  $region12: #{fewrel_forward.2} parent=0 // pred_region
    _
  $region13: #{fewrel_forward.2} parent=0 // pred_fallthru
    _
  // Predicated region
  $region14: #{fewrel_forward.2} parent=0 // pred_check
    _
  $region15: #{fewrel_forward.2} parent=0 // pred_check_branch
    %24 = sbr.rel (0) target = $region17
  $region16: #{fewrel_forward.2} parent=0 // pred_region
    _
  $region17: #{fewrel_forward.2} parent=0 // pred_fallthru
    _
  // Predicated region
  $region18: #{fewrel_forward.2} parent=0 // pred_check
    _
  $region19: #{fewrel_forward.2} parent=0 // pred_check_branch
    %26 = sbr.rel (0) target = $region21
  $region20: #{fewrel_forward.2} parent=0 // pred_region
    _
  $region21: #{fewrel_forward.2} parent=0 // pred_fallthru
    _
  // Predicated region
  $region22: #{fewrel_forward.2} parent=0 // pred_check
    _
  $region23: #{fewrel_forward.2} parent=0 // pred_check_branch
    %28 = sbr.rel (0) target = $region25
  $region24: #{fewrel_forward.2} parent=0 // pred_region
    _
  $region25: #{fewrel_forward.2} parent=0 // pred_fallthru
    _
  // Predicated region
  $region26: #{fewrel_forward.2} parent=0 // pred_check
    _
  $region27: #{fewrel_forward.2} parent=0 // pred_check_branch
    %30 = sbr.rel (0) target = $region29
  $region28: #{fewrel_forward.2} parent=0 // pred_region
    _
  $region29: #{fewrel_forward.2} parent=0 // pred_fallthru
    _
  // Predicated region
  $region30: #{fewrel_forward.2} parent=0 // pred_check
    _
  $region31: #{fewrel_forward.2} parent=0 // pred_check_branch
    %32 = sbr.rel (0) target = $region33
  $region32: #{fewrel_forward.2} parent=0 // pred_region
    _
  $region33: #{fewrel_forward.2} parent=0 // pred_fallthru
    _
  // Predicated region
  $region34: #{fewrel_forward.2} parent=0 // pred_check
    _
  $region35: #{fewrel_forward.2} parent=0 // pred_check_branch
    %34 = sbr.rel (0) target = $region37
  $region36: #{fewrel_forward.2} parent=0 // pred_region
    _
  $region37: #{fewrel_forward.2} parent=0 // pred_fallthru
    _
  // Predicated region
  $region38: #{fewrel_forward.2} parent=0 // pred_check
    _
  $region39: #{fewrel_forward.2} parent=0 // pred_check_branch
    %36 = sbr.rel (0) target = $region41
  $region40: #{fewrel_forward.2} parent=0 // pred_region
    _
  $region41: #{fewrel_forward.2} parent=0 // pred_fallthru
    _
  // Predicated region
  $region42: #{fewrel_forward.2} parent=0 // pred_check
    _
  $region43: #{fewrel_forward.2} parent=0 // pred_check_branch
    %38 = sbr.rel (0) target = $region45
  $region44: #{fewrel_forward.2} parent=0 // pred_region
    _
  $region45: #{fewrel_forward.2} parent=0 // pred_fallthru
    _
  // Predicated region
  $region46: #{fewrel_forward.2} parent=0 // pred_check
    _
  $region47: #{fewrel_forward.2} parent=0 // pred_check_branch
    %40 = sbr.rel (0) target = $region49
  $region48: #{fewrel_forward.2} parent=0 // pred_region
    _
  $region49: #{fewrel_forward.2} parent=0 // pred_fallthru
    _
  %v42 = vld [vmem:[%s0] sm:$0xff]
  %v43 = vld [vmem:[%s0 + $0x8] sm:$0xff]
  %v44 = vld [vmem:[%s1] sm:$0xff]
  %v45 = vld [vmem:[%s1 + $0x8] sm:$0xff]
  %v46 = vld [vmem:[%s2] sm:$0xff]
  %v47 = vld [vmem:[%s2 + $0x8] sm:$0xff]
  %v48 = vld [vmem:[%s3] sm:$0xff]
  %v49 = vld [vmem:[%s3 + $0x8] sm:$0xff]
  %v50 = vld [vmem:[%s4] sm:$0xff]
  %v51 = vld [vmem:[%s4 + $0x8] sm:$0xff]
  %v52 = vld [vmem:[%s5] sm:$0xff]
  %v53 = vld [vmem:[%s5 + $0x8] sm:$0xff]
  %v54 = vmul.f32 %v42, %v46
  %v55 = vmul.f32 %v43, %v47
  %v56 = vld [vmem:[%s9] sm:$0xf]
  %v57 = vld [vmem:[%s9 + $0x4] sm:$0xf]
  %v58 = vld [vmem:[%s9 + $0x8] sm:$0xf]
  %v59 = vld [vmem:[%s9 + $0xc] sm:$0xf]
  %v60 = vld [vmem:[%s9 + $0x10] sm:$0xf]
  %v61 = vld [vmem:[%s9 + $0x14] sm:$0xf]
  %v62 = vld [vmem:[%s9 + $0x18] sm:$0xf]
  %v63 = vld [vmem:[%s9 + $0x1c] sm:$0xf]
  %v64 = vld [vmem:[%s9 + $0x20] sm:$0xf]
  %v65 = vld [vmem:[%s9 + $0x24] sm:$0xf]
  %v66 = vld [vmem:[%s9 + $0x28] sm:$0xf]
  %v67 = vld [vmem:[%s9 + $0x2c] sm:$0xf]
  %v68 = vld [vmem:[%s9 + $0x30] sm:$0xf]
  %v69 = vld [vmem:[%s9 + $0x34] sm:$0xf]
  %v70 = vld [vmem:[%s9 + $0x38] sm:$0xf]
  %v71 = vld [vmem:[%s9 + $0x3c] sm:$0xf]
  %v72 = vpack.c.bf16 %v55, %v54
  %v89 = vunpack.c.l.b16 %v56
  %v90 = vunpack.c.l.b16 %v57
  %v91 = vunpack.c.l.b16 %v58
  %v92 = vunpack.c.l.b16 %v59
  %v93 = vunpack.c.l.b16 %v60
  %v94 = vunpack.c.l.b16 %v61
  %v95 = vunpack.c.l.b16 %v62
  %v96 = vunpack.c.l.b16 %v63
  %v97 = vunpack.c.l.b16 %v64
  %v98 = vunpack.c.l.b16 %v65
  %v99 = vunpack.c.l.b16 %v66
  %v100 = vunpack.c.l.b16 %v67
  %v101 = vunpack.c.l.b16 %v68
  %v102 = vunpack.c.l.b16 %v69
  %v103 = vunpack.c.l.b16 %v70
  %v104 = vunpack.c.l.b16 %v71
  %v105 = vpack.c.b16 %v90, %v89
  %v106 = vpack.c.b16 %v92, %v91
  %v107 = vpack.c.b16 %v94, %v93
  %v108 = vpack.c.b16 %v96, %v95
  %v109 = vpack.c.b16 %v98, %v97
  %v110 = vpack.c.b16 %v100, %v99
  %v111 = vpack.c.b16 %v102, %v101
  %v112 = vpack.c.b16 %v104, %v103
  %121 = vmatprep.subr.bf16.mxu0 0
  %122 = vmatpush1.bf16.msra.mxu0 %v105
  %123 = vmatprep.subr.bf16.mxu0 0
  %124 = vmatpush1.bf16.msra.mxu0 %v106
  %125 = vmatprep.subr.bf16.mxu0 0
  %126 = vmatpush1.bf16.msra.mxu0 %v107
  %127 = vmatprep.subr.bf16.mxu0 0
  %128 = vmatpush1.bf16.msra.mxu0 %v108
  %129 = vmatprep.subr.bf16.mxu0 0
  %130 = vmatpush1.bf16.msra.mxu0 %v109
  %131 = vmatprep.subr.bf16.mxu0 0
  %132 = vmatpush1.bf16.msra.mxu0 %v110
  %133 = vmatprep.subr.bf16.mxu0 0
  %134 = vmatpush1.bf16.msra.mxu0 %v111
  %135 = vmatprep.subr.bf16.mxu0 0
  %136 = vmatpush1.bf16.msra.mxu0 %v112
  %137 = vmatprep.subr.bf16.mxu0 0
  %138 = vmatpush1.bf16.msra.mxu0 0
  %139 = vmatprep.subr.bf16.mxu0 0
  %140 = vmatpush1.bf16.msra.mxu0 0
  %141 = vmatprep.subr.bf16.mxu0 0
  %142 = vmatpush1.bf16.msra.mxu0 0
  %143 = vmatprep.subr.bf16.mxu0 0
  %144 = vmatpush1.bf16.msra.mxu0 0
  %145 = vmatprep.subr.bf16.mxu0 0
  %146 = vmatpush1.bf16.msra.mxu0 0
  %147 = vmatprep.subr.bf16.mxu0 0
  %148 = vmatpush1.bf16.msra.mxu0 0
  %149 = vmatprep.subr.bf16.mxu0 0
  %150 = vmatpush1.bf16.msra.mxu0 0
  %151 = vmatprep.subr.bf16.mxu0 0
  %152 = vmatpush1.bf16.msra.mxu0 0
  %153 = vmatprep.mubr.bf16.mxu0 0
  %154 = vmatmul.mubr.bf16.gmra.mrb[0].mxu0 %v72
  %v155 = vpop.f32.mrb[0].mxu0
  %v156 = vadd.f32 0.0, %v155
  %v157 = vpop.f32.mrb[0].mxu0
  %v158 = vpop.f32.mrb[0].mxu0
  %v159 = vadd.f32 0.0, %v158
  %v160 = vpop.f32.mrb[0].mxu0
  %161 = vdwg.mxu0
  %v162 = vpack.c.bf16 %v45, %v44
  %163 = vmatprep.subr.bf16.mxu0 0
  %164 = vmatpush1.bf16.msra.mxu0 %v105
  %165 = vmatprep.subr.bf16.mxu0 0
  %166 = vmatpush1.bf16.msra.mxu0 %v106
  %167 = vmatprep.subr.bf16.mxu0 0
  %168 = vmatpush1.bf16.msra.mxu0 %v107
  %169 = vmatprep.subr.bf16.mxu0 0
  %170 = vmatpush1.bf16.msra.mxu0 %v108
  %171 = vmatprep.subr.bf16.mxu0 0
  %172 = vmatpush1.bf16.msra.mxu0 %v109
  %173 = vmatprep.subr.bf16.mxu0 0
  %174 = vmatpush1.bf16.msra.mxu0 %v110
  %175 = vmatprep.subr.bf16.mxu0 0
  %176 = vmatpush1.bf16.msra.mxu0 %v111
  %177 = vmatprep.subr.bf16.mxu0 0
  %178 = vmatpush1.bf16.msra.mxu0 %v112
  %179 = vmatprep.subr.bf16.mxu0 0
  %180 = vmatpush1.bf16.msra.mxu0 0
  %181 = vmatprep.subr.bf16.mxu0 0
  %182 = vmatpush1.bf16.msra.mxu0 0
  %183 = vmatprep.subr.bf16.mxu0 0
  %184 = vmatpush1.bf16.msra.mxu0 0
  %185 = vmatprep.subr.bf16.mxu0 0
  %186 = vmatpush1.bf16.msra.mxu0 0
  %187 = vmatprep.subr.bf16.mxu0 0
  %188 = vmatpush1.bf16.msra.mxu0 0
  %189 = vmatprep.subr.bf16.mxu0 0
  %190 = vmatpush1.bf16.msra.mxu0 0
  %191 = vmatprep.subr.bf16.mxu0 0
  %192 = vmatpush1.bf16.msra.mxu0 0
  %193 = vmatprep.subr.bf16.mxu0 0
  %194 = vmatpush1.bf16.msra.mxu0 0
  %195 = vmatprep.mubr.bf16.mxu0 0
  %196 = vmatmul.mubr.bf16.gmra.mrb[0].mxu0 %v162
  %v197 = vpop.f32.mrb[0].mxu0
  %v198 = vadd.f32 0.0, %v197
  %v199 = vpop.f32.mrb[0].mxu0
  %v200 = vpop.f32.mrb[0].mxu0
  %v201 = vadd.f32 0.0, %v200
  %v202 = vpop.f32.mrb[0].mxu0
  %203 = vdwg.mxu0
  %v204 = vld [vmem:[%s10] sm:$0x1]
  %v206 = vlaneseq
  %v207 = vshrl.u32 %v206, 7
  %v208 = vsub.s32 0, %v207
  %v209 = vrot.slane %v204, %v208
  %v211 = vmul.f32 %v156, %v209
  %v212 = vmul.f32 %v159, %v209
  %213 = vadd.xlane.f32.xlu0 %v211
  %v214 = vpop.xlane.xlu0 %213
  %215 = vadd.xlane.f32.xlu0 %v212
  %v216 = vpop.xlane.xlu0 %215
  %v217 = vld [vmem:[%s11] sm:$0x1]
  %v219 = vlaneseq
  %v220 = vshrl.u32 %v219, 7
  %v221 = vsub.s32 0, %v220
  %v222 = vrot.slane %v217, %v221
  %v224 = vmul.f32 %v198, %v222
  %v225 = vmul.f32 %v201, %v222
  %226 = vadd.xlane.f32.xlu0 %v224
  %v227 = vpop.xlane.xlu0 %226
  %228 = vadd.xlane.f32.xlu0 %v225
  %v229 = vpop.xlane.xlu0 %228
  %v230 = vadd.f32 %v214, %v227
  %v231 = vadd.f32 %v216, %v229
  %v232 = vmax.f32 %v230, 0.0
  %v233 = vmax.f32 %v231, 0.0
  %vm234 = vcmp.gt.f32.partialorder %v52, 0.0
  %vm235 = vcmp.gt.f32.partialorder %v53, 0.0
  %v236 = vsel %vm234, %v232, -1e+30
  %v237 = vsel %vm235, %v233, -1e+30
  %vm238 = vcmask 130048
  %v239 = vsel %vm238, %v236, -inf
  %v240 = vsel %vm238, %v237, -inf
  %v241 = vmax.f32 %v239, %v240
  %v242 = vrot.slane %v241, 4
  %v243 = vmax.f32 %v241, %v242
  %v244 = vrot.slane %v243, 2
  %v245 = vmax.f32 %v243, %v244
  %v246 = vrot.slane %v245, 1
  %v247 = vmax.f32 %v245, %v246
  %v248 = vmul.f32 %v52, %v247
  %v249 = vmul.f32 %v53, %v247
  %v250 = vsel %vm238, %v248, 0.0
  %251 = vadd.xlane.f32.xlu0 %v250
  %v252 = vpop.xlane.xlu0 %251
  %v253 = vsel %vm238, %v249, 0.0
  %254 = vadd.xlane.f32.xlu0 %v253
  %v255 = vpop.xlane.xlu0 %254
  %v256 = vsub.f32 %v232, %v252
  %v257 = vsub.f32 %v233, %v255
  %v258 = vmul.f32 %v256, 1.442695
  %v259 = vpow.pop %v258
  %v260 = vmul.f32 %v257, 1.442695
  %v261 = vpow.pop %v260
  %v263 = vsel %vm238, %v50, 0
  %v266 = vsel %vm238, %v51, 0
  %268 = vmatprep.subr.mxu0 0.0
  %269 = vmatpush1.msra.mxu0 %v259
  %270 = vmatprep.subr.mxu0 0.0
  %271 = vmatpush1.msra.mxu0 %v261
  %272 = vmatprep.subr.mxu0 0.0
  %273 = vmatpush1.msra.mxu0 0.0
  %274 = vmatprep.subr.mxu0 0.0
  %275 = vmatpush1.msra.mxu0 0.0
  %276 = vmatprep.subr.mxu0 0.0
  %277 = vmatpush1.msra.mxu0 0.0
  %278 = vmatprep.subr.mxu0 0.0
  %279 = vmatpush1.msra.mxu0 0.0
  %280 = vmatprep.subr.mxu0 0.0
  %281 = vmatpush1.msra.mxu0 0.0
  %282 = vmatprep.subr.mxu0 0.0
  %283 = vmatpush1.msra.mxu0 0.0
  %284 = vmatprep.subr.mxu0 0.0
  %285 = vmatpush1.msra.mxu0 0.0
  %286 = vmatprep.subr.mxu0 0.0
  %287 = vmatpush1.msra.mxu0 0.0
  %288 = vmatprep.subr.mxu0 0.0
  %289 = vmatpush1.msra.mxu0 0.0
  %290 = vmatprep.subr.mxu0 0.0
  %291 = vmatpush1.msra.mxu0 0.0
  %292 = vmatprep.subr.mxu0 0.0
  %293 = vmatpush1.msra.mxu0 0.0
  %294 = vmatprep.subr.mxu0 0.0
  %295 = vmatpush1.msra.mxu0 0.0
  %296 = vmatprep.subr.mxu0 0.0
  %297 = vmatpush1.msra.mxu0 0.0
  %298 = vmatprep.subr.mxu0 0.0
  %299 = vmatpush1.msra.mxu0 0.0
  %300 = vmatprep.subr.mxu0 0.0
  %301 = vmatpush1.msra.mxu0 0.0
  %302 = vmatprep.subr.mxu0 0.0
  %303 = vmatpush1.msra.mxu0 0.0
  %304 = vmatprep.subr.mxu0 0.0
  %305 = vmatpush1.msra.mxu0 0.0
  %306 = vmatprep.subr.mxu0 0.0
  %307 = vmatpush1.msra.mxu0 0.0
  %308 = vmatprep.subr.mxu0 0.0
  %309 = vmatpush1.msra.mxu0 0.0
  %310 = vmatprep.subr.mxu0 0.0
  %311 = vmatpush1.msra.mxu0 0.0
  %312 = vmatprep.subr.mxu0 0.0
  %313 = vmatpush1.msra.mxu0 0.0
  %314 = vmatprep.subr.mxu0 0.0
  %315 = vmatpush1.msra.mxu0 0.0
  %316 = vmatprep.subr.mxu0 0.0
  %317 = vmatpush1.msra.mxu0 0.0
  %318 = vmatprep.subr.mxu0 0.0
  %319 = vmatpush1.msra.mxu0 0.0
  %320 = vmatprep.subr.mxu0 0.0
  %321 = vmatpush1.msra.mxu0 0.0
  %322 = vmatprep.subr.mxu0 0.0
  %323 = vmatpush1.msra.mxu0 0.0
  %324 = vmatprep.subr.mxu0 0.0
  %325 = vmatpush1.msra.mxu0 0.0
  %326 = vmatprep.subr.mxu0 0.0
  %327 = vmatpush1.msra.mxu0 0.0
  %328 = vmatprep.subr.mxu0 0.0
  %329 = vmatpush1.msra.mxu0 0.0
  %330 = vmatprep.subr.mxu0 0.0
  %331 = vmatpush1.msra.mxu0 0.0
  %332 = vmatprep.mubr.f32.mxu0 0.0
  %333 = vmatmul.mubr.f32.gmra.mrb[0].mxu0 %v263
  %v334 = vpop.f32.mrb[0].mxu0
  %v335 = vadd.f32 0.0, %v334
  %v336 = vpop.f32.mrb[0].mxu0
  %337 = vmatprep.mubr.f32.mxu0 0.0
  %338 = vmatmul.mubr.f32.gmra.mrb[0].mxu0 %v266
  %v339 = vpop.f32.mrb[0].mxu0
  %v340 = vadd.f32 0.0, %v339
  %v341 = vpop.f32.mrb[0].mxu0
  %342 = vdwg.mxu0
  %v343 = vmul.f32 %v259, %v156
  %v344 = vmul.f32 %v261, %v159
  %345 = vmatprep.subr.mxu0 0.0
  %346 = vmatpush1.msra.mxu0 %v343
  %347 = vmatprep.subr.mxu0 0.0
  %348 = vmatpush1.msra.mxu0 %v344
  %349 = vmatprep.subr.mxu0 0.0
  %350 = vmatpush1.msra.mxu0 0.0
  %351 = vmatprep.subr.mxu0 0.0
  %352 = vmatpush1.msra.mxu0 0.0
  %353 = vmatprep.subr.mxu0 0.0
  %354 = vmatpush1.msra.mxu0 0.0
  %355 = vmatprep.subr.mxu0 0.0
  %356 = vmatpush1.msra.mxu0 0.0
  %357 = vmatprep.subr.mxu0 0.0
  %358 = vmatpush1.msra.mxu0 0.0
  %359 = vmatprep.subr.mxu0 0.0
  %360 = vmatpush1.msra.mxu0 0.0
  %361 = vmatprep.subr.mxu0 0.0
  %362 = vmatpush1.msra.mxu0 0.0
  %363 = vmatprep.subr.mxu0 0.0
  %364 = vmatpush1.msra.mxu0 0.0
  %365 = vmatprep.subr.mxu0 0.0
  %366 = vmatpush1.msra.mxu0 0.0
  %367 = vmatprep.subr.mxu0 0.0
  %368 = vmatpush1.msra.mxu0 0.0
  %369 = vmatprep.subr.mxu0 0.0
  %370 = vmatpush1.msra.mxu0 0.0
  %371 = vmatprep.subr.mxu0 0.0
  %372 = vmatpush1.msra.mxu0 0.0
  %373 = vmatprep.subr.mxu0 0.0
  %374 = vmatpush1.msra.mxu0 0.0
  %375 = vmatprep.subr.mxu0 0.0
  %376 = vmatpush1.msra.mxu0 0.0
  %377 = vmatprep.subr.mxu0 0.0
  %378 = vmatpush1.msra.mxu0 0.0
  %379 = vmatprep.subr.mxu0 0.0
  %380 = vmatpush1.msra.mxu0 0.0
  %381 = vmatprep.subr.mxu0 0.0
  %382 = vmatpush1.msra.mxu0 0.0
  %383 = vmatprep.subr.mxu0 0.0
  %384 = vmatpush1.msra.mxu0 0.0
  %385 = vmatprep.subr.mxu0 0.0
  %386 = vmatpush1.msra.mxu0 0.0
  %387 = vmatprep.subr.mxu0 0.0
  %388 = vmatpush1.msra.mxu0 0.0
  %389 = vmatprep.subr.mxu0 0.0
  %390 = vmatpush1.msra.mxu0 0.0
  %391 = vmatprep.subr.mxu0 0.0
  %392 = vmatpush1.msra.mxu0 0.0
  %393 = vmatprep.subr.mxu0 0.0
  %394 = vmatpush1.msra.mxu0 0.0
  %395 = vmatprep.subr.mxu0 0.0
  %396 = vmatpush1.msra.mxu0 0.0
  %397 = vmatprep.subr.mxu0 0.0
  %398 = vmatpush1.msra.mxu0 0.0
  %399 = vmatprep.subr.mxu0 0.0
  %400 = vmatpush1.msra.mxu0 0.0
  %401 = vmatprep.subr.mxu0 0.0
  %402 = vmatpush1.msra.mxu0 0.0
  %403 = vmatprep.subr.mxu0 0.0
  %404 = vmatpush1.msra.mxu0 0.0
  %405 = vmatprep.subr.mxu0 0.0
  %406 = vmatpush1.msra.mxu0 0.0
  %407 = vmatprep.subr.mxu0 0.0
  %408 = vmatpush1.msra.mxu0 0.0
  %409 = vmatprep.mubr.f32.mxu0 0.0
  %410 = vmatmul.mubr.f32.gmra.mrb[0].mxu0 %v263
  %v411 = vpop.f32.mrb[0].mxu0
  %v412 = vadd.f32 0.0, %v411
  %v413 = vpop.f32.mrb[0].mxu0
  %414 = vmatprep.mubr.f32.mxu0 0.0
  %415 = vmatmul.mubr.f32.gmra.mrb[0].mxu0 %v266
  %v416 = vpop.f32.mrb[0].mxu0
  %v417 = vadd.f32 0.0, %v416
  %v418 = vpop.f32.mrb[0].mxu0
  %419 = vdwg.mxu0
  %v420 = vsel %vm238, %v50, 0.0
  %421 = vadd.xlane.f32.xlu0 %v420
  %v422 = vpop.xlane.xlu0 %421
  %v423 = vsel %vm238, %v51, 0.0
  %424 = vadd.xlane.f32.xlu0 %v423
  %v425 = vpop.xlane.xlu0 %424
  %vm426 = vcmp.gt.f32.partialorder %v422, 0.0
  %vm427 = vcmp.gt.f32.partialorder %v425, 0.0
  %v428 = vmax.f32 %v335, 1e-30
  %v429 = vmax.f32 %v340, 1e-30
  %v430 = vrcp.pop %v428
  %v431 = vrcp.pop %v429
  %433 = vset.pattern.permute.xlu0 0
  %434 = vperm.xlu0 %433, %v430
  %v435 = vpop.permute.xlu0 %434
  %438 = vset.pattern.permute.xlu0 0
  %439 = vperm.xlu0 %438, %v431
  %v440 = vpop.permute.xlu0 %439
  %v442 = vmul.f32 %v412, %v435
  %v443 = vmul.f32 %v417, %v440
  %v444 = vsel %vm426, 1, 0
  %v445 = vsel %vm427, 1, 0
  %vm446 = vcmp.eq.s32.totalorder %v444, 1
  %vm447 = vcmp.eq.s32.totalorder %v445, 1
  %v448 = vsel %vm446, %v442, 0.0
  %v449 = vsel %vm447, %v443, 0.0
  %450 = vadd.xlane.f32.xlu0 %v448
  %v451 = vpop.xlane.xlu0 %450
  %452 = vadd.xlane.f32.xlu0 %v449
  %v453 = vpop.xlane.xlu0 %452
  %v454 = vld [vmem:[%s6] sm:$0x3]
  %v456 = vsel %vm238, %v454, 0
  %458 = vmatprep.subr.mxu0 0.0
  %459 = vmatpush1.msra.mxu0 %v451
  %460 = vmatprep.subr.mxu0 0.0
  %461 = vmatpush1.msra.mxu0 %v453
  %462 = vmatprep.subr.mxu0 0.0
  %463 = vmatpush1.msra.mxu0 0.0
  %464 = vmatprep.subr.mxu0 0.0
  %465 = vmatpush1.msra.mxu0 0.0
  %466 = vmatprep.subr.mxu0 0.0
  %467 = vmatpush1.msra.mxu0 0.0
  %468 = vmatprep.subr.mxu0 0.0
  %469 = vmatpush1.msra.mxu0 0.0
  %470 = vmatprep.subr.mxu0 0.0
  %471 = vmatpush1.msra.mxu0 0.0
  %472 = vmatprep.subr.mxu0 0.0
  %473 = vmatpush1.msra.mxu0 0.0
  %474 = vmatprep.subr.mxu0 0.0
  %475 = vmatpush1.msra.mxu0 0.0
  %476 = vmatprep.subr.mxu0 0.0
  %477 = vmatpush1.msra.mxu0 0.0
  %478 = vmatprep.subr.mxu0 0.0
  %479 = vmatpush1.msra.mxu0 0.0
  %480 = vmatprep.subr.mxu0 0.0
  %481 = vmatpush1.msra.mxu0 0.0
  %482 = vmatprep.subr.mxu0 0.0
  %483 = vmatpush1.msra.mxu0 0.0
  %484 = vmatprep.subr.mxu0 0.0
  %485 = vmatpush1.msra.mxu0 0.0
  %486 = vmatprep.subr.mxu0 0.0
  %487 = vmatpush1.msra.mxu0 0.0
  %488 = vmatprep.subr.mxu0 0.0
  %489 = vmatpush1.msra.mxu0 0.0
  %490 = vmatprep.subr.mxu0 0.0
  %491 = vmatpush1.msra.mxu0 0.0
  %492 = vmatprep.subr.mxu0 0.0
  %493 = vmatpush1.msra.mxu0 0.0
  %494 = vmatprep.subr.mxu0 0.0
  %495 = vmatpush1.msra.mxu0 0.0
  %496 = vmatprep.subr.mxu0 0.0
  %497 = vmatpush1.msra.mxu0 0.0
  %498 = vmatprep.subr.mxu0 0.0
  %499 = vmatpush1.msra.mxu0 0.0
  %500 = vmatprep.subr.mxu0 0.0
  %501 = vmatpush1.msra.mxu0 0.0
  %502 = vmatprep.subr.mxu0 0.0
  %503 = vmatpush1.msra.mxu0 0.0
  %504 = vmatprep.subr.mxu0 0.0
  %505 = vmatpush1.msra.mxu0 0.0
  %506 = vmatprep.subr.mxu0 0.0
  %507 = vmatpush1.msra.mxu0 0.0
  %508 = vmatprep.subr.mxu0 0.0
  %509 = vmatpush1.msra.mxu0 0.0
  %510 = vmatprep.subr.mxu0 0.0
  %511 = vmatpush1.msra.mxu0 0.0
  %512 = vmatprep.subr.mxu0 0.0
  %513 = vmatpush1.msra.mxu0 0.0
  %514 = vmatprep.subr.mxu0 0.0
  %515 = vmatpush1.msra.mxu0 0.0
  %516 = vmatprep.subr.mxu0 0.0
  %517 = vmatpush1.msra.mxu0 0.0
  %518 = vmatprep.subr.mxu0 0.0
  %519 = vmatpush1.msra.mxu0 0.0
  %520 = vmatprep.subr.mxu0 0.0
  %521 = vmatpush1.msra.mxu0 0.0
  %522 = vmatprep.mubr.f32.mxu0 0.0
  %523 = vmatmul.mubr.f32.gmra.mrb[0].mxu0 %v456
  %v524 = vpop.f32.mrb[0].mxu0
  %v525 = vadd.f32 0.0, %v524
  %v526 = vpop.f32.mrb[0].mxu0
  %527 = vdwg.mxu0
  %vm528 = vcmask 123904
  %v529 = vsel %vm528, %v454, 0.0
  %530 = vadd.xlane.f32.xlu0 %v529
  %v531 = vpop.xlane.xlu0 %530
  %v532 = vmul.f32 %v531, 128.0
  %v533 = vrcp.pop %v532
  %v534 = vmul.f32 %v525, %v533
  %v535 = vmax.f32 %v534, 0.0
  %v536 = vld [vmem:[%s7] sm:$0xff]
  %v537 = vld [vmem:[%s7 + $0x8] sm:$0xff]
  %vm538 = vcmask 15360
  %v540 = vsel %vm538, %v536, 0
  %v543 = vsel %vm538, %v537, 0
  %vm545 = vcmask 1041408
  %v547 = vsel %vm545, %v535, 0
  %549 = vmatprep.subr.mxu0 0.0
  %550 = vmatpush1.msra.mxu0 %v547
  %551 = vmatprep.subr.mxu0 0.0
  %552 = vmatpush1.msra.mxu0 0.0
  %553 = vmatprep.subr.mxu0 0.0
  %554 = vmatpush1.msra.mxu0 0.0
  %555 = vmatprep.subr.mxu0 0.0
  %556 = vmatpush1.msra.mxu0 0.0
  %557 = vmatprep.subr.mxu0 0.0
  %558 = vmatpush1.msra.mxu0 0.0
  %559 = vmatprep.subr.mxu0 0.0
  %560 = vmatpush1.msra.mxu0 0.0
  %561 = vmatprep.subr.mxu0 0.0
  %562 = vmatpush1.msra.mxu0 0.0
  %563 = vmatprep.subr.mxu0 0.0
  %564 = vmatpush1.msra.mxu0 0.0
  %565 = vmatprep.subr.mxu0 0.0
  %566 = vmatpush1.msra.mxu0 0.0
  %567 = vmatprep.subr.mxu0 0.0
  %568 = vmatpush1.msra.mxu0 0.0
  %569 = vmatprep.subr.mxu0 0.0
  %570 = vmatpush1.msra.mxu0 0.0
  %571 = vmatprep.subr.mxu0 0.0
  %572 = vmatpush1.msra.mxu0 0.0
  %573 = vmatprep.subr.mxu0 0.0
  %574 = vmatpush1.msra.mxu0 0.0
  %575 = vmatprep.subr.mxu0 0.0
  %576 = vmatpush1.msra.mxu0 0.0
  %577 = vmatprep.subr.mxu0 0.0
  %578 = vmatpush1.msra.mxu0 0.0
  %579 = vmatprep.subr.mxu0 0.0
  %580 = vmatpush1.msra.mxu0 0.0
  %581 = vmatprep.subr.mxu0 0.0
  %582 = vmatpush1.msra.mxu0 0.0
  %583 = vmatprep.subr.mxu0 0.0
  %584 = vmatpush1.msra.mxu0 0.0
  %585 = vmatprep.subr.mxu0 0.0
  %586 = vmatpush1.msra.mxu0 0.0
  %587 = vmatprep.subr.mxu0 0.0
  %588 = vmatpush1.msra.mxu0 0.0
  %589 = vmatprep.subr.mxu0 0.0
  %590 = vmatpush1.msra.mxu0 0.0
  %591 = vmatprep.subr.mxu0 0.0
  %592 = vmatpush1.msra.mxu0 0.0
  %593 = vmatprep.subr.mxu0 0.0
  %594 = vmatpush1.msra.mxu0 0.0
  %595 = vmatprep.subr.mxu0 0.0
  %596 = vmatpush1.msra.mxu0 0.0
  %597 = vmatprep.subr.mxu0 0.0
  %598 = vmatpush1.msra.mxu0 0.0
  %599 = vmatprep.subr.mxu0 0.0
  %600 = vmatpush1.msra.mxu0 0.0
  %601 = vmatprep.subr.mxu0 0.0
  %602 = vmatpush1.msra.mxu0 0.0
  %603 = vmatprep.subr.mxu0 0.0
  %604 = vmatpush1.msra.mxu0 0.0
  %605 = vmatprep.subr.mxu0 0.0
  %606 = vmatpush1.msra.mxu0 0.0
  %607 = vmatprep.subr.mxu0 0.0
  %608 = vmatpush1.msra.mxu0 0.0
  %609 = vmatprep.subr.mxu0 0.0
  %610 = vmatpush1.msra.mxu0 0.0
  %611 = vmatprep.subr.mxu0 0.0
  %612 = vmatpush1.msra.mxu0 0.0
  %613 = vmatprep.mubr.f32.mxu0 0.0
  %614 = vmatmul.mubr.f32.gmra.mrb[0].mxu0 %v540
  %v615 = vpop.f32.mrb[0].mxu0
  %v616 = vadd.f32 0.0, %v615
  %v617 = vpop.f32.mrb[0].mxu0
  %618 = vmatprep.mubr.f32.mxu0 0.0
  %619 = vmatmul.mubr.f32.gmra.mrb[0].mxu0 %v543
  %v620 = vpop.f32.mrb[0].mxu0
  %v621 = vadd.f32 0.0, %v620
  %v622 = vpop.f32.mrb[0].mxu0
  %623 = vdwg.mxu0
  %625 = vset.pattern.permute.xlu0 0
  %626 = vperm.xlu0 %625, %v616
  %v627 = vpop.permute.xlu0 %626
  %630 = vset.pattern.permute.xlu0 0
  %631 = vperm.xlu0 %630, %v621
  %v632 = vpop.permute.xlu0 %631
  %v634 = vadd.f32 %v48, %v627
  %v635 = vadd.f32 %v49, %v632
  %v636 = vld [vmem:[%s8] sm:$0xf]
  %v638 = vsel %vm238, %v636, 0
  %640 = vmatprep.subr.mxu0 0.0
  %641 = vmatpush1.msra.mxu0 %v634
  %642 = vmatprep.subr.mxu0 0.0
  %643 = vmatpush1.msra.mxu0 %v635
  %644 = vmatprep.subr.mxu0 0.0
  %645 = vmatpush1.msra.mxu0 0.0
  %646 = vmatprep.subr.mxu0 0.0
  %647 = vmatpush1.msra.mxu0 0.0
  %648 = vmatprep.subr.mxu0 0.0
  %649 = vmatpush1.msra.mxu0 0.0
  %650 = vmatprep.subr.mxu0 0.0
  %651 = vmatpush1.msra.mxu0 0.0
  %652 = vmatprep.subr.mxu0 0.0
  %653 = vmatpush1.msra.mxu0 0.0
  %654 = vmatprep.subr.mxu0 0.0
  %655 = vmatpush1.msra.mxu0 0.0
  %656 = vmatprep.subr.mxu0 0.0
  %657 = vmatpush1.msra.mxu0 0.0
  %658 = vmatprep.subr.mxu0 0.0
  %659 = vmatpush1.msra.mxu0 0.0
  %660 = vmatprep.subr.mxu0 0.0
  %661 = vmatpush1.msra.mxu0 0.0
  %662 = vmatprep.subr.mxu0 0.0
  %663 = vmatpush1.msra.mxu0 0.0
  %664 = vmatprep.subr.mxu0 0.0
  %665 = vmatpush1.msra.mxu0 0.0
  %666 = vmatprep.subr.mxu0 0.0
  %667 = vmatpush1.msra.mxu0 0.0
  %668 = vmatprep.subr.mxu0 0.0
  %669 = vmatpush1.msra.mxu0 0.0
  %670 = vmatprep.subr.mxu0 0.0
  %671 = vmatpush1.msra.mxu0 0.0
  %672 = vmatprep.subr.mxu0 0.0
  %673 = vmatpush1.msra.mxu0 0.0
  %674 = vmatprep.subr.mxu0 0.0
  %675 = vmatpush1.msra.mxu0 0.0
  %676 = vmatprep.subr.mxu0 0.0
  %677 = vmatpush1.msra.mxu0 0.0
  %678 = vmatprep.subr.mxu0 0.0
  %679 = vmatpush1.msra.mxu0 0.0
  %680 = vmatprep.subr.mxu0 0.0
  %681 = vmatpush1.msra.mxu0 0.0
  %682 = vmatprep.subr.mxu0 0.0
  %683 = vmatpush1.msra.mxu0 0.0
  %684 = vmatprep.subr.mxu0 0.0
  %685 = vmatpush1.msra.mxu0 0.0
  %686 = vmatprep.subr.mxu0 0.0
  %687 = vmatpush1.msra.mxu0 0.0
  %688 = vmatprep.subr.mxu0 0.0
  %689 = vmatpush1.msra.mxu0 0.0
  %690 = vmatprep.subr.mxu0 0.0
  %691 = vmatpush1.msra.mxu0 0.0
  %692 = vmatprep.subr.mxu0 0.0
  %693 = vmatpush1.msra.mxu0 0.0
  %694 = vmatprep.subr.mxu0 0.0
  %695 = vmatpush1.msra.mxu0 0.0
  %696 = vmatprep.subr.mxu0 0.0
  %697 = vmatpush1.msra.mxu0 0.0
  %698 = vmatprep.subr.mxu0 0.0
  %699 = vmatpush1.msra.mxu0 0.0
  %700 = vmatprep.subr.mxu0 0.0
  %701 = vmatpush1.msra.mxu0 0.0
  %702 = vmatprep.subr.mxu0 0.0
  %703 = vmatpush1.msra.mxu0 0.0
  %704 = vmatprep.mubr.f32.mxu0 0.0
  %705 = vmatmul.mubr.f32.gmra.mrb[0].mxu0 %v638
  %v706 = vpop.f32.mrb[0].mxu0
  %v707 = vadd.f32 0.0, %v706
  %v708 = vpop.f32.mrb[0].mxu0
  %709 = vdwg.mxu0
  %710 = vst [vmem:[%s12] sm:$0xf] %v707
  // Predicated region
  $region50: #{fewrel_forward.2} parent=0 // pred_check
    _
  $region51: #{fewrel_forward.2} parent=0 // pred_check_branch
    %712 = sbr.rel (0) target = $region53
  $region52: #{fewrel_forward.2} parent=0 // pred_region
    _
  $region53: #{fewrel_forward.2} parent=0 // pred_fallthru
    _
  // Predicated region
  $region54: #{fewrel_forward.2} parent=0 // pred_check
    _
  $region55: #{fewrel_forward.2} parent=0 // pred_check_branch
    %714 = sbr.rel (0) target = $region57
  $region56: #{fewrel_forward.2} parent=0 // pred_region
    _
  $region57: #{fewrel_forward.2} parent=0 // pred_fallthru
    _

// kernel: fewrel_forward.3
$region0: #{fewrel_forward.3}
  #allocation0 [shape = 'u32[]', space=smem, size = 0x4, offset = 0x4, fixed_abs, tag = 'smem constant byte address 0x4 - core index']
  #allocation1 [shape = 'u32[144,128]{1,0:T(1,128)}', space=vmem, size = 0x12000, scoped, tag = 'internal scratch']
  #allocation2 [shape = 'f32[128,128]{1,0:T(8,128)}', space=vmem, size = 0x10000, scoped, tag = 'scratch operand']
  #allocation3 [shape = 'f32[128,128]{1,0:T(8,128)}', space=vmem, size = 0x10000, scoped, tag = 'scratch operand']
  %s0 = inlined_call_operand.vmem [shape: f32[2,128,128], index: 0, kind: input, shape index: {}]
  %s1 = inlined_call_operand.vmem [shape: f32[2,128,128], index: 1, kind: input, shape index: {}]
  %s2 = inlined_call_operand.vmem [shape: f32[2,2,128], index: 2, kind: input, shape index: {}]
  %s3 = inlined_call_operand.vmem [shape: f32[2,1,128], index: 3, kind: input, shape index: {}]
  %s4 = inlined_call_operand.vmem [shape: f32[8,128], index: 4, kind: input, shape index: {}]
  %s5 = inlined_call_operand.vmem [shape: bf16[2,128,384], index: 5, kind: input, shape index: {}]
  %s6 = inlined_call_operand.vmem [shape: bf16[2,128,128], index: 6, kind: input, shape index: {}]
  %s7 = inlined_call_operand.vmem [shape: f32[2,8,384], index: 7, kind: input, shape index: {}]
  %s8 = inlined_call_operand.vmem [shape: bf16[2,128,256], index: 8, kind: input, shape index: {}]
  %s9 = inlined_call_operand.vmem [shape: bf16[2,256,128], index: 9, kind: input, shape index: {}]
  %s10 = inlined_call_operand.vmem [shape: bf16[128,128], index: 10, kind: input, shape index: {}]
  %s11 = inlined_call_operand.vmem [shape: bf16[128,128], index: 11, kind: input, shape index: {}]
  %s12 = inlined_call_operand.vmem [shape: f32[2,1,128], index: 12, kind: output, shape index: {}]
  %s13 = sld [smem:[#allocation0]]
  $region89: #{fewrel_forward.3} parent=0
    _
  %s15 = ssub.s32 1, %s13
  %s16 = scalar_select 0, %s15, %s13
  loop: start=0, step=1, limit=6
  $region2: #{fewrel_forward.3} parent=0 // loop_pre_header
    _
  $region3: #{fewrel_forward.3} parent=0 // loop_header
    %s18 = sphi 0, %s22
    %p19 = scmp.ge.s32.totalorder %s18, 6
    %s25 = sphi 0, %s37
    %s26 = sphi 0, %s33
    %s27 = sphi 0, %s25
    %s28 = sphi 0, %s26
    %s29 = sphi 0, %s27
    %s30 = sphi 0, %s28
    %s40 = sphi 0, %s42
    %s43 = sphi 0, %s40
    %s44 = sphi 0, %s43
    %s60 = sphi 0, %s44
    %s66 = sphi 0, %s68
    %s69 = sphi 0, %s66
    %s70 = sphi 0, %s69
    %s86 = sphi 0, %s70
    %s92 = sphi 0, %s94
    %s95 = sphi 0, %s92
    %s96 = sphi 0, %s95
    %s112 = sphi 0, %s96
    %s118 = sphi 0, %s120
    %s121 = sphi 0, %s118
    %s122 = sphi 0, %s121
    %s138 = sphi 0, %s122
    %s142 = sphi 0, %s142
    %s144 = sphi 0, %s142
    %s145 = sphi 0, %s144
    %s159 = sphi 0, %s145
    %s165 = sphi 0, %s167
    %s168 = sphi 0, %s165
    %s169 = sphi 0, %s168
    %s185 = sphi 0, %s169
    %s191 = sphi 0, %s193
    %s194 = sphi 0, %s191
    %s195 = sphi 0, %s194
    %s211 = sphi 0, %s195
    %s217 = sphi 0, %s219
    %s220 = sphi 0, %s217
    %s221 = sphi 0, %s220
    %s237 = sphi 0, %s221
    %s243 = sphi 0, %s245
    %s246 = sphi 0, %s243
    %s247 = sphi 0, %s246
    %s263 = sphi 0, %s247
    %s269 = sphi 0, %s271
    %s272 = sphi 0, %s269
    %s273 = sphi 0, %s272
    %s289 = sphi 0, %s273
    %s293 = sphi 0, %s293
    %s295 = sphi 0, %s293
    %s296 = sphi 0, %s295
    %s310 = sphi 0, %s296
    %s314 = sphi 0, %s314
    %s316 = sphi 0, %s314
    %s317 = sphi 0, %s316
    %s331 = sphi 0, %s317
    %s337 = sphi 0, %s339
    %s340 = sphi 0, %s337
    %s341 = sphi 0, %s340
    %s357 = sphi 0, %s341
  $region4: #{fewrel_forward.3} parent=0 // loop_header_branch
    %21 = sbr.rel (%p19) target = $region8
  $region5: #{fewrel_forward.3} parent=0 // loop_body
    %s23 = ssub.s32 %s18, 1
    %s24 = ssub.s32 %s18, 2
    %s31 = sadd.s32 1, %s26
    %p32 = scmp.ge.s32.totalorder %s31, 2
    %s33 = scalar_select %p32, 0, %s31
    %s34 = sadd.s32 1, %s25
    %s35 = scalar_select %p32, %s34, %s25
    %p36 = scmp.ge.s32.totalorder %s35, 2
    %s37 = scalar_select %p36, 0, %s35
    %s38 = ssub.s32 %s25, %s37
    %p39 = scmp.eq.s32.totalorder %s38, 0
    %s41 = sadd.s32 %s40, 1
    %s42 = scalar_select %p39, %s40, %s41
    %p45 = pneg %p39
    %p46 = scmp.eq.s32.totalorder %s18, 3
    %p47 = por %p45, %p46
    %p48 = scmp.ne.s32.totalorder %s40, %s43
    %p49 = scmp.eq.s32.totalorder %s18, 0
    %p50 = por %p48, %p49
    %p51 = scmp.ne.s32.totalorder %s40, %s43
    %p52 = scmp.eq.s32.totalorder %s23, 3
    %p53 = por %p51, %p52
    %p54 = scmp.ne.s32.totalorder %s43, %s44
    %p55 = scmp.eq.s32.totalorder %s23, 0
    %p56 = por %p54, %p55
    %p57 = scmp.ne.s32.totalorder %s43, %s44
    %p58 = scmp.eq.s32.totalorder %s24, 3
    %p59 = por %p57, %p58
    %p61 = scmp.ne.s32.totalorder %s44, %s60
    %p62 = scmp.eq.s32.totalorder %s24, 0
    %p63 = por %p61, %p62
    %s64 = ssub.s32 %s25, %s37
    %p65 = scmp.eq.s32.totalorder %s64, 0
    %s67 = sadd.s32 %s66, 1
    %s68 = scalar_select %p65, %s66, %s67
    %p71 = pneg %p65
    %p72 = scmp.eq.s32.totalorder %s18, 3
    %p73 = por %p71, %p72
    %p74 = scmp.ne.s32.totalorder %s66, %s69
    %p75 = scmp.eq.s32.totalorder %s18, 0
    %p76 = por %p74, %p75
    %p77 = scmp.ne.s32.totalorder %s66, %s69
    %p78 = scmp.eq.s32.totalorder %s23, 3
    %p79 = por %p77, %p78
    %p80 = scmp.ne.s32.totalorder %s69, %s70
    %p81 = scmp.eq.s32.totalorder %s23, 0
    %p82 = por %p80, %p81
    %p83 = scmp.ne.s32.totalorder %s69, %s70
    %p84 = scmp.eq.s32.totalorder %s24, 3
    %p85 = por %p83, %p84
    %p87 = scmp.ne.s32.totalorder %s70, %s86
    %p88 = scmp.eq.s32.totalorder %s24, 0
    %p89 = por %p87, %p88
    %s90 = ssub.s32 %s25, %s37
    %p91 = scmp.eq.s32.totalorder %s90, 0
    %s93 = sadd.s32 %s92, 1
    %s94 = scalar_select %p91, %s92, %s93
    %p97 = pneg %p91
    %p98 = scmp.eq.s32.totalorder %s18, 3
    %p99 = por %p97, %p98
    %p100 = scmp.ne.s32.totalorder %s92, %s95
    %p101 = scmp.eq.s32.totalorder %s18, 0
    %p102 = por %p100, %p101
    %p103 = scmp.ne.s32.totalorder %s92, %s95
    %p104 = scmp.eq.s32.totalorder %s23, 3
    %p105 = por %p103, %p104
    %p106 = scmp.ne.s32.totalorder %s95, %s96
    %p107 = scmp.eq.s32.totalorder %s23, 0
    %p108 = por %p106, %p107
    %p109 = scmp.ne.s32.totalorder %s95, %s96
    %p110 = scmp.eq.s32.totalorder %s24, 3
    %p111 = por %p109, %p110
    %p113 = scmp.ne.s32.totalorder %s96, %s112
    %p114 = scmp.eq.s32.totalorder %s24, 0
    %p115 = por %p113, %p114
    %s116 = ssub.s32 %s25, %s37
    %p117 = scmp.eq.s32.totalorder %s116, 0
    %s119 = sadd.s32 %s118, 1
    %s120 = scalar_select %p117, %s118, %s119
    %p123 = pneg %p117
    %p124 = scmp.eq.s32.totalorder %s18, 3
    %p125 = por %p123, %p124
    %p126 = scmp.ne.s32.totalorder %s118, %s121
    %p127 = scmp.eq.s32.totalorder %s18, 0
    %p128 = por %p126, %p127
    %p129 = scmp.ne.s32.totalorder %s118, %s121
    %p130 = scmp.eq.s32.totalorder %s23, 3
    %p131 = por %p129, %p130
    %p132 = scmp.ne.s32.totalorder %s121, %s122
    %p133 = scmp.eq.s32.totalorder %s23, 0
    %p134 = por %p132, %p133
    %p135 = scmp.ne.s32.totalorder %s121, %s122
    %p136 = scmp.eq.s32.totalorder %s24, 3
    %p137 = por %p135, %p136
    %p139 = scmp.ne.s32.totalorder %s122, %s138
    %p140 = scmp.eq.s32.totalorder %s24, 0
    %p141 = por %p139, %p140
    %s143 = sadd.s32 %s142, 1
    %p146 = scmp.eq.s32.totalorder %s18, 3
    %p147 = scmp.ne.s32.totalorder %s142, %s144
    %p148 = scmp.eq.s32.totalorder %s18, 0
    %p149 = por %p147, %p148
    %p150 = scmp.ne.s32.totalorder %s142, %s144
    %p151 = scmp.eq.s32.totalorder %s23, 3
    %p152 = por %p150, %p151
    %p153 = scmp.ne.s32.totalorder %s144, %s145
    %p154 = scmp.eq.s32.totalorder %s23, 0
    %p155 = por %p153, %p154
    %p156 = scmp.ne.s32.totalorder %s144, %s145
    %p157 = scmp.eq.s32.totalorder %s24, 3
    %p158 = por %p156, %p157
    %p160 = scmp.ne.s32.totalorder %s145, %s159
    %p161 = scmp.eq.s32.totalorder %s24, 0
    %p162 = por %p160, %p161
    %s163 = ssub.s32 %s26, %s33
    %p164 = scmp.eq.s32.totalorder %s163, 0
    %s166 = sadd.s32 %s165, 1
    %s167 = scalar_select %p164, %s165, %s166
    %p170 = pneg %p164
    %p171 = scmp.eq.s32.totalorder %s18, 3
    %p172 = por %p170, %p171
    %p173 = scmp.ne.s32.totalorder %s165, %s168
    %p174 = scmp.eq.s32.totalorder %s18, 0
    %p175 = por %p173, %p174
    %p176 = scmp.ne.s32.totalorder %s165, %s168
    %p177 = scmp.eq.s32.totalorder %s23, 3
    %p178 = por %p176, %p177
    %p179 = scmp.ne.s32.totalorder %s168, %s169
    %p180 = scmp.eq.s32.totalorder %s23, 0
    %p181 = por %p179, %p180
    %p182 = scmp.ne.s32.totalorder %s168, %s169
    %p183 = scmp.eq.s32.totalorder %s24, 3
    %p184 = por %p182, %p183
    %p186 = scmp.ne.s32.totalorder %s169, %s185
    %p187 = scmp.eq.s32.totalorder %s24, 0
    %p188 = por %p186, %p187
    %s189 = ssub.s32 %s26, %s33
    %p190 = scmp.eq.s32.totalorder %s189, 0
    %s192 = sadd.s32 %s191, 1
    %s193 = scalar_select %p190, %s191, %s192
    %p196 = pneg %p190
    %p197 = scmp.eq.s32.totalorder %s18, 3
    %p198 = por %p196, %p197
    %p199 = scmp.ne.s32.totalorder %s191, %s194
    %p200 = scmp.eq.s32.totalorder %s18, 0
    %p201 = por %p199, %p200
    %p202 = scmp.ne.s32.totalorder %s191, %s194
    %p203 = scmp.eq.s32.totalorder %s23, 3
    %p204 = por %p202, %p203
    %p205 = scmp.ne.s32.totalorder %s194, %s195
    %p206 = scmp.eq.s32.totalorder %s23, 0
    %p207 = por %p205, %p206
    %p208 = scmp.ne.s32.totalorder %s194, %s195
    %p209 = scmp.eq.s32.totalorder %s24, 3
    %p210 = por %p208, %p209
    %p212 = scmp.ne.s32.totalorder %s195, %s211
    %p213 = scmp.eq.s32.totalorder %s24, 0
    %p214 = por %p212, %p213
    %s215 = ssub.s32 %s26, %s33
    %p216 = scmp.eq.s32.totalorder %s215, 0
    %s218 = sadd.s32 %s217, 1
    %s219 = scalar_select %p216, %s217, %s218
    %p222 = pneg %p216
    %p223 = scmp.eq.s32.totalorder %s18, 3
    %p224 = por %p222, %p223
    %p225 = scmp.ne.s32.totalorder %s217, %s220
    %p226 = scmp.eq.s32.totalorder %s18, 0
    %p227 = por %p225, %p226
    %p228 = scmp.ne.s32.totalorder %s217, %s220
    %p229 = scmp.eq.s32.totalorder %s23, 3
    %p230 = por %p228, %p229
    %p231 = scmp.ne.s32.totalorder %s220, %s221
    %p232 = scmp.eq.s32.totalorder %s23, 0
    %p233 = por %p231, %p232
    %p234 = scmp.ne.s32.totalorder %s220, %s221
    %p235 = scmp.eq.s32.totalorder %s24, 3
    %p236 = por %p234, %p235
    %p238 = scmp.ne.s32.totalorder %s221, %s237
    %p239 = scmp.eq.s32.totalorder %s24, 0
    %p240 = por %p238, %p239
    %s241 = ssub.s32 %s26, %s33
    %p242 = scmp.eq.s32.totalorder %s241, 0
    %s244 = sadd.s32 %s243, 1
    %s245 = scalar_select %p242, %s243, %s244
    %p248 = pneg %p242
    %p249 = scmp.eq.s32.totalorder %s18, 3
    %p250 = por %p248, %p249
    %p251 = scmp.ne.s32.totalorder %s243, %s246
    %p252 = scmp.eq.s32.totalorder %s18, 0
    %p253 = por %p251, %p252
    %p254 = scmp.ne.s32.totalorder %s243, %s246
    %p255 = scmp.eq.s32.totalorder %s23, 3
    %p256 = por %p254, %p255
    %p257 = scmp.ne.s32.totalorder %s246, %s247
    %p258 = scmp.eq.s32.totalorder %s23, 0
    %p259 = por %p257, %p258
    %p260 = scmp.ne.s32.totalorder %s246, %s247
    %p261 = scmp.eq.s32.totalorder %s24, 3
    %p262 = por %p260, %p261
    %p264 = scmp.ne.s32.totalorder %s247, %s263
    %p265 = scmp.eq.s32.totalorder %s24, 0
    %p266 = por %p264, %p265
    %s267 = ssub.s32 %s26, %s33
    %p268 = scmp.eq.s32.totalorder %s267, 0
    %s270 = sadd.s32 %s269, 1
    %s271 = scalar_select %p268, %s269, %s270
    %p274 = pneg %p268
    %p275 = scmp.eq.s32.totalorder %s18, 3
    %p276 = por %p274, %p275
    %p277 = scmp.ne.s32.totalorder %s269, %s272
    %p278 = scmp.eq.s32.totalorder %s18, 0
    %p279 = por %p277, %p278
    %p280 = scmp.ne.s32.totalorder %s269, %s272
    %p281 = scmp.eq.s32.totalorder %s23, 3
    %p282 = por %p280, %p281
    %p283 = scmp.ne.s32.totalorder %s272, %s273
    %p284 = scmp.eq.s32.totalorder %s23, 0
    %p285 = por %p283, %p284
    %p286 = scmp.ne.s32.totalorder %s272, %s273
    %p287 = scmp.eq.s32.totalorder %s24, 3
    %p288 = por %p286, %p287
    %p290 = scmp.ne.s32.totalorder %s273, %s289
    %p291 = scmp.eq.s32.totalorder %s24, 0
    %p292 = por %p290, %p291
    %s294 = sadd.s32 %s293, 1
    %p297 = scmp.eq.s32.totalorder %s18, 3
    %p298 = scmp.ne.s32.totalorder %s293, %s295
    %p299 = scmp.eq.s32.totalorder %s18, 0
    %p300 = por %p298, %p299
    %p301 = scmp.ne.s32.totalorder %s293, %s295
    %p302 = scmp.eq.s32.totalorder %s23, 3
    %p303 = por %p301, %p302
    %p304 = scmp.ne.s32.totalorder %s295, %s296
    %p305 = scmp.eq.s32.totalorder %s23, 0
    %p306 = por %p304, %p305
    %p307 = scmp.ne.s32.totalorder %s295, %s296
    %p308 = scmp.eq.s32.totalorder %s24, 3
    %p309 = por %p307, %p308
    %p311 = scmp.ne.s32.totalorder %s296, %s310
    %p312 = scmp.eq.s32.totalorder %s24, 0
    %p313 = por %p311, %p312
    %s315 = sadd.s32 %s314, 1
    %p318 = scmp.eq.s32.totalorder %s18, 3
    %p319 = scmp.ne.s32.totalorder %s314, %s316
    %p320 = scmp.eq.s32.totalorder %s18, 0
    %p321 = por %p319, %p320
    %p322 = scmp.ne.s32.totalorder %s314, %s316
    %p323 = scmp.eq.s32.totalorder %s23, 3
    %p324 = por %p322, %p323
    %p325 = scmp.ne.s32.totalorder %s316, %s317
    %p326 = scmp.eq.s32.totalorder %s23, 0
    %p327 = por %p325, %p326
    %p328 = scmp.ne.s32.totalorder %s316, %s317
    %p329 = scmp.eq.s32.totalorder %s24, 3
    %p330 = por %p328, %p329
    %p332 = scmp.ne.s32.totalorder %s317, %s331
    %p333 = scmp.eq.s32.totalorder %s24, 0
    %p334 = por %p332, %p333
    %s335 = ssub.s32 %s25, %s37
    %p336 = scmp.eq.s32.totalorder %s335, 0
    %s338 = sadd.s32 %s337, 1
    %s339 = scalar_select %p336, %s337, %s338
    %p342 = pneg %p336
    %p343 = scmp.eq.s32.totalorder %s18, 3
    %p344 = por %p342, %p343
    %p345 = scmp.ne.s32.totalorder %s337, %s340
    %p346 = scmp.eq.s32.totalorder %s18, 0
    %p347 = por %p345, %p346
    %p348 = scmp.ne.s32.totalorder %s337, %s340
    %p349 = scmp.eq.s32.totalorder %s23, 3
    %p350 = por %p348, %p349
    %p351 = scmp.ne.s32.totalorder %s340, %s341
    %p352 = scmp.eq.s32.totalorder %s23, 0
    %p353 = por %p351, %p352
    %p354 = scmp.ne.s32.totalorder %s340, %s341
    %p355 = scmp.eq.s32.totalorder %s24, 3
    %p356 = por %p354, %p355
    %p358 = scmp.ne.s32.totalorder %s341, %s357
    %p359 = scmp.eq.s32.totalorder %s24, 0
    %p360 = por %p358, %p359
    %p361 = scmp.le.s32.totalorder 1, %s18
    %p362 = scmp.lt.s32.totalorder %s18, 5
    %p363 = pnand %p361, %p362
    %p364 = pneg %p363
    // Predicated region
    $region9: #{fewrel_forward.3} parent=5 // pred_check
      _
    $region10: #{fewrel_forward.3} parent=5 // pred_check_branch
      %366 = sbr.rel (%p363) target = $region12
    $region11: #{fewrel_forward.3} parent=5 // pred_region
      %s367 = ssub.s32 %s18, 1
      // Predicated region
      $region13: #{fewrel_forward.3} parent=11 // pred_check
        %p368 = pneg %p155
      $region14: #{fewrel_forward.3} parent=11 // pred_check_branch
        %370 = sbr.rel (%p368) target = $region16
      $region15: #{fewrel_forward.3} parent=11 // pred_region
        _
      $region16: #{fewrel_forward.3} parent=11 // pred_fallthru
        _
      // Predicated region
      $region17: #{fewrel_forward.3} parent=11 // pred_check
        %p371 = pneg %p306
      $region18: #{fewrel_forward.3} parent=11 // pred_check_branch
        %373 = sbr.rel (%p371) target = $region20
      $region19: #{fewrel_forward.3} parent=11 // pred_region
        _
      $region20: #{fewrel_forward.3} parent=11 // pred_fallthru
        _
      // Predicated region
      $region21: #{fewrel_forward.3} parent=11 // pred_check
        %p374 = pneg %p327
      $region22: #{fewrel_forward.3} parent=11 // pred_check_branch
        %376 = sbr.rel (%p374) target = $region24
      $region23: #{fewrel_forward.3} parent=11 // pred_region
        _
      $region24: #{fewrel_forward.3} parent=11 // pred_fallthru
        _
    $region12: #{fewrel_forward.3} parent=5 // pred_fallthru
      _
    %p377 = scmp.lt.s32.totalorder %s18, 4
    // Predicated region
    $region25: #{fewrel_forward.3} parent=5 // pred_check
      %p378 = pneg %p377
    $region26: #{fewrel_forward.3} parent=5 // pred_check_branch
      %380 = sbr.rel (%p378) target = $region28
    $region27: #{fewrel_forward.3} parent=5 // pred_region
      // Predicated region
      $region29: #{fewrel_forward.3} parent=27 // pred_check
        %p381 = pneg %p50
      $region30: #{fewrel_forward.3} parent=27 // pred_check_branch
        %383 = sbr.rel (%p381) target = $region32
      $region31: #{fewrel_forward.3} parent=27 // pred_region
        %p384 = scmp.lt.s32.totalorder %s25, 1
        %s385 = scalar_select %p384, %s25, 1
        %s386 = smul.addr %s385, 16
        %s387 = smul.addr %s386, 8
        %s388 = scalar_lea.vmem %s0, %s387
      $region32: #{fewrel_forward.3} parent=27 // pred_fallthru
        _
      // Predicated region
      $region33: #{fewrel_forward.3} parent=27 // pred_check
        %p389 = pneg %p76
      $region34: #{fewrel_forward.3} parent=27 // pred_check_branch
        %391 = sbr.rel (%p389) target = $region36
      $region35: #{fewrel_forward.3} parent=27 // pred_region
        %p392 = scmp.lt.s32.totalorder %s25, 1
        %s393 = scalar_select %p392, %s25, 1
        %s394 = smul.addr %s393, 16
        %s395 = smul.addr %s394, 8
        %s396 = scalar_lea.vmem %s1, %s395
      $region36: #{fewrel_forward.3} parent=27 // pred_fallthru
        _
      // Predicated region
      $region37: #{fewrel_forward.3} parent=27 // pred_check
        %p397 = pneg %p102
      $region38: #{fewrel_forward.3} parent=27 // pred_check_branch
        %399 = sbr.rel (%p397) target = $region40
      $region39: #{fewrel_forward.3} parent=27 // pred_region
        %p400 = scmp.lt.s32.totalorder %s25, 1
        %s401 = scalar_select %p400, %s25, 1
        %s402 = smul.addr %s401, 2
        %s403 = scalar_lea.vmem %s2, %s402
      $region40: #{fewrel_forward.3} parent=27 // pred_fallthru
        _
      // Predicated region
      $region41: #{fewrel_forward.3} parent=27 // pred_check
        %p404 = pneg %p128
      $region42: #{fewrel_forward.3} parent=27 // pred_check_branch
        %406 = sbr.rel (%p404) target = $region44
      $region43: #{fewrel_forward.3} parent=27 // pred_region
        %p407 = scmp.lt.s32.totalorder %s25, 1
        %s408 = scalar_select %p407, %s25, 1
        %s409 = scalar_lea.vmem %s3, %s408
      $region44: #{fewrel_forward.3} parent=27 // pred_fallthru
        _
      // Predicated region
      $region45: #{fewrel_forward.3} parent=27 // pred_check
        %p410 = pneg %p175
      $region46: #{fewrel_forward.3} parent=27 // pred_check_branch
        %412 = sbr.rel (%p410) target = $region48
      $region47: #{fewrel_forward.3} parent=27 // pred_region
        %p413 = scmp.lt.s32.totalorder %s26, 1
        %s414 = scalar_select %p413, %s26, 1
        %s415 = smul.addr %s414, 48
        %s416 = smul.addr %s415, 4
        %s417 = scalar_lea.vmem %s5, %s416
      $region48: #{fewrel_forward.3} parent=27 // pred_fallthru
        _
      // Predicated region
      $region49: #{fewrel_forward.3} parent=27 // pred_check
        %p418 = pneg %p201
      $region50: #{fewrel_forward.3} parent=27 // pred_check_branch
        %420 = sbr.rel (%p418) target = $region52
      $region51: #{fewrel_forward.3} parent=27 // pred_region
        %p421 = scmp.lt.s32.totalorder %s26, 1
        %s422 = scalar_select %p421, %s26, 1
        %s423 = smul.addr %s422, 16
        %s424 = smul.addr %s423, 4
        %s425 = scalar_lea.vmem %s6, %s424
      $region52: #{fewrel_forward.3} parent=27 // pred_fallthru
        _
      // Predicated region
      $region53: #{fewrel_forward.3} parent=27 // pred_check
        %p426 = pneg %p227
      $region54: #{fewrel_forward.3} parent=27 // pred_check_branch
        %428 = sbr.rel (%p426) target = $region56
      $region55: #{fewrel_forward.3} parent=27 // pred_region
        %p429 = scmp.lt.s32.totalorder %s26, 1
        %s430 = scalar_select %p429, %s26, 1
        %s431 = smul.addr %s430, 3
        %s432 = smul.addr %s431, 8
        %s433 = scalar_lea.vmem %s7, %s432
      $region56: #{fewrel_forward.3} parent=27 // pred_fallthru
        _
      // Predicated region
      $region57: #{fewrel_forward.3} parent=27 // pred_check
        %p434 = pneg %p253
      $region58: #{fewrel_forward.3} parent=27 // pred_check_branch
        %436 = sbr.rel (%p434) target = $region60
      $region59: #{fewrel_forward.3} parent=27 // pred_region
        %p437 = scmp.lt.s32.totalorder %s26, 1
        %s438 = scalar_select %p437, %s26, 1
        %s439 = smul.addr %s438, 32
        %s440 = smul.addr %s439, 4
        %s441 = scalar_lea.vmem %s8, %s440
      $region60: #{fewrel_forward.3} parent=27 // pred_fallthru
        _
      // Predicated region
      $region61: #{fewrel_forward.3} parent=27 // pred_check
        %p442 = pneg %p279
      $region62: #{fewrel_forward.3} parent=27 // pred_check_branch
        %444 = sbr.rel (%p442) target = $region64
      $region63: #{fewrel_forward.3} parent=27 // pred_region
        %p445 = scmp.lt.s32.totalorder %s26, 1
        %s446 = scalar_select %p445, %s26, 1
        %s447 = smul.addr %s446, 32
        %s448 = smul.addr %s447, 4
        %s449 = scalar_lea.vmem %s9, %s448
      $region64: #{fewrel_forward.3} parent=27 // pred_fallthru
        _
    $region28: #{fewrel_forward.3} parent=5 // pred_fallthru
      _
    %p450 = scmp.le.s32.totalorder 1, %s18
    %p451 = scmp.lt.s32.totalorder %s18, 5
    %p452 = pnand %p450, %p451
    %p453 = pneg %p452
    // Predicated region
    $region65: #{fewrel_forward.3} parent=5 // pred_check
      _
    $region66: #{fewrel_forward.3} parent=5 // pred_check_branch
      %455 = sbr.rel (%p452) target = $region68
    $region67: #{fewrel_forward.3} parent=5 // pred_region
      %s456 = ssub.s32 %s18, 1
      %p457 = scmp.lt.s32.totalorder %s27, 1
      %s458 = scalar_select %p457, %s27, 1
      %s459 = smul.addr %s458, 16
      %s460 = smul.addr %s459, 8
      %s461 = scalar_lea.vmem %s0, %s460
      %p462 = pneg %p56
      %p463 = pneg %p53
      %p464 = scmp.lt.s32.totalorder %s27, 1
      %s465 = scalar_select %p464, %s27, 1
      %s466 = smul.addr %s465, 16
      %s467 = smul.addr %s466, 8
      %s468 = scalar_lea.vmem %s1, %s467
      %p469 = pneg %p82
      %p470 = pneg %p79
      %p471 = scmp.lt.s32.totalorder %s27, 1
      %s472 = scalar_select %p471, %s27, 1
      %s473 = smul.addr %s472, 2
      %s474 = scalar_lea.vmem %s2, %s473
      %p475 = pneg %p108
      %p476 = pneg %p105
      %p477 = scmp.lt.s32.totalorder %s27, 1
      %s478 = scalar_select %p477, %s27, 1
      %s479 = scalar_lea.vmem %s3, %s478
      %p480 = pneg %p134
      %p481 = pneg %p131
      %p482 = pneg %p155
      %p483 = pneg %p152
      %p484 = scmp.lt.s32.totalorder %s28, 1
      %s485 = scalar_select %p484, %s28, 1
      %s486 = smul.addr %s485, 48
      %s487 = smul.addr %s486, 4
      %s488 = scalar_lea.vmem %s5, %s487
      %p489 = pneg %p181
      %p490 = pneg %p178
      %p491 = scmp.lt.s32.totalorder %s28, 1
      %s492 = scalar_select %p491, %s28, 1
      %s493 = smul.addr %s492, 16
      %s494 = smul.addr %s493, 4
      %s495 = scalar_lea.vmem %s6, %s494
      %p496 = pneg %p207
      %p497 = pneg %p204
      %p498 = scmp.lt.s32.totalorder %s28, 1
      %s499 = scalar_select %p498, %s28, 1
      %s500 = smul.addr %s499, 3
      %s501 = smul.addr %s500, 8
      %s502 = scalar_lea.vmem %s7, %s501
      %p503 = pneg %p233
      %p504 = pneg %p230
      %p505 = scmp.lt.s32.totalorder %s28, 1
      %s506 = scalar_select %p505, %s28, 1
      %s507 = smul.addr %s506, 32
      %s508 = smul.addr %s507, 4
      %s509 = scalar_lea.vmem %s8, %s508
      %p510 = pneg %p259
      %p511 = pneg %p256
      %p512 = scmp.lt.s32.totalorder %s28, 1
      %s513 = scalar_select %p512, %s28, 1
      %s514 = smul.addr %s513, 32
      %s515 = smul.addr %s514, 4
      %s516 = scalar_lea.vmem %s9, %s515
      %p517 = pneg %p285
      %p518 = pneg %p282
      %p519 = pneg %p306
      %p520 = pneg %p303
      %p521 = pneg %p327
      %p522 = pneg %p324
      %p523 = pneg %p353
      %p524 = pneg %p350
      %p525 = scmp.lt.s32.totalorder %s27, 1
      %s526 = scalar_select %p525, %s27, 1
      %s527 = scalar_lea.vmem %s12, %s526
      %p528 = scmp.lt.s32.totalorder %s27, 1
      %s529 = scalar_select %p528, %s27, 1
      %s530 = smul.addr %s529, 16
      %s531 = smul.addr %s530, 8
      %s532 = scalar_lea.vmem %s0, %s531
      %p533 = scmp.lt.s32.totalorder %s27, 1
      %s534 = scalar_select %p533, %s27, 1
      %s535 = smul.addr %s534, 16
      %s536 = smul.addr %s535, 8
      %s537 = scalar_lea.vmem %s1, %s536
      %p538 = scmp.lt.s32.totalorder %s27, 1
      %s539 = scalar_select %p538, %s27, 1
      %s540 = smul.addr %s539, 2
      %s541 = scalar_lea.vmem %s2, %s540
      %p542 = scmp.lt.s32.totalorder %s27, 1
      %s543 = scalar_select %p542, %s27, 1
      %s544 = scalar_lea.vmem %s3, %s543
      %p545 = scmp.lt.s32.totalorder %s28, 1
      %s546 = scalar_select %p545, %s28, 1
      %s547 = smul.addr %s546, 48
      %s548 = smul.addr %s547, 4
      %s549 = scalar_lea.vmem %s5, %s548
      %p550 = scmp.lt.s32.totalorder %s28, 1
      %s551 = scalar_select %p550, %s28, 1
      %s552 = smul.addr %s551, 16
      %s553 = smul.addr %s552, 4
      %s554 = scalar_lea.vmem %s6, %s553
      %p555 = scmp.lt.s32.totalorder %s28, 1
      %s556 = scalar_select %p555, %s28, 1
      %s557 = smul.addr %s556, 3
      %s558 = smul.addr %s557, 8
      %s559 = scalar_lea.vmem %s7, %s558
      %p560 = scmp.lt.s32.totalorder %s28, 1
      %s561 = scalar_select %p560, %s28, 1
      %s562 = smul.addr %s561, 32
      %s563 = smul.addr %s562, 4
      %s564 = scalar_lea.vmem %s8, %s563
      %p565 = scmp.lt.s32.totalorder %s28, 1
      %s566 = scalar_select %p565, %s28, 1
      %s567 = smul.addr %s566, 32
      %s568 = smul.addr %s567, 4
      %s569 = scalar_lea.vmem %s9, %s568
      %p570 = scmp.lt.s32.totalorder %s27, 1
      %s571 = scalar_select %p570, %s27, 1
      %s572 = scalar_lea.vmem %s12, %s571
      %v574 = vld [vmem:[%s4] sm:$0xff]
      %p575 = scmp.eq.s32.totalorder %s28, 0
      // Predicated region
      $region69: #{fewrel_forward.3} parent=67 // pred_check
        %p576 = pneg %p575
      $region70: #{fewrel_forward.3} parent=67 // pred_check_branch
        %578 = sbr.rel (%p576) target = $region72
      $region71: #{fewrel_forward.3} parent=67 // pred_region
        %v579 = vld [vmem:[%s532] sm:$0xff]
        %v580 = vld [vmem:[%s532 + $0x8] sm:$0xff]
        %v581 = vld [vmem:[%s532 + $0x10] sm:$0xff]
        %v582 = vld [vmem:[%s532 + $0x18] sm:$0xff]
        %v583 = vld [vmem:[%s532 + $0x20] sm:$0xff]
        %v584 = vld [vmem:[%s532 + $0x28] sm:$0xff]
        %v585 = vld [vmem:[%s532 + $0x30] sm:$0xff]
        %v586 = vld [vmem:[%s532 + $0x38] sm:$0xff]
        %v587 = vld [vmem:[%s532 + $0x40] sm:$0xff]
        %v588 = vld [vmem:[%s532 + $0x48] sm:$0xff]
        %v589 = vld [vmem:[%s532 + $0x50] sm:$0xff]
        %v590 = vld [vmem:[%s532 + $0x58] sm:$0xff]
        %v591 = vld [vmem:[%s532 + $0x60] sm:$0xff]
        %v592 = vld [vmem:[%s532 + $0x68] sm:$0xff]
        %v593 = vld [vmem:[%s532 + $0x70] sm:$0xff]
        %v594 = vld [vmem:[%s532 + $0x78] sm:$0xff]
        %v595 = vld [vmem:[%s541] sm:$0x3]
        %v596 = vlaneseq
        %v597 = vshrl.u32 %v596, 7
        %v598 = vadd.s32 %v597, 8
        %v599 = vadd.s32 %v597, 16
        %v600 = vadd.s32 %v597, 24
        %v601 = vadd.s32 %v597, 32
        %v602 = vadd.s32 %v597, 40
        %v603 = vadd.s32 %v597, 48
        %v604 = vadd.s32 %v597, 56
        %v605 = vadd.s32 %v597, 64
        %v606 = vadd.s32 %v597, 72
        %v607 = vadd.s32 %v597, 80
        %v608 = vadd.s32 %v597, 88
        %v609 = vadd.s32 %v597, 96
        %v610 = vadd.s32 %v597, 104
        %v611 = vadd.s32 %v597, 112
        %v612 = vadd.s32 %v597, 120
        %vm613 = vcmp.eq.s32.totalorder %v597, 1
        %vm614 = vcmp.eq.s32.totalorder %v598, 1
        %vm615 = vcmp.eq.s32.totalorder %v599, 1
        %vm616 = vcmp.eq.s32.totalorder %v600, 1
        %vm617 = vcmp.eq.s32.totalorder %v601, 1
        %vm618 = vcmp.eq.s32.totalorder %v602, 1
        %vm619 = vcmp.eq.s32.totalorder %v603, 1
        %vm620 = vcmp.eq.s32.totalorder %v604, 1
        %vm621 = vcmp.eq.s32.totalorder %v605, 1
        %vm622 = vcmp.eq.s32.totalorder %v606, 1
        %vm623 = vcmp.eq.s32.totalorder %v607, 1
        %vm624 = vcmp.eq.s32.totalorder %v608, 1
        %vm625 = vcmp.eq.s32.totalorder %v609, 1
        %vm626 = vcmp.eq.s32.totalorder %v610, 1
        %vm627 = vcmp.eq.s32.totalorder %v611, 1
        %vm628 = vcmp.eq.s32.totalorder %v612, 1
        %v629 = vsel %vm613, 1, 0
        %v630 = vsel %vm614, 1, 0
        %v631 = vsel %vm615, 1, 0
        %v632 = vsel %vm616, 1, 0
        %v633 = vsel %vm617, 1, 0
        %v634 = vsel %vm618, 1, 0
        %v635 = vsel %vm619, 1, 0
        %v636 = vsel %vm620, 1, 0
        %v637 = vsel %vm621, 1, 0
        %v638 = vsel %vm622, 1, 0
        %v639 = vsel %vm623, 1, 0
        %v640 = vsel %vm624, 1, 0
        %v641 = vsel %vm625, 1, 0
        %v642 = vsel %vm626, 1, 0
        %v643 = vsel %vm627, 1, 0
        %v644 = vsel %vm628, 1, 0
        %vm645 = vcmp.eq.s32.totalorder %v629, 1
        %vm646 = vcmp.eq.s32.totalorder %v630, 1
        %vm647 = vcmp.eq.s32.totalorder %v631, 1
        %vm648 = vcmp.eq.s32.totalorder %v632, 1
        %vm649 = vcmp.eq.s32.totalorder %v633, 1
        %vm650 = vcmp.eq.s32.totalorder %v634, 1
        %vm651 = vcmp.eq.s32.totalorder %v635, 1
        %vm652 = vcmp.eq.s32.totalorder %v636, 1
        %vm653 = vcmp.eq.s32.totalorder %v637, 1
        %vm654 = vcmp.eq.s32.totalorder %v638, 1
        %vm655 = vcmp.eq.s32.totalorder %v639, 1
        %vm656 = vcmp.eq.s32.totalorder %v640, 1
        %vm657 = vcmp.eq.s32.totalorder %v641, 1
        %vm658 = vcmp.eq.s32.totalorder %v642, 1
        %vm659 = vcmp.eq.s32.totalorder %v643, 1
        %vm660 = vcmp.eq.s32.totalorder %v644, 1
        %v661 = vlaneseq
        %v662 = vshrl.u32 %v661, 7
        %v663 = vsub.s32 0, %v662
        %v664 = vrot.slane %v595, %v663
        %v665 = vsel %vm645, %v664, %v579
        %v666 = vsel %vm646, %v664, %v580
        %v667 = vsel %vm647, %v664, %v581
        %v668 = vsel %vm648, %v664, %v582
        %v669 = vsel %vm649, %v664, %v583
        %v670 = vsel %vm650, %v664, %v584
        %v671 = vsel %vm651, %v664, %v585
        %v672 = vsel %vm652, %v664, %v586
        %v673 = vsel %vm653, %v664, %v587
        %v674 = vsel %vm654, %v664, %v588
        %v675 = vsel %vm655, %v664, %v589
        %v676 = vsel %vm656, %v664, %v590
        %v677 = vsel %vm657, %v664, %v591
        %v678 = vsel %vm658, %v664, %v592
        %v679 = vsel %vm659, %v664, %v593
        %v680 = vsel %vm660, %v664, %v594
        %vm681 = vcmp.eq.s32.totalorder %v597, 2
        %vm682 = vcmp.eq.s32.totalorder %v598, 2
        %vm683 = vcmp.eq.s32.totalorder %v599, 2
        %vm684 = vcmp.eq.s32.totalorder %v600, 2
        %vm685 = vcmp.eq.s32.totalorder %v601, 2
        %vm686 = vcmp.eq.s32.totalorder %v602, 2
        %vm687 = vcmp.eq.s32.totalorder %v603, 2
        %vm688 = vcmp.eq.s32.totalorder %v604, 2
        %vm689 = vcmp.eq.s32.totalorder %v605, 2
        %vm690 = vcmp.eq.s32.totalorder %v606, 2
        %vm691 = vcmp.eq.s32.totalorder %v607, 2
        %vm692 = vcmp.eq.s32.totalorder %v608, 2
        %vm693 = vcmp.eq.s32.totalorder %v609, 2
        %vm694 = vcmp.eq.s32.totalorder %v610, 2
        %vm695 = vcmp.eq.s32.totalorder %v611, 2
        %vm696 = vcmp.eq.s32.totalorder %v612, 2
        %v697 = vsel %vm681, 1, 0
        %v698 = vsel %vm682, 1, 0
        %v699 = vsel %vm683, 1, 0
        %v700 = vsel %vm684, 1, 0
        %v701 = vsel %vm685, 1, 0
        %v702 = vsel %vm686, 1, 0
        %v703 = vsel %vm687, 1, 0
        %v704 = vsel %vm688, 1, 0
        %v705 = vsel %vm689, 1, 0
        %v706 = vsel %vm690, 1, 0
        %v707 = vsel %vm691, 1, 0
        %v708 = vsel %vm692, 1, 0
        %v709 = vsel %vm693, 1, 0
        %v710 = vsel %vm694, 1, 0
        %v711 = vsel %vm695, 1, 0
        %v712 = vsel %vm696, 1, 0
        %vm713 = vcmp.eq.s32.totalorder %v697, 1
        %vm714 = vcmp.eq.s32.totalorder %v698, 1
        %vm715 = vcmp.eq.s32.totalorder %v699, 1
        %vm716 = vcmp.eq.s32.totalorder %v700, 1
        %vm717 = vcmp.eq.s32.totalorder %v701, 1
        %vm718 = vcmp.eq.s32.totalorder %v702, 1
        %vm719 = vcmp.eq.s32.totalorder %v703, 1
        %vm720 = vcmp.eq.s32.totalorder %v704, 1
        %vm721 = vcmp.eq.s32.totalorder %v705, 1
        %vm722 = vcmp.eq.s32.totalorder %v706, 1
        %vm723 = vcmp.eq.s32.totalorder %v707, 1
        %vm724 = vcmp.eq.s32.totalorder %v708, 1
        %vm725 = vcmp.eq.s32.totalorder %v709, 1
        %vm726 = vcmp.eq.s32.totalorder %v710, 1
        %vm727 = vcmp.eq.s32.totalorder %v711, 1
        %vm728 = vcmp.eq.s32.totalorder %v712, 1
        %v729 = vlaneseq
        %v730 = vshrl.u32 %v729, 7
        %v731 = vsub.s32 1, %v730
        %v732 = vrot.slane %v595, %v731
        %v733 = vsel %vm713, %v732, %v665
        %v734 = vsel %vm714, %v732, %v666
        %v735 = vsel %vm715, %v732, %v667
        %v736 = vsel %vm716, %v732, %v668
        %v737 = vsel %vm717, %v732, %v669
        %v738 = vsel %vm718, %v732, %v670
        %v739 = vsel %vm719, %v732, %v671
        %v740 = vsel %vm720, %v732, %v672
        %v741 = vsel %vm721, %v732, %v673
        %v742 = vsel %vm722, %v732, %v674
        %v743 = vsel %vm723, %v732, %v675
        %v744 = vsel %vm724, %v732, %v676
        %v745 = vsel %vm725, %v732, %v677
        %v746 = vsel %vm726, %v732, %v678
        %v747 = vsel %vm727, %v732, %v679
        %v748 = vsel %vm728, %v732, %v680
        %v749 = vld [vmem:[%s537] sm:$0xff]
        %v750 = vld [vmem:[%s537 + $0x8] sm:$0xff]
        %v751 = vld [vmem:[%s537 + $0x10] sm:$0xff]
        %v752 = vld [vmem:[%s537 + $0x18] sm:$0xff]
        %v753 = vld [vmem:[%s537 + $0x20] sm:$0xff]
        %v754 = vld [vmem:[%s537 + $0x28] sm:$0xff]
        %v755 = vld [vmem:[%s537 + $0x30] sm:$0xff]
        %v756 = vld [vmem:[%s537 + $0x38] sm:$0xff]
        %v757 = vld [vmem:[%s537 + $0x40] sm:$0xff]
        %v758 = vld [vmem:[%s537 + $0x48] sm:$0xff]
        %v759 = vld [vmem:[%s537 + $0x50] sm:$0xff]
        %v760 = vld [vmem:[%s537 + $0x58] sm:$0xff]
        %v761 = vld [vmem:[%s537 + $0x60] sm:$0xff]
        %v762 = vld [vmem:[%s537 + $0x68] sm:$0xff]
        %v763 = vld [vmem:[%s537 + $0x70] sm:$0xff]
        %v764 = vld [vmem:[%s537 + $0x78] sm:$0xff]
        %v765 = vadd.f32 %v733, %v749
        %v766 = vadd.f32 %v734, %v750
        %v767 = vadd.f32 %v735, %v751
        %v768 = vadd.f32 %v736, %v752
        %v769 = vadd.f32 %v737, %v753
        %v770 = vadd.f32 %v738, %v754
        %v771 = vadd.f32 %v739, %v755
        %v772 = vadd.f32 %v740, %v756
        %v773 = vadd.f32 %v741, %v757
        %v774 = vadd.f32 %v742, %v758
        %v775 = vadd.f32 %v743, %v759
        %v776 = vadd.f32 %v744, %v760
        %v777 = vadd.f32 %v745, %v761
        %v778 = vadd.f32 %v746, %v762
        %v779 = vadd.f32 %v747, %v763
        %v780 = vadd.f32 %v748, %v764
        %781 = vadd.xlane.f32.xlu0 %v765
        %v782 = vpop.xlane.xlu0 %781
        %783 = vadd.xlane.f32.xlu0 %v766
        %v784 = vpop.xlane.xlu0 %783
        %785 = vadd.xlane.f32.xlu0 %v767
        %v786 = vpop.xlane.xlu0 %785
        %787 = vadd.xlane.f32.xlu0 %v768
        %v788 = vpop.xlane.xlu0 %787
        %789 = vadd.xlane.f32.xlu0 %v769
        %v790 = vpop.xlane.xlu0 %789
        %791 = vadd.xlane.f32.xlu0 %v770
        %v792 = vpop.xlane.xlu0 %791
        %793 = vadd.xlane.f32.xlu0 %v771
        %v794 = vpop.xlane.xlu0 %793
        %795 = vadd.xlane.f32.xlu0 %v772
        %v796 = vpop.xlane.xlu0 %795
        %797 = vadd.xlane.f32.xlu0 %v773
        %v798 = vpop.xlane.xlu0 %797
        %799 = vadd.xlane.f32.xlu0 %v774
        %v800 = vpop.xlane.xlu0 %799
        %801 = vadd.xlane.f32.xlu0 %v775
        %v802 = vpop.xlane.xlu0 %801
        %803 = vadd.xlane.f32.xlu0 %v776
        %v804 = vpop.xlane.xlu0 %803
        %805 = vadd.xlane.f32.xlu0 %v777
        %v806 = vpop.xlane.xlu0 %805
        %807 = vadd.xlane.f32.xlu0 %v778
        %v808 = vpop.xlane.xlu0 %807
        %809 = vadd.xlane.f32.xlu0 %v779
        %v810 = vpop.xlane.xlu0 %809
        %811 = vadd.xlane.f32.xlu0 %v780
        %v812 = vpop.xlane.xlu0 %811
        %v813 = vrcp.pop 128.0
        %v814 = vmul.f32 %v782, %v813
        %v815 = vmul.f32 %v784, %v813
        %v816 = vmul.f32 %v786, %v813
        %v817 = vmul.f32 %v788, %v813
        %v818 = vmul.f32 %v790, %v813
        %v819 = vmul.f32 %v792, %v813
        %v820 = vmul.f32 %v794, %v813
        %v821 = vmul.f32 %v796, %v813
        %v822 = vmul.f32 %v798, %v813
        %v823 = vmul.f32 %v800, %v813
        %v824 = vmul.f32 %v802, %v813
        %v825 = vmul.f32 %v804, %v813
        %v826 = vmul.f32 %v806, %v813
        %v827 = vmul.f32 %v808, %v813
        %v828 = vmul.f32 %v810, %v813
        %v829 = vmul.f32 %v812, %v813
        %v830 = vsub.f32 %v765, %v814
        %v831 = vsub.f32 %v766, %v815
        %v832 = vsub.f32 %v767, %v816
        %v833 = vsub.f32 %v768, %v817
        %v834 = vsub.f32 %v769, %v818
        %v835 = vsub.f32 %v770, %v819
        %v836 = vsub.f32 %v771, %v820
        %v837 = vsub.f32 %v772, %v821
        %v838 = vsub.f32 %v773, %v822
        %v839 = vsub.f32 %v774, %v823
        %v840 = vsub.f32 %v775, %v824
        %v841 = vsub.f32 %v776, %v825
        %v842 = vsub.f32 %v777, %v826
        %v843 = vsub.f32 %v778, %v827
        %v844 = vsub.f32 %v779, %v828
        %v845 = vsub.f32 %v780, %v829
        %v846 = vmul.f32 %v830, %v830
        %v847 = vmul.f32 %v831, %v831
        %v848 = vmul.f32 %v832, %v832
        %v849 = vmul.f32 %v833, %v833
        %v850 = vmul.f32 %v834, %v834
        %v851 = vmul.f32 %v835, %v835
        %v852 = vmul.f32 %v836, %v836
        %v853 = vmul.f32 %v837, %v837
        %v854 = vmul.f32 %v838, %v838
        %v855 = vmul.f32 %v839, %v839
        %v856 = vmul.f32 %v840, %v840
        %v857 = vmul.f32 %v841, %v841
        %v858 = vmul.f32 %v842, %v842
        %v859 = vmul.f32 %v843, %v843
        %v860 = vmul.f32 %v844, %v844
        %v861 = vmul.f32 %v845, %v845
        %862 = vadd.xlane.f32.xlu0 %v846
        %v863 = vpop.xlane.xlu0 %862
        %864 = vadd.xlane.f32.xlu0 %v847
        %v865 = vpop.xlane.xlu0 %864
        %866 = vadd.xlane.f32.xlu0 %v848
        %v867 = vpop.xlane.xlu0 %866
        %868 = vadd.xlane.f32.xlu0 %v849
        %v869 = vpop.xlane.xlu0 %868
        %870 = vadd.xlane.f32.xlu0 %v850
        %v871 = vpop.xlane.xlu0 %870
        %872 = vadd.xlane.f32.xlu0 %v851
        %v873 = vpop.xlane.xlu0 %872
        %874 = vadd.xlane.f32.xlu0 %v852
        %v875 = vpop.xlane.xlu0 %874
        %876 = vadd.xlane.f32.xlu0 %v853
        %v877 = vpop.xlane.xlu0 %876
        %878 = vadd.xlane.f32.xlu0 %v854
        %v879 = vpop.xlane.xlu0 %878
        %880 = vadd.xlane.f32.xlu0 %v855
        %v881 = vpop.xlane.xlu0 %880
        %882 = vadd.xlane.f32.xlu0 %v856
        %v883 = vpop.xlane.xlu0 %882
        %884 = vadd.xlane.f32.xlu0 %v857
        %v885 = vpop.xlane.xlu0 %884
        %886 = vadd.xlane.f32.xlu0 %v858
        %v887 = vpop.xlane.xlu0 %886
        %888 = vadd.xlane.f32.xlu0 %v859
        %v889 = vpop.xlane.xlu0 %888
        %890 = vadd.xlane.f32.xlu0 %v860
        %v891 = vpop.xlane.xlu0 %890
        %892 = vadd.xlane.f32.xlu0 %v861
        %v893 = vpop.xlane.xlu0 %892
        %v894 = vmul.f32 %v863, %v813
        %v895 = vmul.f32 %v865, %v813
        %v896 = vmul.f32 %v867, %v813
        %v897 = vmul.f32 %v869, %v813
        %v898 = vmul.f32 %v871, %v813
        %v899 = vmul.f32 %v873, %v813
        %v900 = vmul.f32 %v875, %v813
        %v901 = vmul.f32 %v877, %v813
        %v902 = vmul.f32 %v879, %v813
        %v903 = vmul.f32 %v881, %v813
        %v904 = vmul.f32 %v883, %v813
        %v905 = vmul.f32 %v885, %v813
        %v906 = vmul.f32 %v887, %v813
        %v907 = vmul.f32 %v889, %v813
        %v908 = vmul.f32 %v891, %v813
        %v909 = vmul.f32 %v893, %v813
        %v910 = vadd.f32 %v894, 1e-12
        %v911 = vadd.f32 %v895, 1e-12
        %v912 = vadd.f32 %v896, 1e-12
        %v913 = vadd.f32 %v897, 1e-12
        %v914 = vadd.f32 %v898, 1e-12
        %v915 = vadd.f32 %v899, 1e-12
        %v916 = vadd.f32 %v900, 1e-12
        %v917 = vadd.f32 %v901, 1e-12
        %v918 = vadd.f32 %v902, 1e-12
        %v919 = vadd.f32 %v903, 1e-12
        %v920 = vadd.f32 %v904, 1e-12
        %v921 = vadd.f32 %v905, 1e-12
        %v922 = vadd.f32 %v906, 1e-12
        %v923 = vadd.f32 %v907, 1e-12
        %v924 = vadd.f32 %v908, 1e-12
        %v925 = vadd.f32 %v909, 1e-12
        %v926 = vrsqrt.pop %v910
        %v927 = vrsqrt.pop %v911
        %v928 = vrsqrt.pop %v912
        %v929 = vrsqrt.pop %v913
        %v930 = vrsqrt.pop %v914
        %v931 = vrsqrt.pop %v915
        %v932 = vrsqrt.pop %v916
        %v933 = vrsqrt.pop %v917
        %v934 = vrsqrt.pop %v918
        %v935 = vrsqrt.pop %v919
        %v936 = vrsqrt.pop %v920
        %v937 = vrsqrt.pop %v921
        %v938 = vrsqrt.pop %v922
        %v939 = vrsqrt.pop %v923
        %v940 = vrsqrt.pop %v924
        %v941 = vrsqrt.pop %v925
        %v942 = vmul.f32 %v830, %v926
        %v943 = vmul.f32 %v831, %v927
        %v944 = vmul.f32 %v832, %v928
        %v945 = vmul.f32 %v833, %v929
        %v946 = vmul.f32 %v834, %v930
        %v947 = vmul.f32 %v835, %v931
        %v948 = vmul.f32 %v836, %v932
        %v949 = vmul.f32 %v837, %v933
        %v950 = vmul.f32 %v838, %v934
        %v951 = vmul.f32 %v839, %v935
        %v952 = vmul.f32 %v840, %v936
        %v953 = vmul.f32 %v841, %v937
        %v954 = vmul.f32 %v842, %v938
        %v955 = vmul.f32 %v843, %v939
        %v956 = vmul.f32 %v844, %v940
        %v957 = vmul.f32 %v845, %v941
        %v958 = vlaneseq
        %v959 = vshrl.u32 %v958, 7
        %v960 = vsub.s32 0, %v959
        %v961 = vrot.slane %v574, %v960
        %v962 = vmul.f32 %v942, %v961
        %v963 = vmul.f32 %v943, %v961
        %v964 = vmul.f32 %v944, %v961
        %v965 = vmul.f32 %v945, %v961
        %v966 = vmul.f32 %v946, %v961
        %v967 = vmul.f32 %v947, %v961
        %v968 = vmul.f32 %v948, %v961
        %v969 = vmul.f32 %v949, %v961
        %v970 = vmul.f32 %v950, %v961
        %v971 = vmul.f32 %v951, %v961
        %v972 = vmul.f32 %v952, %v961
        %v973 = vmul.f32 %v953, %v961
        %v974 = vmul.f32 %v954, %v961
        %v975 = vmul.f32 %v955, %v961
        %v976 = vmul.f32 %v956, %v961
        %v977 = vmul.f32 %v957, %v961
        %v978 = vlaneseq
        %v979 = vshrl.u32 %v978, 7
        %v980 = vsub.s32 1, %v979
        %v981 = vrot.slane %v574, %v980
        %v982 = vadd.f32 %v962, %v981
        %v983 = vadd.f32 %v963, %v981
        %v984 = vadd.f32 %v964, %v981
        %v985 = vadd.f32 %v965, %v981
        %v986 = vadd.f32 %v966, %v981
        %v987 = vadd.f32 %v967, %v981
        %v988 = vadd.f32 %v968, %v981
        %v989 = vadd.f32 %v969, %v981
        %v990 = vadd.f32 %v970, %v981
        %v991 = vadd.f32 %v971, %v981
        %v992 = vadd.f32 %v972, %v981
        %v993 = vadd.f32 %v973, %v981
        %v994 = vadd.f32 %v974, %v981
        %v995 = vadd.f32 %v975, %v981
        %v996 = vadd.f32 %v976, %v981
        %v997 = vadd.f32 %v977, %v981
        %998 = vst [vmem:[#allocation2] sm:$0xff] %v982
        %999 = vst [vmem:[#allocation2 + $0x8] sm:$0xff] %v983
        %1000 = vst [vmem:[#allocation2 + $0x10] sm:$0xff] %v984
        %1001 = vst [vmem:[#allocation2 + $0x18] sm:$0xff] %v985
        %1002 = vst [vmem:[#allocation2 + $0x20] sm:$0xff] %v986
        %1003 = vst [vmem:[#allocation2 + $0x28] sm:$0xff] %v987
        %1004 = vst [vmem:[#allocation2 + $0x30] sm:$0xff] %v988
        %1005 = vst [vmem:[#allocation2 + $0x38] sm:$0xff] %v989
        %1006 = vst [vmem:[#allocation2 + $0x40] sm:$0xff] %v990
        %1007 = vst [vmem:[#allocation2 + $0x48] sm:$0xff] %v991
        %1008 = vst [vmem:[#allocation2 + $0x50] sm:$0xff] %v992
        %1009 = vst [vmem:[#allocation2 + $0x58] sm:$0xff] %v993
        %1010 = vst [vmem:[#allocation2 + $0x60] sm:$0xff] %v994
        %1011 = vst [vmem:[#allocation2 + $0x68] sm:$0xff] %v995
        %1012 = vst [vmem:[#allocation2 + $0x70] sm:$0xff] %v996
        %1013 = vst [vmem:[#allocation2 + $0x78] sm:$0xff] %v997
      $region72: #{fewrel_forward.3} parent=67 // pred_fallthru
        _
      %v1014 = vld [vmem:[#allocation2] sm:$0xff]
      %v1015 = vld [vmem:[#allocation2 + $0x8] sm:$0xff]
      %v1016 = vld [vmem:[#allocation2 + $0x10] sm:$0xff]
      %v1017 = vld [vmem:[#allocation2 + $0x18] sm:$0xff]
      %v1018 = vld [vmem:[#allocation2 + $0x20] sm:$0xff]
      %v1019 = vld [vmem:[#allocation2 + $0x28] sm:$0xff]
      %v1020 = vld [vmem:[#allocation2 + $0x30] sm:$0xff]
      %v1021 = vld [vmem:[#allocation2 + $0x38] sm:$0xff]
      %v1022 = vld [vmem:[#allocation2 + $0x40] sm:$0xff]
      %v1023 = vld [vmem:[#allocation2 + $0x48] sm:$0xff]
      %v1024 = vld [vmem:[#allocation2 + $0x50] sm:$0xff]
      %v1025 = vld [vmem:[#allocation2 + $0x58] sm:$0xff]
      %v1026 = vld [vmem:[#allocation2 + $0x60] sm:$0xff]
      %v1027 = vld [vmem:[#allocation2 + $0x68] sm:$0xff]
      %v1028 = vld [vmem:[#allocation2 + $0x70] sm:$0xff]
      %v1029 = vld [vmem:[#allocation2 + $0x78] sm:$0xff]
      %v1030 = vld [vmem:[%s559] sm:$0xff]
      %v1031 = vld [vmem:[%s559 + $0x8] sm:$0xff]
      %v1032 = vld [vmem:[%s559 + $0x10] sm:$0xff]
      %v1033 = vpack.c.bf16 %v1015, %v1014
      %v1034 = vpack.c.bf16 %v1017, %v1016
      %v1035 = vpack.c.bf16 %v1019, %v1018
      %v1036 = vpack.c.bf16 %v1021, %v1020
      %v1037 = vpack.c.bf16 %v1023, %v1022
      %v1038 = vpack.c.bf16 %v1025, %v1024
      %v1039 = vpack.c.bf16 %v1027, %v1026
      %v1040 = vpack.c.bf16 %v1029, %v1028
      %v1041 = vld [vmem:[%s549] sm:$0xff]
      %v1042 = vld [vmem:[%s549 + $0x8] sm:$0xf]
      %v1043 = vld [vmem:[%s549 + $0xc] sm:$0xff]
      %v1044 = vld [vmem:[%s549 + $0x14] sm:$0xf]
      %v1045 = vld [vmem:[%s549 + $0x18] sm:$0xff]
      %v1046 = vld [vmem:[%s549 + $0x20] sm:$0xf]
      %v1047 = vld [vmem:[%s549 + $0x24] sm:$0xff]
      %v1048 = vld [vmem:[%s549 + $0x2c] sm:$0xf]
      %v1049 = vld [vmem:[%s549 + $0x30] sm:$0xff]
      %v1050 = vld [vmem:[%s549 + $0x38] sm:$0xf]
      %v1051 = vld [vmem:[%s549 + $0x3c] sm:$0xff]
      %v1052 = vld [vmem:[%s549 + $0x44] sm:$0xf]
      %v1053 = vld [vmem:[%s549 + $0x48] sm:$0xff]
      %v1054 = vld [vmem:[%s549 + $0x50] sm:$0xf]
      %v1055 = vld [vmem:[%s549 + $0x54] sm:$0xff]
      %v1056 = vld [vmem:[%s549 + $0x5c] sm:$0xf]
      %v1057 = vld [vmem:[%s549 + $0x60] sm:$0xff]
      %v1058 = vld [vmem:[%s549 + $0x68] sm:$0xf]
      %v1059 = vld [vmem:[%s549 + $0x6c] sm:$0xff]
      %v1060 = vld [vmem:[%s549 + $0x74] sm:$0xf]
      %v1061 = vld [vmem:[%s549 + $0x78] sm:$0xff]
      %v1062 = vld [vmem:[%s549 + $0x80] sm:$0xf]
      %v1063 = vld [vmem:[%s549 + $0x84] sm:$0xff]
      %v1064 = vld [vmem:[%s549 + $0x8c] sm:$0xf]
      %v1065 = vld [vmem:[%s549 + $0x90] sm:$0xff]
      %v1066 = vld [vmem:[%s549 + $0x98] sm:$0xf]
      %v1067 = vld [vmem:[%s549 + $0x9c] sm:$0xff]
      %v1068 = vld [vmem:[%s549 + $0xa4] sm:$0xf]
      %v1069 = vld [vmem:[%s549 + $0xa8] sm:$0xff]
      %v1070 = vld [vmem:[%s549 + $0xb0] sm:$0xf]
      %v1071 = vld [vmem:[%s549 + $0xb4] sm:$0xff]
      %v1072 = vld [vmem:[%s549 + $0xbc] sm:$0xf]
      %v1073 = vlaneseq
      %v1074 = vshrl.u32 %v1073, 7
      %v1075 = vsub.s32 0, %v1074
      %v1076 = vrot.slane %v1030, %v1075
      %v1077 = vlaneseq
      %v1078 = vshrl.u32 %v1077, 7
      %v1079 = vsub.s32 0, %v1078
      %v1080 = vrot.slane %v1031, %v1079
      %v1081 = vlaneseq
      %v1082 = vshrl.u32 %v1081, 7
      %v1083 = vsub.s32 0, %v1082
      %v1084 = vrot.slane %v1032, %v1083
      %v1117 = vunpack.c.l.b16 %v1041
      %v1118 = vunpack.c.h.b16 %v1041
      %v1119 = vunpack.c.l.b16 %v1042
      %v1120 = vunpack.c.l.b16 %v1043
      %v1121 = vunpack.c.h.b16 %v1043
      %v1122 = vunpack.c.l.b16 %v1044
      %v1123 = vunpack.c.l.b16 %v1045
      %v1124 = vunpack.c.h.b16 %v1045
      %v1125 = vunpack.c.l.b16 %v1046
      %v1126 = vunpack.c.l.b16 %v1047
      %v1127 = vunpack.c.h.b16 %v1047
      %v1128 = vunpack.c.l.b16 %v1048
      %v1129 = vunpack.c.l.b16 %v1049
      %v1130 = vunpack.c.h.b16 %v1049
      %v1131 = vunpack.c.l.b16 %v1050
      %v1132 = vunpack.c.l.b16 %v1051
      %v1133 = vunpack.c.h.b16 %v1051
      %v1134 = vunpack.c.l.b16 %v1052
      %v1135 = vunpack.c.l.b16 %v1053
      %v1136 = vunpack.c.h.b16 %v1053
      %v1137 = vunpack.c.l.b16 %v1054
      %v1138 = vunpack.c.l.b16 %v1055
      %v1139 = vunpack.c.h.b16 %v1055
      %v1140 = vunpack.c.l.b16 %v1056
      %v1141 = vunpack.c.l.b16 %v1057
      %v1142 = vunpack.c.h.b16 %v1057
      %v1143 = vunpack.c.l.b16 %v1058
      %v1144 = vunpack.c.l.b16 %v1059
      %v1145 = vunpack.c.h.b16 %v1059
      %v1146 = vunpack.c.l.b16 %v1060
      %v1147 = vunpack.c.l.b16 %v1061
      %v1148 = vunpack.c.h.b16 %v1061
      %v1149 = vunpack.c.l.b16 %v1062
      %v1150 = vunpack.c.l.b16 %v1063
      %v1151 = vunpack.c.h.b16 %v1063
      %v1152 = vunpack.c.l.b16 %v1064
      %v1153 = vunpack.c.l.b16 %v1065
      %v1154 = vunpack.c.h.b16 %v1065
      %v1155 = vunpack.c.l.b16 %v1066
      %v1156 = vunpack.c.l.b16 %v1067
      %v1157 = vunpack.c.h.b16 %v1067
      %v1158 = vunpack.c.l.b16 %v1068
      %v1159 = vunpack.c.l.b16 %v1069
      %v1160 = vunpack.c.h.b16 %v1069
      %v1161 = vunpack.c.l.b16 %v1070
      %v1162 = vunpack.c.l.b16 %v1071
      %v1163 = vunpack.c.h.b16 %v1071
      %v1164 = vunpack.c.l.b16 %v1072
      %v1165 = vpack.c.b16 %v1120, %v1117
      %v1166 = vpack.c.b16 %v1121, %v1118
      %v1167 = vpack.c.b16 %v1122, %v1119
      %v1168 = vpack.c.b16 %v1126, %v1123
      %v1169 = vpack.c.b16 %v1127, %v1124
      %v1170 = vpack.c.b16 %v1128, %v1125
      %v1171 = vpack.c.b16 %v1132, %v1129
      %v1172 = vpack.c.b16 %v1133, %v1130
      %v1173 = vpack.c.b16 %v1134, %v1131
      %v1174 = vpack.c.b16 %v1138, %v1135
      %v1175 = vpack.c.b16 %v1139, %v1136
      %v1176 = vpack.c.b16 %v1140, %v1137
      %v1177 = vpack.c.b16 %v1144, %v1141
      %v1178 = vpack.c.b16 %v1145, %v1142
      %v1179 = vpack.c.b16 %v1146, %v1143
      %v1180 = vpack.c.b16 %v1150, %v1147
      %v1181 = vpack.c.b16 %v1151, %v1148
      %v1182 = vpack.c.b16 %v1152, %v1149
      %v1183 = vpack.c.b16 %v1156, %v1153
      %v1184 = vpack.c.b16 %v1157, %v1154
      %v1185 = vpack.c.b16 %v1158, %v1155
      %v1186 = vpack.c.b16 %v1162, %v1159
      %v1187 = vpack.c.b16 %v1163, %v1160
      %v1188 = vpack.c.b16 %v1164, %v1161
      %1213 = vmatprep.subr.bf16.mxu0 %v1166
      %1214 = vmatpush1.bf16.msra.mxu0 %v1165
      %1215 = vmatprep.subr.bf16.mxu0 %v1169
      %1216 = vmatpush1.bf16.msra.mxu0 %v1168
      %1217 = vmatprep.subr.bf16.mxu0 %v1172
      %1218 = vmatpush1.bf16.msra.mxu0 %v1171
      %1219 = vmatprep.subr.bf16.mxu0 %v1175
      %1220 = vmatpush1.bf16.msra.mxu0 %v1174
      %1221 = vmatprep.subr.bf16.mxu0 %v1178
      %1222 = vmatpush1.bf16.msra.mxu0 %v1177
      %1223 = vmatprep.subr.bf16.mxu0 %v1181
      %1224 = vmatpush1.bf16.msra.mxu0 %v1180
      %1225 = vmatprep.subr.bf16.mxu0 %v1184
      %1226 = vmatpush1.bf16.msra.mxu0 %v1183
      %1227 = vmatprep.subr.bf16.mxu0 %v1187
      %1228 = vmatpush1.bf16.msra.mxu0 %v1186
      %1229 = vmatprep.subr.bf16.mxu0 0
      %1230 = vmatpush1.bf16.msra.mxu0 0
      %1231 = vmatprep.subr.bf16.mxu0 0
      %1232 = vmatpush1.bf16.msra.mxu0 0
      %1233 = vmatprep.subr.bf16.mxu0 0
      %1234 = vmatpush1.bf16.msra.mxu0 0
      %1235 = vmatprep.subr.bf16.mxu0 0
      %1236 = vmatpush1.bf16.msra.mxu0 0
      %1237 = vmatprep.subr.bf16.mxu0 0
      %1238 = vmatpush1.bf16.msra.mxu0 0
      %1239 = vmatprep.subr.bf16.mxu0 0
      %1240 = vmatpush1.bf16.msra.mxu0 0
      %1241 = vmatprep.subr.bf16.mxu0 0
      %1242 = vmatpush1.bf16.msra.mxu0 0
      %1243 = vmatprep.subr.bf16.mxu0 0
      %1244 = vmatpush1.bf16.msra.mxu0 0
      %1245 = vmatprep.mubr.bf16.mxu0 0
      %1246 = vmatmul.mubr.bf16.gmra.mrb[0].mxu0 %v1033
      %v1247 = vpop.f32.mrb[0].mxu0
      %v1248 = vadd.f32 %v1076, %v1247
      %v1249 = vpop.f32.mrb[0].mxu0
      %v1250 = vadd.f32 %v1080, %v1249
      %v1251 = vpop.f32.mrb[0].mxu0
      %v1252 = vadd.f32 %v1076, %v1251
      %v1253 = vpop.f32.mrb[0].mxu0
      %v1254 = vadd.f32 %v1080, %v1253
      %1255 = vmatprep.mubr.bf16.mxu0 0
      %1256 = vmatmul.mubr.bf16.gmra.mrb[0].mxu0 %v1034
      %v1257 = vpop.f32.mrb[0].mxu0
      %v1258 = vadd.f32 %v1076, %v1257
      %v1259 = vpop.f32.mrb[0].mxu0
      %v1260 = vadd.f32 %v1080, %v1259
      %v1261 = vpop.f32.mrb[0].mxu0
      %v1262 = vadd.f32 %v1076, %v1261
      %v1263 = vpop.f32.mrb[0].mxu0
      %v1264 = vadd.f32 %v1080, %v1263
      %1265 = vmatprep.mubr.bf16.mxu0 0
      %1266 = vmatmul.mubr.bf16.gmra.mrb[0].mxu0 %v1035
      %v1267 = vpop.f32.mrb[0].mxu0
      %v1268 = vadd.f32 %v1076, %v1267
      %v1269 = vpop.f32.mrb[0].mxu0
      %v1270 = vadd.f32 %v1080, %v1269
      %v1271 = vpop.f32.mrb[0].mxu0
      %v1272 = vadd.f32 %v1076, %v1271
      %v1273 = vpop.f32.mrb[0].mxu0
      %v1274 = vadd.f32 %v1080, %v1273
      %1275 = vmatprep.mubr.bf16.mxu0 0
      %1276 = vmatmul.mubr.bf16.gmra.mrb[0].mxu0 %v1036
      %v1277 = vpop.f32.mrb[0].mxu0
      %v1278 = vadd.f32 %v1076, %v1277
      %v1279 = vpop.f32.mrb[0].mxu0
      %v1280 = vadd.f32 %v1080, %v1279
      %v1281 = vpop.f32.mrb[0].mxu0
      %v1282 = vadd.f32 %v1076, %v1281
      %v1283 = vpop.f32.mrb[0].mxu0
      %v1284 = vadd.f32 %v1080, %v1283
      %1285 = vmatprep.mubr.bf16.mxu0 0
      %1286 = vmatmul.mubr.bf16.gmra.mrb[0].mxu0 %v1037
      %v1287 = vpop.f32.mrb[0].mxu0
      %v1288 = vadd.f32 %v1076, %v1287
      %v1289 = vpop.f32.mrb[0].mxu0
      %v1290 = vadd.f32 %v1080, %v1289
      %v1291 = vpop.f32.mrb[0].mxu0
      %v1292 = vadd.f32 %v1076, %v1291
      %v1293 = vpop.f32.mrb[0].mxu0
      %v1294 = vadd.f32 %v1080, %v1293
      %1295 = vmatprep.mubr.bf16.mxu0 0
      %1296 = vmatmul.mubr.bf16.gmra.mrb[0].mxu0 %v1038
      %v1297 = vpop.f32.mrb[0].mxu0
      %v1298 = vadd.f32 %v1076, %v1297
      %v1299 = vpop.f32.mrb[0].mxu0
      %v1300 = vadd.f32 %v1080, %v1299
      %v1301 = vpop.f32.mrb[0].mxu0
      %v1302 = vadd.f32 %v1076, %v1301
      %v1303 = vpop.f32.mrb[0].mxu0
      %v1304 = vadd.f32 %v1080, %v1303
      %1305 = vmatprep.mubr.bf16.mxu0 0
      %1306 = vmatmul.mubr.bf16.gmra.mrb[0].mxu0 %v1039
      %v1307 = vpop.f32.mrb[0].mxu0
      %v1308 = vadd.f32 %v1076, %v1307
      %v1309 = vpop.f32.mrb[0].mxu0
      %v1310 = vadd.f32 %v1080, %v1309
      %v1311 = vpop.f32.mrb[0].mxu0
      %v1312 = vadd.f32 %v1076, %v1311
      %v1313 = vpop.f32.mrb[0].mxu0
      %v1314 = vadd.f32 %v1080, %v1313
      %1315 = vmatprep.mubr.bf16.mxu0 0
      %1316 = vmatmul.mubr.bf16.gmra.mrb[0].mxu0 %v1040
      %v1317 = vpop.f32.mrb[0].mxu0
      %v1318 = vadd.f32 %v1076, %v1317
      %v1319 = vpop.f32.mrb[0].mxu0
      %v1320 = vadd.f32 %v1080, %v1319
      %v1321 = vpop.f32.mrb[0].mxu0
      %v1322 = vadd.f32 %v1076, %v1321
      %v1323 = vpop.f32.mrb[0].mxu0
      %v1324 = vadd.f32 %v1080, %v1323
      %1325 = vdwg.mxu0
      %1326 = vmatprep.subr.bf16.mxu0 0
      %1327 = vmatpush1.bf16.msra.mxu0 %v1167
      %1328 = vmatprep.subr.bf16.mxu0 0
      %1329 = vmatpush1.bf16.msra.mxu0 %v1170
      %1330 = vmatprep.subr.bf16.mxu0 0
      %1331 = vmatpush1.bf16.msra.mxu0 %v1173
      %1332 = vmatprep.subr.bf16.mxu0 0
      %1333 = vmatpush1.bf16.msra.mxu0 %v1176
      %1334 = vmatprep.subr.bf16.mxu0 0
      %1335 = vmatpush1.bf16.msra.mxu0 %v1179
      %1336 = vmatprep.subr.bf16.mxu0 0
      %1337 = vmatpush1.bf16.msra.mxu0 %v1182
      %1338 = vmatprep.subr.bf16.mxu0 0
      %1339 = vmatpush1.bf16.msra.mxu0 %v1185
      %1340 = vmatprep.subr.bf16.mxu0 0
      %1341 = vmatpush1.bf16.msra.mxu0 %v1188
      %1342 = vmatprep.subr.bf16.mxu0 0
      %1343 = vmatpush1.bf16.msra.mxu0 0
      %1344 = vmatprep.subr.bf16.mxu0 0
      %1345 = vmatpush1.bf16.msra.mxu0 0
      %1346 = vmatprep.subr.bf16.mxu0 0
      %1347 = vmatpush1.bf16.msra.mxu0 0
      %1348 = vmatprep.subr.bf16.mxu0 0
      %1349 = vmatpush1.bf16.msra.mxu0 0
      %1350 = vmatprep.subr.bf16.mxu0 0
      %1351 = vmatpush1.bf16.msra.mxu0 0
      %1352 = vmatprep.subr.bf16.mxu0 0
      %1353 = vmatpush1.bf16.msra.mxu0 0
      %1354 = vmatprep.subr.bf16.mxu0 0
      %1355 = vmatpush1.bf16.msra.mxu0 0
      %1356 = vmatprep.subr.bf16.mxu0 0
      %1357 = vmatpush1.bf16.msra.mxu0 0
      %1358 = vmatprep.mubr.bf16.mxu0 0
      %1359 = vmatmul.mubr.bf16.gmra.mrb[0].mxu0 %v1033
      %v1360 = vpop.f32.mrb[0].mxu0
      %v1361 = vadd.f32 %v1084, %v1360
      %v1362 = vpop.f32.mrb[0].mxu0
      %v1363 = vpop.f32.mrb[0].mxu0
      %v1364 = vadd.f32 %v1084, %v1363
      %v1365 = vpop.f32.mrb[0].mxu0
      %1366 = vmatprep.mubr.bf16.mxu0 0
      %1367 = vmatmul.mubr.bf16.gmra.mrb[0].mxu0 %v1034
      %v1368 = vpop.f32.mrb[0].mxu0
      %v1369 = vadd.f32 %v1084, %v1368
      %v1370 = vpop.f32.mrb[0].mxu0
      %v1371 = vpop.f32.mrb[0].mxu0
      %v1372 = vadd.f32 %v1084, %v1371
      %v1373 = vpop.f32.mrb[0].mxu0
      %1374 = vmatprep.mubr.bf16.mxu0 0
      %1375 = vmatmul.mubr.bf16.gmra.mrb[0].mxu0 %v1035
      %v1376 = vpop.f32.mrb[0].mxu0
      %v1377 = vadd.f32 %v1084, %v1376
      %v1378 = vpop.f32.mrb[0].mxu0
      %v1379 = vpop.f32.mrb[0].mxu0
      %v1380 = vadd.f32 %v1084, %v1379
      %v1381 = vpop.f32.mrb[0].mxu0
      %1382 = vmatprep.mubr.bf16.mxu0 0
      %1383 = vmatmul.mubr.bf16.gmra.mrb[0].mxu0 %v1036
      %v1384 = vpop.f32.mrb[0].mxu0
      %v1385 = vadd.f32 %v1084, %v1384
      %v1386 = vpop.f32.mrb[0].mxu0
      %v1387 = vpop.f32.mrb[0].mxu0
      %v1388 = vadd.f32 %v1084, %v1387
      %v1389 = vpop.f32.mrb[0].mxu0
      %1390 = vmatprep.mubr.bf16.mxu0 0
      %1391 = vmatmul.mubr.bf16.gmra.mrb[0].mxu0 %v1037
      %v1392 = vpop.f32.mrb[0].mxu0
      %v1393 = vadd.f32 %v1084, %v1392
      %v1394 = vpop.f32.mrb[0].mxu0
      %v1395 = vpop.f32.mrb[0].mxu0
      %v1396 = vadd.f32 %v1084, %v1395
      %v1397 = vpop.f32.mrb[0].mxu0
      %1398 = vmatprep.mubr.bf16.mxu0 0
      %1399 = vmatmul.mubr.bf16.gmra.mrb[0].mxu0 %v1038
      %v1400 = vpop.f32.mrb[0].mxu0
      %v1401 = vadd.f32 %v1084, %v1400
      %v1402 = vpop.f32.mrb[0].mxu0
      %v1403 = vpop.f32.mrb[0].mxu0
      %v1404 = vadd.f32 %v1084, %v1403
      %v1405 = vpop.f32.mrb[0].mxu0
      %1406 = vmatprep.mubr.bf16.mxu0 0
      %1407 = vmatmul.mubr.bf16.gmra.mrb[0].mxu0 %v1039
      %v1408 = vpop.f32.mrb[0].mxu0
      %v1409 = vadd.f32 %v1084, %v1408
      %v1410 = vpop.f32.mrb[0].mxu0
      %v1411 = vpop.f32.mrb[0].mxu0
      %v1412 = vadd.f32 %v1084, %v1411
      %v1413 = vpop.f32.mrb[0].mxu0
      %1414 = vmatprep.mubr.bf16.mxu0 0
      %1415 = vmatmul.mubr.bf16.gmra.mrb[0].mxu0 %v1040
      %v1416 = vpop.f32.mrb[0].mxu0
      %v1417 = vadd.f32 %v1084, %v1416
      %v1418 = vpop.f32.mrb[0].mxu0
      %v1419 = vpop.f32.mrb[0].mxu0
      %v1420 = vadd.f32 %v1084, %v1419
      %v1421 = vpop.f32.mrb[0].mxu0
      %1422 = vdwg.mxu0
      %v1423 = vpack.c.bf16 %v1252, %v1248
      %v1424 = vpack.c.bf16 %v1254, %v1250
      %v1425 = vpack.c.bf16 %v1364, %v1361
      %v1426 = vpack.c.bf16 %v1262, %v1258
      %v1427 = vpack.c.bf16 %v1264, %v1260
      %v1428 = vpack.c.bf16 %v1372, %v1369
      %v1429 = vpack.c.bf16 %v1272, %v1268
      %v1430 = vpack.c.bf16 %v1274, %v1270
      %v1431 = vpack.c.bf16 %v1380, %v1377
      %v1432 = vpack.c.bf16 %v1282, %v1278
      %v1433 = vpack.c.bf16 %v1284, %v1280
      %v1434 = vpack.c.bf16 %v1388, %v1385
      %v1435 = vpack.c.bf16 %v1292, %v1288
      %v1436 = vpack.c.bf16 %v1294, %v1290
      %v1437 = vpack.c.bf16 %v1396, %v1393
      %v1438 = vpack.c.bf16 %v1302, %v1298
      %v1439 = vpack.c.bf16 %v1304, %v1300
      %v1440 = vpack.c.bf16 %v1404, %v1401
      %v1441 = vpack.c.bf16 %v1312, %v1308
      %v1442 = vpack.c.bf16 %v1314, %v1310
      %v1443 = vpack.c.bf16 %v1412, %v1409
      %v1444 = vpack.c.bf16 %v1322, %v1318
      %v1445 = vpack.c.bf16 %v1324, %v1320
      %v1446 = vpack.c.bf16 %v1420, %v1417
      %v1447 = vld [vmem:[%s544] sm:$0x1]
      %v1448 = vsub.f32 1.0, %v1447
      %v1449 = vmul.f32 %v1448, -1e+09
      %v1451 = vlaneseq
      %v1452 = vshrl.u32 %v1451, 7
      %v1453 = vsub.s32 0, %v1452
      %v1454 = vrot.slane %v1449, %v1453
      %vm1456 = vcmask 523264
      %v1458 = vsel %vm1456, %v1423, 0
      %v1461 = vsel %vm1456, %v1426, 0
      %v1464 = vsel %vm1456, %v1429, 0
      %v1467 = vsel %vm1456, %v1432, 0
      %v1470 = vsel %vm1456, %v1435, 0
      %v1473 = vsel %vm1456, %v1438, 0
      %v1476 = vsel %vm1456, %v1441, 0
      %v1479 = vsel %vm1456, %v1444, 0
      %v1482 = vsel %vm1456, %v1424, 0
      %v1485 = vsel %vm1456, %v1427, 0
      %v1488 = vsel %vm1456, %v1430, 0
      %v1491 = vsel %vm1456, %v1433, 0
      %v1494 = vsel %vm1456, %v1436, 0
      %v1497 = vsel %vm1456, %v1439, 0
      %v1500 = vsel %vm1456, %v1442, 0
      %v1503 = vsel %vm1456, %v1445, 0
      %1505 = vmatprep.subr.bf16.mxu0 0
      %1506 = vmatpush1.bf16.xpose.msra.mxu0 %v1482
      %1507 = vmatprep.subr.bf16.mxu0 0
      %1508 = vmatpush1.bf16.xpose.msra.mxu0 %v1485
      %1509 = vmatprep.subr.bf16.mxu0 0
      %1510 = vmatpush1.bf16.xpose.msra.mxu0 %v1488
      %1511 = vmatprep.subr.bf16.mxu0 0
      %1512 = vmatpush1.bf16.xpose.msra.mxu0 %v1491
      %1513 = vmatprep.subr.bf16.mxu0 0
      %1514 = vmatpush1.bf16.xpose.msra.mxu0 %v1494
      %1515 = vmatprep.subr.bf16.mxu0 0
      %1516 = vmatpush1.bf16.xpose.msra.mxu0 %v1497
      %1517 = vmatprep.subr.bf16.mxu0 0
      %1518 = vmatpush1.bf16.xpose.msra.mxu0 %v1500
      %1519 = vmatprep.subr.bf16.mxu0 0
      %1520 = vmatpush1.bf16.xpose.msra.mxu0 %v1503
      %1521 = vmatprep.subr.bf16.mxu0 0
      %1522 = vmatpush1.bf16.xpose.msra.mxu0 0
      %1523 = vmatprep.subr.bf16.mxu0 0
      %1524 = vmatpush1.bf16.xpose.msra.mxu0 0
      %1525 = vmatprep.subr.bf16.mxu0 0
      %1526 = vmatpush1.bf16.xpose.msra.mxu0 0
      %1527 = vmatprep.subr.bf16.mxu0 0
      %1528 = vmatpush1.bf16.xpose.msra.mxu0 0
      %1529 = vmatprep.subr.bf16.mxu0 0
      %1530 = vmatpush1.bf16.xpose.msra.mxu0 0
      %1531 = vmatprep.subr.bf16.mxu0 0
      %1532 = vmatpush1.bf16.xpose.msra.mxu0 0
      %1533 = vmatprep.subr.bf16.mxu0 0
      %1534 = vmatpush1.bf16.xpose.msra.mxu0 0
      %1535 = vmatprep.subr.bf16.mxu0 0
      %1536 = vmatpush1.bf16.xpose.msra.mxu0 0
      %1537 = vmatprep.mubr.bf16.mxu0 0
      %1538 = vmatmul.mubr.bf16.gmra.mrb[0].mxu0 %v1458
      %v1539 = vpop.f32.mrb[0].mxu0
      %v1540 = vadd.f32 %v1454, %v1539
      %v1541 = vpop.f32.mrb[0].mxu0
      %v1542 = vpop.f32.mrb[0].mxu0
      %v1543 = vadd.f32 %v1454, %v1542
      %v1544 = vpop.f32.mrb[0].mxu0
      %1545 = vmatprep.mubr.bf16.mxu0 0
      %1546 = vmatmul.mubr.bf16.gmra.mrb[0].mxu0 %v1461
      %v1547 = vpop.f32.mrb[0].mxu0
      %v1548 = vadd.f32 %v1454, %v1547
      %v1549 = vpop.f32.mrb[0].mxu0
      %v1550 = vpop.f32.mrb[0].mxu0
      %v1551 = vadd.f32 %v1454, %v1550
      %v1552 = vpop.f32.mrb[0].mxu0
      %1553 = vmatprep.mubr.bf16.mxu0 0
      %1554 = vmatmul.mubr.bf16.gmra.mrb[0].mxu0 %v1464
      %v1555 = vpop.f32.mrb[0].mxu0
      %v1556 = vadd.f32 %v1454, %v1555
      %v1557 = vpop.f32.mrb[0].mxu0
      %v1558 = vpop.f32.mrb[0].mxu0
      %v1559 = vadd.f32 %v1454, %v1558
      %v1560 = vpop.f32.mrb[0].mxu0
      %1561 = vmatprep.mubr.bf16.mxu0 0
      %1562 = vmatmul.mubr.bf16.gmra.mrb[0].mxu0 %v1467
      %v1563 = vpop.f32.mrb[0].mxu0
      %v1564 = vadd.f32 %v1454, %v1563
      %v1565 = vpop.f32.mrb[0].mxu0
      %v1566 = vpop.f32.mrb[0].mxu0
      %v1567 = vadd.f32 %v1454, %v1566
      %v1568 = vpop.f32.mrb[0].mxu0
      %1569 = vmatprep.mubr.bf16.mxu0 0
      %1570 = vmatmul.mubr.bf16.gmra.mrb[0].mxu0 %v1470
      %v1571 = vpop.f32.mrb[0].mxu0
      %v1572 = vadd.f32 %v1454, %v1571
      %v1573 = vpop.f32.mrb[0].mxu0
      %v1574 = vpop.f32.mrb[0].mxu0
      %v1575 = vadd.f32 %v1454, %v1574
      %v1576 = vpop.f32.mrb[0].mxu0
      %1577 = vmatprep.mubr.bf16.mxu0 0
      %1578 = vmatmul.mubr.bf16.gmra.mrb[0].mxu0 %v1473
      %v1579 = vpop.f32.mrb[0].mxu0
      %v1580 = vadd.f32 %v1454, %v1579
      %v1581 = vpop.f32.mrb[0].mxu0
      %v1582 = vpop.f32.mrb[0].mxu0
      %v1583 = vadd.f32 %v1454, %v1582
      %v1584 = vpop.f32.mrb[0].mxu0
      %1585 = vmatprep.mubr.bf16.mxu0 0
      %1586 = vmatmul.mubr.bf16.gmra.mrb[0].mxu0 %v1476
      %v1587 = vpop.f32.mrb[0].mxu0
      %v1588 = vadd.f32 %v1454, %v1587
      %v1589 = vpop.f32.mrb[0].mxu0
      %v1590 = vpop.f32.mrb[0].mxu0
      %v1591 = vadd.f32 %v1454, %v1590
      %v1592 = vpop.f32.mrb[0].mxu0
      %1593 = vmatprep.mubr.bf16.mxu0 0
      %1594 = vmatmul.mubr.bf16.gmra.mrb[0].mxu0 %v1479
      %v1595 = vpop.f32.mrb[0].mxu0
      %v1596 = vadd.f32 %v1454, %v1595
      %v1597 = vpop.f32.mrb[0].mxu0
      %v1598 = vpop.f32.mrb[0].mxu0
      %v1599 = vadd.f32 %v1454, %v1598
      %v1600 = vpop.f32.mrb[0].mxu0
      %1601 = vdwg.mxu0
      %1602 = vmax.xlane.f32.xlu0 %v1540
      %v1603 = vpop.xlane.xlu0 %1602
      %1604 = vmax.xlane.f32.xlu0 %v1543
      %v1605 = vpop.xlane.xlu0 %1604
      %1606 = vmax.xlane.f32.xlu0 %v1548
      %v1607 = vpop.xlane.xlu0 %1606
      %1608 = vmax.xlane.f32.xlu0 %v1551
      %v1609 = vpop.xlane.xlu0 %1608
      %1610 = vmax.xlane.f32.xlu0 %v1556
      %v1611 = vpop.xlane.xlu0 %1610
      %1612 = vmax.xlane.f32.xlu0 %v1559
      %v1613 = vpop.xlane.xlu0 %1612
      %1614 = vmax.xlane.f32.xlu0 %v1564
      %v1615 = vpop.xlane.xlu0 %1614
      %1616 = vmax.xlane.f32.xlu0 %v1567
      %v1617 = vpop.xlane.xlu0 %1616
      %1618 = vmax.xlane.f32.xlu0 %v1572
      %v1619 = vpop.xlane.xlu0 %1618
      %1620 = vmax.xlane.f32.xlu0 %v1575
      %v1621 = vpop.xlane.xlu0 %1620
      %1622 = vmax.xlane.f32.xlu0 %v1580
      %v1623 = vpop.xlane.xlu0 %1622
      %1624 = vmax.xlane.f32.xlu0 %v1583
      %v1625 = vpop.xlane.xlu0 %1624
      %1626 = vmax.xlane.f32.xlu0 %v1588
      %v1627 = vpop.xlane.xlu0 %1626
      %1628 = vmax.xlane.f32.xlu0 %v1591
      %v1629 = vpop.xlane.xlu0 %1628
      %1630 = vmax.xlane.f32.xlu0 %v1596
      %v1631 = vpop.xlane.xlu0 %1630
      %1632 = vmax.xlane.f32.xlu0 %v1599
      %v1633 = vpop.xlane.xlu0 %1632
      %v1634 = vsub.f32 %v1540, %v1603
      %v1635 = vsub.f32 %v1543, %v1605
      %v1636 = vsub.f32 %v1548, %v1607
      %v1637 = vsub.f32 %v1551, %v1609
      %v1638 = vsub.f32 %v1556, %v1611
      %v1639 = vsub.f32 %v1559, %v1613
      %v1640 = vsub.f32 %v1564, %v1615
      %v1641 = vsub.f32 %v1567, %v1617
      %v1642 = vsub.f32 %v1572, %v1619
      %v1643 = vsub.f32 %v1575, %v1621
      %v1644 = vsub.f32 %v1580, %v1623
      %v1645 = vsub.f32 %v1583, %v1625
      %v1646 = vsub.f32 %v1588, %v1627
      %v1647 = vsub.f32 %v1591, %v1629
      %v1648 = vsub.f32 %v1596, %v1631
      %v1649 = vsub.f32 %v1599, %v1633
      %v1650 = vmul.f32 %v1634, 1.442695
      %v1651 = vpow.pop %v1650
      %v1652 = vmul.f32 %v1635, 1.442695
      %v1653 = vpow.pop %v1652
      %v1654 = vmul.f32 %v1636, 1.442695
      %v1655 = vpow.pop %v1654
      %v1656 = vmul.f32 %v1637, 1.442695
      %v1657 = vpow.pop %v1656
      %v1658 = vmul.f32 %v1638, 1.442695
      %v1659 = vpow.pop %v1658
      %v1660 = vmul.f32 %v1639, 1.442695
      %v1661 = vpow.pop %v1660
      %v1662 = vmul.f32 %v1640, 1.442695
      %v1663 = vpow.pop %v1662
      %v1664 = vmul.f32 %v1641, 1.442695
      %v1665 = vpow.pop %v1664
      %v1666 = vmul.f32 %v1642, 1.442695
      %v1667 = vpow.pop %v1666
      %v1668 = vmul.f32 %v1643, 1.442695
      %v1669 = vpow.pop %v1668
      %v1670 = vmul.f32 %v1644, 1.442695
      %v1671 = vpow.pop %v1670
      %v1672 = vmul.f32 %v1645, 1.442695
      %v1673 = vpow.pop %v1672
      %v1674 = vmul.f32 %v1646, 1.442695
      %v1675 = vpow.pop %v1674
      %v1676 = vmul.f32 %v1647, 1.442695
      %v1677 = vpow.pop %v1676
      %v1678 = vmul.f32 %v1648, 1.442695
      %v1679 = vpow.pop %v1678
      %v1680 = vmul.f32 %v1649, 1.442695
      %v1681 = vpow.pop %v1680
      %1682 = vadd.xlane.f32.xlu0 %v1651
      %v1683 = vpop.xlane.xlu0 %1682
      %1684 = vadd.xlane.f32.xlu0 %v1653
      %v1685 = vpop.xlane.xlu0 %1684
      %1686 = vadd.xlane.f32.xlu0 %v1655
      %v1687 = vpop.xlane.xlu0 %1686
      %1688 = vadd.xlane.f32.xlu0 %v1657
      %v1689 = vpop.xlane.xlu0 %1688
      %1690 = vadd.xlane.f32.xlu0 %v1659
      %v1691 = vpop.xlane.xlu0 %1690
      %1692 = vadd.xlane.f32.xlu0 %v1661
      %v1693 = vpop.xlane.xlu0 %1692
      %1694 = vadd.xlane.f32.xlu0 %v1663
      %v1695 = vpop.xlane.xlu0 %1694
      %1696 = vadd.xlane.f32.xlu0 %v1665
      %v1697 = vpop.xlane.xlu0 %1696
      %1698 = vadd.xlane.f32.xlu0 %v1667
      %v1699 = vpop.xlane.xlu0 %1698
      %1700 = vadd.xlane.f32.xlu0 %v1669
      %v1701 = vpop.xlane.xlu0 %1700
      %1702 = vadd.xlane.f32.xlu0 %v1671
      %v1703 = vpop.xlane.xlu0 %1702
      %1704 = vadd.xlane.f32.xlu0 %v1673
      %v1705 = vpop.xlane.xlu0 %1704
      %1706 = vadd.xlane.f32.xlu0 %v1675
      %v1707 = vpop.xlane.xlu0 %1706
      %1708 = vadd.xlane.f32.xlu0 %v1677
      %v1709 = vpop.xlane.xlu0 %1708
      %1710 = vadd.xlane.f32.xlu0 %v1679
      %v1711 = vpop.xlane.xlu0 %1710
      %1712 = vadd.xlane.f32.xlu0 %v1681
      %v1713 = vpop.xlane.xlu0 %1712
      %v1714 = vrcp.pop %v1683
      %v1715 = vrcp.pop %v1685
      %v1716 = vrcp.pop %v1687
      %v1717 = vrcp.pop %v1689
      %v1718 = vrcp.pop %v1691
      %v1719 = vrcp.pop %v1693
      %v1720 = vrcp.pop %v1695
      %v1721 = vrcp.pop %v1697
      %v1722 = vrcp.pop %v1699
      %v1723 = vrcp.pop %v1701
      %v1724 = vrcp.pop %v1703
      %v1725 = vrcp.pop %v1705
      %v1726 = vrcp.pop %v1707
      %v1727 = vrcp.pop %v1709
      %v1728 = vrcp.pop %v1711
      %v1729 = vrcp.pop %v1713
      %v1730 = vmul.f32 %v1651, %v1714
      %v1731 = vmul.f32 %v1653, %v1715
      %v1732 = vmul.f32 %v1655, %v1716
      %v1733 = vmul.f32 %v1657, %v1717
      %v1734 = vmul.f32 %v1659, %v1718
      %v1735 = vmul.f32 %v1661, %v1719
      %v1736 = vmul.f32 %v1663, %v1720
      %v1737 = vmul.f32 %v1665, %v1721
      %v1738 = vmul.f32 %v1667, %v1722
      %v1739 = vmul.f32 %v1669, %v1723
      %v1740 = vmul.f32 %v1671, %v1724
      %v1741 = vmul.f32 %v1673, %v1725
      %v1742 = vmul.f32 %v1675, %v1726
      %v1743 = vmul.f32 %v1677, %v1727
      %v1744 = vmul.f32 %v1679, %v1728
      %v1745 = vmul.f32 %v1681, %v1729
      %v1746 = vpack.c.bf16 %v1731, %v1730
      %v1747 = vpack.c.bf16 %v1733, %v1732
      %v1748 = vpack.c.bf16 %v1735, %v1734
      %v1749 = vpack.c.bf16 %v1737, %v1736
      %v1750 = vpack.c.bf16 %v1739, %v1738
      %v1751 = vpack.c.bf16 %v1741, %v1740
      %v1752 = vpack.c.bf16 %v1743, %v1742
      %v1753 = vpack.c.bf16 %v1745, %v1744
      %1754 = vmatprep.subr.bf16.mxu0 0
      %1755 = vmatpush1.bf16.msra.mxu0 %v1425
      %1756 = vmatprep.subr.bf16.mxu0 0
      %1757 = vmatpush1.bf16.msra.mxu0 %v1428
      %1758 = vmatprep.subr.bf16.mxu0 0
      %1759 = vmatpush1.bf16.msra.mxu0 %v1431
      %1760 = vmatprep.subr.bf16.mxu0 0
      %1761 = vmatpush1.bf16.msra.mxu0 %v1434
      %1762 = vmatprep.subr.bf16.mxu0 0
      %1763 = vmatpush1.bf16.msra.mxu0 %v1437
      %1764 = vmatprep.subr.bf16.mxu0 0
      %1765 = vmatpush1.bf16.msra.mxu0 %v1440
      %1766 = vmatprep.subr.bf16.mxu0 0
      %1767 = vmatpush1.bf16.msra.mxu0 %v1443
      %1768 = vmatprep.subr.bf16.mxu0 0
      %1769 = vmatpush1.bf16.msra.mxu0 %v1446
      %1770 = vmatprep.subr.bf16.mxu0 0
      %1771 = vmatpush1.bf16.msra.mxu0 0
      %1772 = vmatprep.subr.bf16.mxu0 0
      %1773 = vmatpush1.bf16.msra.mxu0 0
      %1774 = vmatprep.subr.bf16.mxu0 0
      %1775 = vmatpush1.bf16.msra.mxu0 0
      %1776 = vmatprep.subr.bf16.mxu0 0
      %1777 = vmatpush1.bf16.msra.mxu0 0
      %1778 = vmatprep.subr.bf16.mxu0 0
      %1779 = vmatpush1.bf16.msra.mxu0 0
      %1780 = vmatprep.subr.bf16.mxu0 0
      %1781 = vmatpush1.bf16.msra.mxu0 0
      %1782 = vmatprep.subr.bf16.mxu0 0
      %1783 = vmatpush1.bf16.msra.mxu0 0
      %1784 = vmatprep.subr.bf16.mxu0 0
      %1785 = vmatpush1.bf16.msra.mxu0 0
      %1786 = vmatprep.mubr.bf16.mxu0 0
      %1787 = vmatmul.mubr.bf16.gmra.mrb[0].mxu0 %v1746
      %v1788 = vpop.f32.mrb[0].mxu0
      %v1789 = vadd.f32 0.0, %v1788
      %v1790 = vpop.f32.mrb[0].mxu0
      %v1791 = vpop.f32.mrb[0].mxu0
      %v1792 = vadd.f32 0.0, %v1791
      %v1793 = vpop.f32.mrb[0].mxu0
      %1794 = vmatprep.mubr.bf16.mxu0 0
      %1795 = vmatmul.mubr.bf16.gmra.mrb[0].mxu0 %v1747
      %v1796 = vpop.f32.mrb[0].mxu0
      %v1797 = vadd.f32 0.0, %v1796
      %v1798 = vpop.f32.mrb[0].mxu0
      %v1799 = vpop.f32.mrb[0].mxu0
      %v1800 = vadd.f32 0.0, %v1799
      %v1801 = vpop.f32.mrb[0].mxu0
      %1802 = vmatprep.mubr.bf16.mxu0 0
      %1803 = vmatmul.mubr.bf16.gmra.mrb[0].mxu0 %v1748
      %v1804 = vpop.f32.mrb[0].mxu0
      %v1805 = vadd.f32 0.0, %v1804
      %v1806 = vpop.f32.mrb[0].mxu0
      %v1807 = vpop.f32.mrb[0].mxu0
      %v1808 = vadd.f32 0.0, %v1807
      %v1809 = vpop.f32.mrb[0].mxu0
      %1810 = vmatprep.mubr.bf16.mxu0 0
      %1811 = vmatmul.mubr.bf16.gmra.mrb[0].mxu0 %v1749
      %v1812 = vpop.f32.mrb[0].mxu0
      %v1813 = vadd.f32 0.0, %v1812
      %v1814 = vpop.f32.mrb[0].mxu0
      %v1815 = vpop.f32.mrb[0].mxu0
      %v1816 = vadd.f32 0.0, %v1815
      %v1817 = vpop.f32.mrb[0].mxu0
      %1818 = vmatprep.mubr.bf16.mxu0 0
      %1819 = vmatmul.mubr.bf16.gmra.mrb[0].mxu0 %v1750
      %v1820 = vpop.f32.mrb[0].mxu0
      %v1821 = vadd.f32 0.0, %v1820
      %v1822 = vpop.f32.mrb[0].mxu0
      %v1823 = vpop.f32.mrb[0].mxu0
      %v1824 = vadd.f32 0.0, %v1823
      %v1825 = vpop.f32.mrb[0].mxu0
      %1826 = vmatprep.mubr.bf16.mxu0 0
      %1827 = vmatmul.mubr.bf16.gmra.mrb[0].mxu0 %v1751
      %v1828 = vpop.f32.mrb[0].mxu0
      %v1829 = vadd.f32 0.0, %v1828
      %v1830 = vpop.f32.mrb[0].mxu0
      %v1831 = vpop.f32.mrb[0].mxu0
      %v1832 = vadd.f32 0.0, %v1831
      %v1833 = vpop.f32.mrb[0].mxu0
      %1834 = vmatprep.mubr.bf16.mxu0 0
      %1835 = vmatmul.mubr.bf16.gmra.mrb[0].mxu0 %v1752
      %v1836 = vpop.f32.mrb[0].mxu0
      %v1837 = vadd.f32 0.0, %v1836
      %v1838 = vpop.f32.mrb[0].mxu0
      %v1839 = vpop.f32.mrb[0].mxu0
      %v1840 = vadd.f32 0.0, %v1839
      %v1841 = vpop.f32.mrb[0].mxu0
      %1842 = vmatprep.mubr.bf16.mxu0 0
      %1843 = vmatmul.mubr.bf16.gmra.mrb[0].mxu0 %v1753
      %v1844 = vpop.f32.mrb[0].mxu0
      %v1845 = vadd.f32 0.0, %v1844
      %v1846 = vpop.f32.mrb[0].mxu0
      %v1847 = vpop.f32.mrb[0].mxu0
      %v1848 = vadd.f32 0.0, %v1847
      %v1849 = vpop.f32.mrb[0].mxu0
      %1850 = vdwg.mxu0
      %1851 = vst.msk [vmem:[#allocation3] sm:$0xff] %vm1456, %v1789
      %1852 = vst.msk [vmem:[#allocation3 + $0x8] sm:$0xff] %vm1456, %v1792
      %1853 = vst.msk [vmem:[#allocation3 + $0x10] sm:$0xff] %vm1456, %v1797
      %1854 = vst.msk [vmem:[#allocation3 + $0x18] sm:$0xff] %vm1456, %v1800
      %1855 = vst.msk [vmem:[#allocation3 + $0x20] sm:$0xff] %vm1456, %v1805
      %1856 = vst.msk [vmem:[#allocation3 + $0x28] sm:$0xff] %vm1456, %v1808
      %1857 = vst.msk [vmem:[#allocation3 + $0x30] sm:$0xff] %vm1456, %v1813
      %1858 = vst.msk [vmem:[#allocation3 + $0x38] sm:$0xff] %vm1456, %v1816
      %1859 = vst.msk [vmem:[#allocation3 + $0x40] sm:$0xff] %vm1456, %v1821
      %1860 = vst.msk [vmem:[#allocation3 + $0x48] sm:$0xff] %vm1456, %v1824
      %1861 = vst.msk [vmem:[#allocation3 + $0x50] sm:$0xff] %vm1456, %v1829
      %1862 = vst.msk [vmem:[#allocation3 + $0x58] sm:$0xff] %vm1456, %v1832
      %1863 = vst.msk [vmem:[#allocation3 + $0x60] sm:$0xff] %vm1456, %v1837
      %1864 = vst.msk [vmem:[#allocation3 + $0x68] sm:$0xff] %vm1456, %v1840
      %1865 = vst.msk [vmem:[#allocation3 + $0x70] sm:$0xff] %vm1456, %v1845
      %1866 = vst.msk [vmem:[#allocation3 + $0x78] sm:$0xff] %vm1456, %v1848
      %1875 = vrot.lane.b32.xlu0 %v1423, 64
      %v1876 = vpop.permute.xlu0 %1875
      %1877 = vrot.lane.b32.xlu0 %v1426, 64
      %v1878 = vpop.permute.xlu0 %1877
      %1879 = vrot.lane.b32.xlu0 %v1429, 64
      %v1880 = vpop.permute.xlu0 %1879
      %1881 = vrot.lane.b32.xlu0 %v1432, 64
      %v1882 = vpop.permute.xlu0 %1881
      %1883 = vrot.lane.b32.xlu0 %v1435, 64
      %v1884 = vpop.permute.xlu0 %1883
      %1885 = vrot.lane.b32.xlu0 %v1438, 64
      %v1886 = vpop.permute.xlu0 %1885
      %1887 = vrot.lane.b32.xlu0 %v1441, 64
      %v1888 = vpop.permute.xlu0 %1887
      %1889 = vrot.lane.b32.xlu0 %v1444, 64
      %v1890 = vpop.permute.xlu0 %1889
      %1899 = vrot.lane.b32.xlu0 %v1424, 64
      %v1900 = vpop.permute.xlu0 %1899
      %1901 = vrot.lane.b32.xlu0 %v1427, 64
      %v1902 = vpop.permute.xlu0 %1901
      %1903 = vrot.lane.b32.xlu0 %v1430, 64
      %v1904 = vpop.permute.xlu0 %1903
      %1905 = vrot.lane.b32.xlu0 %v1433, 64
      %v1906 = vpop.permute.xlu0 %1905
      %1907 = vrot.lane.b32.xlu0 %v1436, 64
      %v1908 = vpop.permute.xlu0 %1907
      %1909 = vrot.lane.b32.xlu0 %v1439, 64
      %v1910 = vpop.permute.xlu0 %1909
      %1911 = vrot.lane.b32.xlu0 %v1442, 64
      %v1912 = vpop.permute.xlu0 %1911
      %1913 = vrot.lane.b32.xlu0 %v1445, 64
      %v1914 = vpop.permute.xlu0 %1913
      %v1916 = vsel %vm1456, %v1876, 0
      %v1919 = vsel %vm1456, %v1878, 0
      %v1922 = vsel %vm1456, %v1880, 0
      %v1925 = vsel %vm1456, %v1882, 0
      %v1928 = vsel %vm1456, %v1884, 0
      %v1931 = vsel %vm1456, %v1886, 0
      %v1934 = vsel %vm1456, %v1888, 0
      %v1937 = vsel %vm1456, %v1890, 0
      %v1940 = vsel %vm1456, %v1900, 0
      %v1943 = vsel %vm1456, %v1902, 0
      %v1946 = vsel %vm1456, %v1904, 0
      %v1949 = vsel %vm1456, %v1906, 0
      %v1952 = vsel %vm1456, %v1908, 0
      %v1955 = vsel %vm1456, %v1910, 0
      %v1958 = vsel %vm1456, %v1912, 0
      %v1961 = vsel %vm1456, %v1914, 0
      %1963 = vmatprep.subr.bf16.mxu0 0
      %1964 = vmatpush1.bf16.xpose.msra.mxu0 %v1940
      %1965 = vmatprep.subr.bf16.mxu0 0
      %1966 = vmatpush1.bf16.xpose.msra.mxu0 %v1943
      %1967 = vmatprep.subr.bf16.mxu0 0
      %1968 = vmatpush1.bf16.xpose.msra.mxu0 %v1946
      %1969 = vmatprep.subr.bf16.mxu0 0
      %1970 = vmatpush1.bf16.xpose.msra.mxu0 %v1949
      %1971 = vmatprep.subr.bf16.mxu0 0
      %1972 = vmatpush1.bf16.xpose.msra.mxu0 %v1952
      %1973 = vmatprep.subr.bf16.mxu0 0
      %1974 = vmatpush1.bf16.xpose.msra.mxu0 %v1955
      %1975 = vmatprep.subr.bf16.mxu0 0
      %1976 = vmatpush1.bf16.xpose.msra.mxu0 %v1958
      %1977 = vmatprep.subr.bf16.mxu0 0
      %1978 = vmatpush1.bf16.xpose.msra.mxu0 %v1961
      %1979 = vmatprep.subr.bf16.mxu0 0
      %1980 = vmatpush1.bf16.xpose.msra.mxu0 0
      %1981 = vmatprep.subr.bf16.mxu0 0
      %1982 = vmatpush1.bf16.xpose.msra.mxu0 0
      %1983 = vmatprep.subr.bf16.mxu0 0
      %1984 = vmatpush1.bf16.xpose.msra.mxu0 0
      %1985 = vmatprep.subr.bf16.mxu0 0
      %1986 = vmatpush1.bf16.xpose.msra.mxu0 0
      %1987 = vmatprep.subr.bf16.mxu0 0
      %1988 = vmatpush1.bf16.xpose.msra.mxu0 0
      %1989 = vmatprep.subr.bf16.mxu0 0
      %1990 = vmatpush1.bf16.xpose.msra.mxu0 0
      %1991 = vmatprep.subr.bf16.mxu0 0
      %1992 = vmatpush1.bf16.xpose.msra.mxu0 0
      %1993 = vmatprep.subr.bf16.mxu0 0
      %1994 = vmatpush1.bf16.xpose.msra.mxu0 0
      %1995 = vmatprep.mubr.bf16.mxu0 0
      %1996 = vmatmul.mubr.bf16.gmra.mrb[0].mxu0 %v1916
      %v1997 = vpop.f32.mrb[0].mxu0
      %v1998 = vadd.f32 %v1454, %v1997
      %v1999 = vpop.f32.mrb[0].mxu0
      %v2000 = vpop.f32.mrb[0].mxu0
      %v2001 = vadd.f32 %v1454, %v2000
      %v2002 = vpop.f32.mrb[0].mxu0
      %2003 = vmatprep.mubr.bf16.mxu0 0
      %2004 = vmatmul.mubr.bf16.gmra.mrb[0].mxu0 %v1919
      %v2005 = vpop.f32.mrb[0].mxu0
      %v2006 = vadd.f32 %v1454, %v2005
      %v2007 = vpop.f32.mrb[0].mxu0
      %v2008 = vpop.f32.mrb[0].mxu0
      %v2009 = vadd.f32 %v1454, %v2008
      %v2010 = vpop.f32.mrb[0].mxu0
      %2011 = vmatprep.mubr.bf16.mxu0 0
      %2012 = vmatmul.mubr.bf16.gmra.mrb[0].mxu0 %v1922
      %v2013 = vpop.f32.mrb[0].mxu0
      %v2014 = vadd.f32 %v1454, %v2013
      %v2015 = vpop.f32.mrb[0].mxu0
      %v2016 = vpop.f32.mrb[0].mxu0
      %v2017 = vadd.f32 %v1454, %v2016
      %v2018 = vpop.f32.mrb[0].mxu0
      %2019 = vmatprep.mubr.bf16.mxu0 0
      %2020 = vmatmul.mubr.bf16.gmra.mrb[0].mxu0 %v1925
      %v2021 = vpop.f32.mrb[0].mxu0
      %v2022 = vadd.f32 %v1454, %v2021
      %v2023 = vpop.f32.mrb[0].mxu0
      %v2024 = vpop.f32.mrb[0].mxu0
      %v2025 = vadd.f32 %v1454, %v2024
      %v2026 = vpop.f32.mrb[0].mxu0
      %2027 = vmatprep.mubr.bf16.mxu0 0
      %2028 = vmatmul.mubr.bf16.gmra.mrb[0].mxu0 %v1928
      %v2029 = vpop.f32.mrb[0].mxu0
      %v2030 = vadd.f32 %v1454, %v2029
      %v2031 = vpop.f32.mrb[0].mxu0
      %v2032 = vpop.f32.mrb[0].mxu0
      %v2033 = vadd.f32 %v1454, %v2032
      %v2034 = vpop.f32.mrb[0].mxu0
      %2035 = vmatprep.mubr.bf16.mxu0 0
      %2036 = vmatmul.mubr.bf16.gmra.mrb[0].mxu0 %v1931
      %v2037 = vpop.f32.mrb[0].mxu0
      %v2038 = vadd.f32 %v1454, %v2037
      %v2039 = vpop.f32.mrb[0].mxu0
      %v2040 = vpop.f32.mrb[0].mxu0
      %v2041 = vadd.f32 %v1454, %v2040
      %v2042 = vpop.f32.mrb[0].mxu0
      %2043 = vmatprep.mubr.bf16.mxu0 0
      %2044 = vmatmul.mubr.bf16.gmra.mrb[0].mxu0 %v1934
      %v2045 = vpop.f32.mrb[0].mxu0
      %v2046 = vadd.f32 %v1454, %v2045
      %v2047 = vpop.f32.mrb[0].mxu0
      %v2048 = vpop.f32.mrb[0].mxu0
      %v2049 = vadd.f32 %v1454, %v2048
      %v2050 = vpop.f32.mrb[0].mxu0
      %2051 = vmatprep.mubr.bf16.mxu0 0
      %2052 = vmatmul.mubr.bf16.gmra.mrb[0].mxu0 %v1937
      %v2053 = vpop.f32.mrb[0].mxu0
      %v2054 = vadd.f32 %v1454, %v2053
      %v2055 = vpop.f32.mrb[0].mxu0
      %v2056 = vpop.f32.mrb[0].mxu0
      %v2057 = vadd.f32 %v1454, %v2056
      %v2058 = vpop.f32.mrb[0].mxu0
      %2059 = vdwg.mxu0
      %2060 = vmax.xlane.f32.xlu0 %v1998
      %v2061 = vpop.xlane.xlu0 %2060
      %2062 = vmax.xlane.f32.xlu0 %v2001
      %v2063 = vpop.xlane.xlu0 %2062
      %2064 = vmax.xlane.f32.xlu0 %v2006
      %v2065 = vpop.xlane.xlu0 %2064
      %2066 = vmax.xlane.f32.xlu0 %v2009
      %v2067 = vpop.xlane.xlu0 %2066
      %2068 = vmax.xlane.f32.xlu0 %v2014
      %v2069 = vpop.xlane.xlu0 %2068
      %2070 = vmax.xlane.f32.xlu0 %v2017
      %v2071 = vpop.xlane.xlu0 %2070
      %2072 = vmax.xlane.f32.xlu0 %v2022
      %v2073 = vpop.xlane.xlu0 %2072
      %2074 = vmax.xlane.f32.xlu0 %v2025
      %v2075 = vpop.xlane.xlu0 %2074
      %2076 = vmax.xlane.f32.xlu0 %v2030
      %v2077 = vpop.xlane.xlu0 %2076
      %2078 = vmax.xlane.f32.xlu0 %v2033
      %v2079 = vpop.xlane.xlu0 %2078
      %2080 = vmax.xlane.f32.xlu0 %v2038
      %v2081 = vpop.xlane.xlu0 %2080
      %2082 = vmax.xlane.f32.xlu0 %v2041
      %v2083 = vpop.xlane.xlu0 %2082
      %2084 = vmax.xlane.f32.xlu0 %v2046
      %v2085 = vpop.xlane.xlu0 %2084
      %2086 = vmax.xlane.f32.xlu0 %v2049
      %v2087 = vpop.xlane.xlu0 %2086
      %2088 = vmax.xlane.f32.xlu0 %v2054
      %v2089 = vpop.xlane.xlu0 %2088
      %2090 = vmax.xlane.f32.xlu0 %v2057
      %v2091 = vpop.xlane.xlu0 %2090
      %v2092 = vsub.f32 %v1998, %v2061
      %v2093 = vsub.f32 %v2001, %v2063
      %v2094 = vsub.f32 %v2006, %v2065
      %v2095 = vsub.f32 %v2009, %v2067
      %v2096 = vsub.f32 %v2014, %v2069
      %v2097 = vsub.f32 %v2017, %v2071
      %v2098 = vsub.f32 %v2022, %v2073
      %v2099 = vsub.f32 %v2025, %v2075
      %v2100 = vsub.f32 %v2030, %v2077
      %v2101 = vsub.f32 %v2033, %v2079
      %v2102 = vsub.f32 %v2038, %v2081
      %v2103 = vsub.f32 %v2041, %v2083
      %v2104 = vsub.f32 %v2046, %v2085
      %v2105 = vsub.f32 %v2049, %v2087
      %v2106 = vsub.f32 %v2054, %v2089
      %v2107 = vsub.f32 %v2057, %v2091
      %v2108 = vmul.f32 %v2092, 1.442695
      %v2109 = vpow.pop %v2108
      %v2110 = vmul.f32 %v2093, 1.442695
      %v2111 = vpow.pop %v2110
      %v2112 = vmul.f32 %v2094, 1.442695
      %v2113 = vpow.pop %v2112
      %v2114 = vmul.f32 %v2095, 1.442695
      %v2115 = vpow.pop %v2114
      %v2116 = vmul.f32 %v2096, 1.442695
      %v2117 = vpow.pop %v2116
      %v2118 = vmul.f32 %v2097, 1.442695
      %v2119 = vpow.pop %v2118
      %v2120 = vmul.f32 %v2098, 1.442695
      %v2121 = vpow.pop %v2120
      %v2122 = vmul.f32 %v2099, 1.442695
      %v2123 = vpow.pop %v2122
      %v2124 = vmul.f32 %v2100, 1.442695
      %v2125 = vpow.pop %v2124
      %v2126 = vmul.f32 %v2101, 1.442695
      %v2127 = vpow.pop %v2126
      %v2128 = vmul.f32 %v2102, 1.442695
      %v2129 = vpow.pop %v2128
      %v2130 = vmul.f32 %v2103, 1.442695
      %v2131 = vpow.pop %v2130
      %v2132 = vmul.f32 %v2104, 1.442695
      %v2133 = vpow.pop %v2132
      %v2134 = vmul.f32 %v2105, 1.442695
      %v2135 = vpow.pop %v2134
      %v2136 = vmul.f32 %v2106, 1.442695
      %v2137 = vpow.pop %v2136
      %v2138 = vmul.f32 %v2107, 1.442695
      %v2139 = vpow.pop %v2138
      %2140 = vadd.xlane.f32.xlu0 %v2109
      %v2141 = vpop.xlane.xlu0 %2140
      %2142 = vadd.xlane.f32.xlu0 %v2111
      %v2143 = vpop.xlane.xlu0 %2142
      %2144 = vadd.xlane.f32.xlu0 %v2113
      %v2145 = vpop.xlane.xlu0 %2144
      %2146 = vadd.xlane.f32.xlu0 %v2115
      %v2147 = vpop.xlane.xlu0 %2146
      %2148 = vadd.xlane.f32.xlu0 %v2117
      %v2149 = vpop.xlane.xlu0 %2148
      %2150 = vadd.xlane.f32.xlu0 %v2119
      %v2151 = vpop.xlane.xlu0 %2150
      %2152 = vadd.xlane.f32.xlu0 %v2121
      %v2153 = vpop.xlane.xlu0 %2152
      %2154 = vadd.xlane.f32.xlu0 %v2123
      %v2155 = vpop.xlane.xlu0 %2154
      %2156 = vadd.xlane.f32.xlu0 %v2125
      %v2157 = vpop.xlane.xlu0 %2156
      %2158 = vadd.xlane.f32.xlu0 %v2127
      %v2159 = vpop.xlane.xlu0 %2158
      %2160 = vadd.xlane.f32.xlu0 %v2129
      %v2161 = vpop.xlane.xlu0 %2160
      %2162 = vadd.xlane.f32.xlu0 %v2131
      %v2163 = vpop.xlane.xlu0 %2162
      %2164 = vadd.xlane.f32.xlu0 %v2133
      %v2165 = vpop.xlane.xlu0 %2164
      %2166 = vadd.xlane.f32.xlu0 %v2135
      %v2167 = vpop.xlane.xlu0 %2166
      %2168 = vadd.xlane.f32.xlu0 %v2137
      %v2169 = vpop.xlane.xlu0 %2168
      %2170 = vadd.xlane.f32.xlu0 %v2139
      %v2171 = vpop.xlane.xlu0 %2170
      %v2172 = vrcp.pop %v2141
      %v2173 = vrcp.pop %v2143
      %v2174 = vrcp.pop %v2145
      %v2175 = vrcp.pop %v2147
      %v2176 = vrcp.pop %v2149
      %v2177 = vrcp.pop %v2151
      %v2178 = vrcp.pop %v2153
      %v2179 = vrcp.pop %v2155
      %v2180 = vrcp.pop %v2157
      %v2181 = vrcp.pop %v2159
      %v2182 = vrcp.pop %v2161
      %v2183 = vrcp.pop %v2163
      %v2184 = vrcp.pop %v2165
      %v2185 = vrcp.pop %v2167
      %v2186 = vrcp.pop %v2169
      %v2187 = vrcp.pop %v2171
      %v2188 = vmul.f32 %v2109, %v2172
      %v2189 = vmul.f32 %v2111, %v2173
      %v2190 = vmul.f32 %v2113, %v2174
      %v2191 = vmul.f32 %v2115, %v2175
      %v2192 = vmul.f32 %v2117, %v2176
      %v2193 = vmul.f32 %v2119, %v2177
      %v2194 = vmul.f32 %v2121, %v2178
      %v2195 = vmul.f32 %v2123, %v2179
      %v2196 = vmul.f32 %v2125, %v2180
      %v2197 = vmul.f32 %v2127, %v2181
      %v2198 = vmul.f32 %v2129, %v2182
      %v2199 = vmul.f32 %v2131, %v2183
      %v2200 = vmul.f32 %v2133, %v2184
      %v2201 = vmul.f32 %v2135, %v2185
      %v2202 = vmul.f32 %v2137, %v2186
      %v2203 = vmul.f32 %v2139, %v2187
      %v2204 = vpack.c.bf16 %v2189, %v2188
      %v2205 = vpack.c.bf16 %v2191, %v2190
      %v2206 = vpack.c.bf16 %v2193, %v2192
      %v2207 = vpack.c.bf16 %v2195, %v2194
      %v2208 = vpack.c.bf16 %v2197, %v2196
      %v2209 = vpack.c.bf16 %v2199, %v2198
      %v2210 = vpack.c.bf16 %v2201, %v2200
      %v2211 = vpack.c.bf16 %v2203, %v2202
      %2220 = vrot.lane.b32.xlu0 %v1425, 64
      %v2221 = vpop.permute.xlu0 %2220
      %2222 = vrot.lane.b32.xlu0 %v1428, 64
      %v2223 = vpop.permute.xlu0 %2222
      %2224 = vrot.lane.b32.xlu0 %v1431, 64
      %v2225 = vpop.permute.xlu0 %2224
      %2226 = vrot.lane.b32.xlu0 %v1434, 64
      %v2227 = vpop.permute.xlu0 %2226
      %2228 = vrot.lane.b32.xlu0 %v1437, 64
      %v2229 = vpop.permute.xlu0 %2228
      %2230 = vrot.lane.b32.xlu0 %v1440, 64
      %v2231 = vpop.permute.xlu0 %2230
      %2232 = vrot.lane.b32.xlu0 %v1443, 64
      %v2233 = vpop.permute.xlu0 %2232
      %2234 = vrot.lane.b32.xlu0 %v1446, 64
      %v2235 = vpop.permute.xlu0 %2234
      %2244 = vmatprep.subr.bf16.mxu0 0
      %2245 = vmatpush1.bf16.msra.mxu0 %v2221
      %2246 = vmatprep.subr.bf16.mxu0 0
      %2247 = vmatpush1.bf16.msra.mxu0 %v2223
      %2248 = vmatprep.subr.bf16.mxu0 0
      %2249 = vmatpush1.bf16.msra.mxu0 %v2225
      %2250 = vmatprep.subr.bf16.mxu0 0
      %2251 = vmatpush1.bf16.msra.mxu0 %v2227
      %2252 = vmatprep.subr.bf16.mxu0 0
      %2253 = vmatpush1.bf16.msra.mxu0 %v2229
      %2254 = vmatprep.subr.bf16.mxu0 0
      %2255 = vmatpush1.bf16.msra.mxu0 %v2231
      %2256 = vmatprep.subr.bf16.mxu0 0
      %2257 = vmatpush1.bf16.msra.mxu0 %v2233
      %2258 = vmatprep.subr.bf16.mxu0 0
      %2259 = vmatpush1.bf16.msra.mxu0 %v2235
      %2260 = vmatprep.subr.bf16.mxu0 0
      %2261 = vmatpush1.bf16.msra.mxu0 0
      %2262 = vmatprep.subr.bf16.mxu0 0
      %2263 = vmatpush1.bf16.msra.mxu0 0
      %2264 = vmatprep.subr.bf16.mxu0 0
      %2265 = vmatpush1.bf16.msra.mxu0 0
      %2266 = vmatprep.subr.bf16.mxu0 0
      %2267 = vmatpush1.bf16.msra.mxu0 0
      %2268 = vmatprep.subr.bf16.mxu0 0
      %2269 = vmatpush1.bf16.msra.mxu0 0
      %2270 = vmatprep.subr.bf16.mxu0 0
      %2271 = vmatpush1.bf16.msra.mxu0 0
      %2272 = vmatprep.subr.bf16.mxu0 0
      %2273 = vmatpush1.bf16.msra.mxu0 0
      %2274 = vmatprep.subr.bf16.mxu0 0
      %2275 = vmatpush1.bf16.msra.mxu0 0
      %2276 = vmatprep.mubr.bf16.mxu0 0
      %2277 = vmatmul.mubr.bf16.gmra.mrb[0].mxu0 %v2204
      %v2278 = vpop.f32.mrb[0].mxu0
      %v2279 = vadd.f32 0.0, %v2278
      %v2280 = vpop.f32.mrb[0].mxu0
      %v2281 = vpop.f32.mrb[0].mxu0
      %v2282 = vadd.f32 0.0, %v2281
      %v2283 = vpop.f32.mrb[0].mxu0
      %2284 = vmatprep.mubr.bf16.mxu0 0
      %2285 = vmatmul.mubr.bf16.gmra.mrb[0].mxu0 %v2205
      %v2286 = vpop.f32.mrb[0].mxu0
      %v2287 = vadd.f32 0.0, %v2286
      %v2288 = vpop.f32.mrb[0].mxu0
      %v2289 = vpop.f32.mrb[0].mxu0
      %v2290 = vadd.f32 0.0, %v2289
      %v2291 = vpop.f32.mrb[0].mxu0
      %2292 = vmatprep.mubr.bf16.mxu0 0
      %2293 = vmatmul.mubr.bf16.gmra.mrb[0].mxu0 %v2206
      %v2294 = vpop.f32.mrb[0].mxu0
      %v2295 = vadd.f32 0.0, %v2294
      %v2296 = vpop.f32.mrb[0].mxu0
      %v2297 = vpop.f32.mrb[0].mxu0
      %v2298 = vadd.f32 0.0, %v2297
      %v2299 = vpop.f32.mrb[0].mxu0
      %2300 = vmatprep.mubr.bf16.mxu0 0
      %2301 = vmatmul.mubr.bf16.gmra.mrb[0].mxu0 %v2207
      %v2302 = vpop.f32.mrb[0].mxu0
      %v2303 = vadd.f32 0.0, %v2302
      %v2304 = vpop.f32.mrb[0].mxu0
      %v2305 = vpop.f32.mrb[0].mxu0
      %v2306 = vadd.f32 0.0, %v2305
      %v2307 = vpop.f32.mrb[0].mxu0
      %2308 = vmatprep.mubr.bf16.mxu0 0
      %2309 = vmatmul.mubr.bf16.gmra.mrb[0].mxu0 %v2208
      %v2310 = vpop.f32.mrb[0].mxu0
      %v2311 = vadd.f32 0.0, %v2310
      %v2312 = vpop.f32.mrb[0].mxu0
      %v2313 = vpop.f32.mrb[0].mxu0
      %v2314 = vadd.f32 0.0, %v2313
      %v2315 = vpop.f32.mrb[0].mxu0
      %2316 = vmatprep.mubr.bf16.mxu0 0
      %2317 = vmatmul.mubr.bf16.gmra.mrb[0].mxu0 %v2209
      %v2318 = vpop.f32.mrb[0].mxu0
      %v2319 = vadd.f32 0.0, %v2318
      %v2320 = vpop.f32.mrb[0].mxu0
      %v2321 = vpop.f32.mrb[0].mxu0
      %v2322 = vadd.f32 0.0, %v2321
      %v2323 = vpop.f32.mrb[0].mxu0
      %2324 = vmatprep.mubr.bf16.mxu0 0
      %2325 = vmatmul.mubr.bf16.gmra.mrb[0].mxu0 %v2210
      %v2326 = vpop.f32.mrb[0].mxu0
      %v2327 = vadd.f32 0.0, %v2326
      %v2328 = vpop.f32.mrb[0].mxu0
      %v2329 = vpop.f32.mrb[0].mxu0
      %v2330 = vadd.f32 0.0, %v2329
      %v2331 = vpop.f32.mrb[0].mxu0
      %2332 = vmatprep.mubr.bf16.mxu0 0
      %2333 = vmatmul.mubr.bf16.gmra.mrb[0].mxu0 %v2211
      %v2334 = vpop.f32.mrb[0].mxu0
      %v2335 = vadd.f32 0.0, %v2334
      %v2336 = vpop.f32.mrb[0].mxu0
      %v2337 = vpop.f32.mrb[0].mxu0
      %v2338 = vadd.f32 0.0, %v2337
      %v2339 = vpop.f32.mrb[0].mxu0
      %2340 = vdwg.mxu0
      %2357 = vrot.lane.b32.xlu0 %v2279, 64
      %v2358 = vpop.permute.xlu0 %2357
      %2359 = vrot.lane.b32.xlu0 %v2282, 64
      %v2360 = vpop.permute.xlu0 %2359
      %2361 = vrot.lane.b32.xlu0 %v2287, 64
      %v2362 = vpop.permute.xlu0 %2361
      %2363 = vrot.lane.b32.xlu0 %v2290, 64
      %v2364 = vpop.permute.xlu0 %2363
      %2365 = vrot.lane.b32.xlu0 %v2295, 64
      %v2366 = vpop.permute.xlu0 %2365
      %2367 = vrot.lane.b32.xlu0 %v2298, 64
      %v2368 = vpop.permute.xlu0 %2367
      %2369 = vrot.lane.b32.xlu0 %v2303, 64
      %v2370 = vpop.permute.xlu0 %2369
      %2371 = vrot.lane.b32.xlu0 %v2306, 64
      %v2372 = vpop.permute.xlu0 %2371
      %2373 = vrot.lane.b32.xlu0 %v2311, 64
      %v2374 = vpop.permute.xlu0 %2373
      %2375 = vrot.lane.b32.xlu0 %v2314, 64
      %v2376 = vpop.permute.xlu0 %2375
      %2377 = vrot.lane.b32.xlu0 %v2319, 64
      %v2378 = vpop.permute.xlu0 %2377
      %2379 = vrot.lane.b32.xlu0 %v2322, 64
      %v2380 = vpop.permute.xlu0 %2379
      %2381 = vrot.lane.b32.xlu0 %v2327, 64
      %v2382 = vpop.permute.xlu0 %2381
      %2383 = vrot.lane.b32.xlu0 %v2330, 64
      %v2384 = vpop.permute.xlu0 %2383
      %2385 = vrot.lane.b32.xlu0 %v2335, 64
      %v2386 = vpop.permute.xlu0 %2385
      %2387 = vrot.lane.b32.xlu0 %v2338, 64
      %v2388 = vpop.permute.xlu0 %2387
      %vm2405 = vcmask 1048064
      %2406 = vst.msk [vmem:[#allocation3] sm:$0xff] %vm2405, %v2358
      %2407 = vst.msk [vmem:[#allocation3 + $0x8] sm:$0xff] %vm2405, %v2360
      %2408 = vst.msk [vmem:[#allocation3 + $0x10] sm:$0xff] %vm2405, %v2362
      %2409 = vst.msk [vmem:[#allocation3 + $0x18] sm:$0xff] %vm2405, %v2364
      %2410 = vst.msk [vmem:[#allocation3 + $0x20] sm:$0xff] %vm2405, %v2366
      %2411 = vst.msk [vmem:[#allocation3 + $0x28] sm:$0xff] %vm2405, %v2368
      %2412 = vst.msk [vmem:[#allocation3 + $0x30] sm:$0xff] %vm2405, %v2370
      %2413 = vst.msk [vmem:[#allocation3 + $0x38] sm:$0xff] %vm2405, %v2372
      %2414 = vst.msk [vmem:[#allocation3 + $0x40] sm:$0xff] %vm2405, %v2374
      %2415 = vst.msk [vmem:[#allocation3 + $0x48] sm:$0xff] %vm2405, %v2376
      %2416 = vst.msk [vmem:[#allocation3 + $0x50] sm:$0xff] %vm2405, %v2378
      %2417 = vst.msk [vmem:[#allocation3 + $0x58] sm:$0xff] %vm2405, %v2380
      %2418 = vst.msk [vmem:[#allocation3 + $0x60] sm:$0xff] %vm2405, %v2382
      %2419 = vst.msk [vmem:[#allocation3 + $0x68] sm:$0xff] %vm2405, %v2384
      %2420 = vst.msk [vmem:[#allocation3 + $0x70] sm:$0xff] %vm2405, %v2386
      %2421 = vst.msk [vmem:[#allocation3 + $0x78] sm:$0xff] %vm2405, %v2388
      %v2422 = vld [vmem:[#allocation3] sm:$0xff]
      %v2423 = vld [vmem:[#allocation3 + $0x8] sm:$0xff]
      %v2424 = vld [vmem:[#allocation3 + $0x10] sm:$0xff]
      %v2425 = vld [vmem:[#allocation3 + $0x18] sm:$0xff]
      %v2426 = vld [vmem:[#allocation3 + $0x20] sm:$0xff]
      %v2427 = vld [vmem:[#allocation3 + $0x28] sm:$0xff]
      %v2428 = vld [vmem:[#allocation3 + $0x30] sm:$0xff]
      %v2429 = vld [vmem:[#allocation3 + $0x38] sm:$0xff]
      %v2430 = vld [vmem:[#allocation3 + $0x40] sm:$0xff]
      %v2431 = vld [vmem:[#allocation3 + $0x48] sm:$0xff]
      %v2432 = vld [vmem:[#allocation3 + $0x50] sm:$0xff]
      %v2433 = vld [vmem:[#allocation3 + $0x58] sm:$0xff]
      %v2434 = vld [vmem:[#allocation3 + $0x60] sm:$0xff]
      %v2435 = vld [vmem:[#allocation3 + $0x68] sm:$0xff]
      %v2436 = vld [vmem:[#allocation3 + $0x70] sm:$0xff]
      %v2437 = vld [vmem:[#allocation3 + $0x78] sm:$0xff]
      %v2438 = vpack.c.bf16 %v2423, %v2422
      %v2439 = vpack.c.bf16 %v2425, %v2424
      %v2440 = vpack.c.bf16 %v2427, %v2426
      %v2441 = vpack.c.bf16 %v2429, %v2428
      %v2442 = vpack.c.bf16 %v2431, %v2430
      %v2443 = vpack.c.bf16 %v2433, %v2432
      %v2444 = vpack.c.bf16 %v2435, %v2434
      %v2445 = vpack.c.bf16 %v2437, %v2436
      %v2446 = vld [vmem:[%s554] sm:$0xf]
      %v2447 = vld [vmem:[%s554 + $0x4] sm:$0xf]
      %v2448 = vld [vmem:[%s554 + $0x8] sm:$0xf]
      %v2449 = vld [vmem:[%s554 + $0xc] sm:$0xf]
      %v2450 = vld [vmem:[%s554 + $0x10] sm:$0xf]
      %v2451 = vld [vmem:[%s554 + $0x14] sm:$0xf]
      %v2452 = vld [vmem:[%s554 + $0x18] sm:$0xf]
      %v2453 = vld [vmem:[%s554 + $0x1c] sm:$0xf]
      %v2454 = vld [vmem:[%s554 + $0x20] sm:$0xf]
      %v2455 = vld [vmem:[%s554 + $0x24] sm:$0xf]
      %v2456 = vld [vmem:[%s554 + $0x28] sm:$0xf]
      %v2457 = vld [vmem:[%s554 + $0x2c] sm:$0xf]
      %v2458 = vld [vmem:[%s554 + $0x30] sm:$0xf]
      %v2459 = vld [vmem:[%s554 + $0x34] sm:$0xf]
      %v2460 = vld [vmem:[%s554 + $0x38] sm:$0xf]
      %v2461 = vld [vmem:[%s554 + $0x3c] sm:$0xf]
      %v2462 = vlaneseq
      %v2463 = vshrl.u32 %v2462, 7
      %v2464 = vsub.s32 1, %v2463
      %v2465 = vrot.slane %v1030, %v2464
      %v2482 = vunpack.c.l.b16 %v2446
      %v2483 = vunpack.c.l.b16 %v2447
      %v2484 = vunpack.c.l.b16 %v2448
      %v2485 = vunpack.c.l.b16 %v2449
      %v2486 = vunpack.c.l.b16 %v2450
      %v2487 = vunpack.c.l.b16 %v2451
      %v2488 = vunpack.c.l.b16 %v2452
      %v2489 = vunpack.c.l.b16 %v2453
      %v2490 = vunpack.c.l.b16 %v2454
      %v2491 = vunpack.c.l.b16 %v2455
      %v2492 = vunpack.c.l.b16 %v2456
      %v2493 = vunpack.c.l.b16 %v2457
      %v2494 = vunpack.c.l.b16 %v2458
      %v2495 = vunpack.c.l.b16 %v2459
      %v2496 = vunpack.c.l.b16 %v2460
      %v2497 = vunpack.c.l.b16 %v2461
      %v2498 = vpack.c.b16 %v2483, %v2482
      %v2499 = vpack.c.b16 %v2485, %v2484
      %v2500 = vpack.c.b16 %v2487, %v2486
      %v2501 = vpack.c.b16 %v2489, %v2488
      %v2502 = vpack.c.b16 %v2491, %v2490
      %v2503 = vpack.c.b16 %v2493, %v2492
      %v2504 = vpack.c.b16 %v2495, %v2494
      %v2505 = vpack.c.b16 %v2497, %v2496
      %2514 = vmatprep.subr.bf16.mxu0 0
      %2515 = vmatpush1.bf16.msra.mxu0 %v2498
      %2516 = vmatprep.subr.bf16.mxu0 0
      %2517 = vmatpush1.bf16.msra.mxu0 %v2499
      %2518 = vmatprep.subr.bf16.mxu0 0
      %2519 = vmatpush1.bf16.msra.mxu0 %v2500
      %2520 = vmatprep.subr.bf16.mxu0 0
      %2521 = vmatpush1.bf16.msra.mxu0 %v2501
      %2522 = vmatprep.subr.bf16.mxu0 0
      %2523 = vmatpush1.bf16.msra.mxu0 %v2502
      %2524 = vmatprep.subr.bf16.mxu0 0
      %2525 = vmatpush1.bf16.msra.mxu0 %v2503
      %2526 = vmatprep.subr.bf16.mxu0 0
      %2527 = vmatpush1.bf16.msra.mxu0 %v2504
      %2528 = vmatprep.subr.bf16.mxu0 0
      %2529 = vmatpush1.bf16.msra.mxu0 %v2505
      %2530 = vmatprep.subr.bf16.mxu0 0
      %2531 = vmatpush1.bf16.msra.mxu0 0
      %2532 = vmatprep.subr.bf16.mxu0 0
      %2533 = vmatpush1.bf16.msra.mxu0 0
      %2534 = vmatprep.subr.bf16.mxu0 0
      %2535 = vmatpush1.bf16.msra.mxu0 0
      %2536 = vmatprep.subr.bf16.mxu0 0
      %2537 = vmatpush1.bf16.msra.mxu0 0
      %2538 = vmatprep.subr.bf16.mxu0 0
      %2539 = vmatpush1.bf16.msra.mxu0 0
      %2540 = vmatprep.subr.bf16.mxu0 0
      %2541 = vmatpush1.bf16.msra.mxu0 0
      %2542 = vmatprep.subr.bf16.mxu0 0
      %2543 = vmatpush1.bf16.msra.mxu0 0
      %2544 = vmatprep.subr.bf16.mxu0 0
      %2545 = vmatpush1.bf16.msra.mxu0 0
      %2546 = vmatprep.mubr.bf16.mxu0 0
      %2547 = vmatmul.mubr.bf16.gmra.mrb[0].mxu0 %v2438
      %v2548 = vpop.f32.mrb[0].mxu0
      %v2549 = vadd.f32 %v2465, %v2548
      %v2550 = vpop.f32.mrb[0].mxu0
      %v2551 = vpop.f32.mrb[0].mxu0
      %v2552 = vadd.f32 %v2465, %v2551
      %v2553 = vpop.f32.mrb[0].mxu0
      %2554 = vmatprep.mubr.bf16.mxu0 0
      %2555 = vmatmul.mubr.bf16.gmra.mrb[0].mxu0 %v2439
      %v2556 = vpop.f32.mrb[0].mxu0
      %v2557 = vadd.f32 %v2465, %v2556
      %v2558 = vpop.f32.mrb[0].mxu0
      %v2559 = vpop.f32.mrb[0].mxu0
      %v2560 = vadd.f32 %v2465, %v2559
      %v2561 = vpop.f32.mrb[0].mxu0
      %2562 = vmatprep.mubr.bf16.mxu0 0
      %2563 = vmatmul.mubr.bf16.gmra.mrb[0].mxu0 %v2440
      %v2564 = vpop.f32.mrb[0].mxu0
      %v2565 = vadd.f32 %v2465, %v2564
      %v2566 = vpop.f32.mrb[0].mxu0
      %v2567 = vpop.f32.mrb[0].mxu0
      %v2568 = vadd.f32 %v2465, %v2567
      %v2569 = vpop.f32.mrb[0].mxu0
      %2570 = vmatprep.mubr.bf16.mxu0 0
      %2571 = vmatmul.mubr.bf16.gmra.mrb[0].mxu0 %v2441
      %v2572 = vpop.f32.mrb[0].mxu0
      %v2573 = vadd.f32 %v2465, %v2572
      %v2574 = vpop.f32.mrb[0].mxu0
      %v2575 = vpop.f32.mrb[0].mxu0
      %v2576 = vadd.f32 %v2465, %v2575
      %v2577 = vpop.f32.mrb[0].mxu0
      %2578 = vmatprep.mubr.bf16.mxu0 0
      %2579 = vmatmul.mubr.bf16.gmra.mrb[0].mxu0 %v2442
      %v2580 = vpop.f32.mrb[0].mxu0
      %v2581 = vadd.f32 %v2465, %v2580
      %v2582 = vpop.f32.mrb[0].mxu0
      %v2583 = vpop.f32.mrb[0].mxu0
      %v2584 = vadd.f32 %v2465, %v2583
      %v2585 = vpop.f32.mrb[0].mxu0
      %2586 = vmatprep.mubr.bf16.mxu0 0
      %2587 = vmatmul.mubr.bf16.gmra.mrb[0].mxu0 %v2443
      %v2588 = vpop.f32.mrb[0].mxu0
      %v2589 = vadd.f32 %v2465, %v2588
      %v2590 = vpop.f32.mrb[0].mxu0
      %v2591 = vpop.f32.mrb[0].mxu0
      %v2592 = vadd.f32 %v2465, %v2591
      %v2593 = vpop.f32.mrb[0].mxu0
      %2594 = vmatprep.mubr.bf16.mxu0 0
      %2595 = vmatmul.mubr.bf16.gmra.mrb[0].mxu0 %v2444
      %v2596 = vpop.f32.mrb[0].mxu0
      %v2597 = vadd.f32 %v2465, %v2596
      %v2598 = vpop.f32.mrb[0].mxu0
      %v2599 = vpop.f32.mrb[0].mxu0
      %v2600 = vadd.f32 %v2465, %v2599
      %v2601 = vpop.f32.mrb[0].mxu0
      %2602 = vmatprep.mubr.bf16.mxu0 0
      %2603 = vmatmul.mubr.bf16.gmra.mrb[0].mxu0 %v2445
      %v2604 = vpop.f32.mrb[0].mxu0
      %v2605 = vadd.f32 %v2465, %v2604
      %v2606 = vpop.f32.mrb[0].mxu0
      %v2607 = vpop.f32.mrb[0].mxu0
      %v2608 = vadd.f32 %v2465, %v2607
      %v2609 = vpop.f32.mrb[0].mxu0
      %2610 = vdwg.mxu0
      %v2611 = vadd.f32 %v2549, %v1014
      %v2612 = vadd.f32 %v2552, %v1015
      %v2613 = vadd.f32 %v2557, %v1016
      %v2614 = vadd.f32 %v2560, %v1017
      %v2615 = vadd.f32 %v2565, %v1018
      %v2616 = vadd.f32 %v2568, %v1019
      %v2617 = vadd.f32 %v2573, %v1020
      %v2618 = vadd.f32 %v2576, %v1021
      %v2619 = vadd.f32 %v2581, %v1022
      %v2620 = vadd.f32 %v2584, %v1023
      %v2621 = vadd.f32 %v2589, %v1024
      %v2622 = vadd.f32 %v2592, %v1025
      %v2623 = vadd.f32 %v2597, %v1026
      %v2624 = vadd.f32 %v2600, %v1027
      %v2625 = vadd.f32 %v2605, %v1028
      %v2626 = vadd.f32 %v2608, %v1029
      %2627 = vadd.xlane.f32.xlu0 %v2611
      %v2628 = vpop.xlane.xlu0 %2627
      %2629 = vadd.xlane.f32.xlu0 %v2612
      %v2630 = vpop.xlane.xlu0 %2629
      %2631 = vadd.xlane.f32.xlu0 %v2613
      %v2632 = vpop.xlane.xlu0 %2631
      %2633 = vadd.xlane.f32.xlu0 %v2614
      %v2634 = vpop.xlane.xlu0 %2633
      %2635 = vadd.xlane.f32.xlu0 %v2615
      %v2636 = vpop.xlane.xlu0 %2635
      %2637 = vadd.xlane.f32.xlu0 %v2616
      %v2638 = vpop.xlane.xlu0 %2637
      %2639 = vadd.xlane.f32.xlu0 %v2617
      %v2640 = vpop.xlane.xlu0 %2639
      %2641 = vadd.xlane.f32.xlu0 %v2618
      %v2642 = vpop.xlane.xlu0 %2641
      %2643 = vadd.xlane.f32.xlu0 %v2619
      %v2644 = vpop.xlane.xlu0 %2643
      %2645 = vadd.xlane.f32.xlu0 %v2620
      %v2646 = vpop.xlane.xlu0 %2645
      %2647 = vadd.xlane.f32.xlu0 %v2621
      %v2648 = vpop.xlane.xlu0 %2647
      %2649 = vadd.xlane.f32.xlu0 %v2622
      %v2650 = vpop.xlane.xlu0 %2649
      %2651 = vadd.xlane.f32.xlu0 %v2623
      %v2652 = vpop.xlane.xlu0 %2651
      %2653 = vadd.xlane.f32.xlu0 %v2624
      %v2654 = vpop.xlane.xlu0 %2653
      %2655 = vadd.xlane.f32.xlu0 %v2625
      %v2656 = vpop.xlane.xlu0 %2655
      %2657 = vadd.xlane.f32.xlu0 %v2626
      %v2658 = vpop.xlane.xlu0 %2657
      %v2659 = vrcp.pop 128.0
      %v2660 = vmul.f32 %v2628, %v2659
      %v2661 = vmul.f32 %v2630, %v2659
      %v2662 = vmul.f32 %v2632, %v2659
      %v2663 = vmul.f32 %v2634, %v2659
      %v2664 = vmul.f32 %v2636, %v2659
      %v2665 = vmul.f32 %v2638, %v2659
      %v2666 = vmul.f32 %v2640, %v2659
      %v2667 = vmul.f32 %v2642, %v2659
      %v2668 = vmul.f32 %v2644, %v2659
      %v2669 = vmul.f32 %v2646, %v2659
      %v2670 = vmul.f32 %v2648, %v2659
      %v2671 = vmul.f32 %v2650, %v2659
      %v2672 = vmul.f32 %v2652, %v2659
      %v2673 = vmul.f32 %v2654, %v2659
      %v2674 = vmul.f32 %v2656, %v2659
      %v2675 = vmul.f32 %v2658, %v2659
      %v2676 = vsub.f32 %v2611, %v2660
      %v2677 = vsub.f32 %v2612, %v2661
      %v2678 = vsub.f32 %v2613, %v2662
      %v2679 = vsub.f32 %v2614, %v2663
      %v2680 = vsub.f32 %v2615, %v2664
      %v2681 = vsub.f32 %v2616, %v2665
      %v2682 = vsub.f32 %v2617, %v2666
      %v2683 = vsub.f32 %v2618, %v2667
      %v2684 = vsub.f32 %v2619, %v2668
      %v2685 = vsub.f32 %v2620, %v2669
      %v2686 = vsub.f32 %v2621, %v2670
      %v2687 = vsub.f32 %v2622, %v2671
      %v2688 = vsub.f32 %v2623, %v2672
      %v2689 = vsub.f32 %v2624, %v2673
      %v2690 = vsub.f32 %v2625, %v2674
      %v2691 = vsub.f32 %v2626, %v2675
      %v2692 = vmul.f32 %v2676, %v2676
      %v2693 = vmul.f32 %v2677, %v2677
      %v2694 = vmul.f32 %v2678, %v2678
      %v2695 = vmul.f32 %v2679, %v2679
      %v2696 = vmul.f32 %v2680, %v2680
      %v2697 = vmul.f32 %v2681, %v2681
      %v2698 = vmul.f32 %v2682, %v2682
      %v2699 = vmul.f32 %v2683, %v2683
      %v2700 = vmul.f32 %v2684, %v2684
      %v2701 = vmul.f32 %v2685, %v2685
      %v2702 = vmul.f32 %v2686, %v2686
      %v2703 = vmul.f32 %v2687, %v2687
      %v2704 = vmul.f32 %v2688, %v2688
      %v2705 = vmul.f32 %v2689, %v2689
      %v2706 = vmul.f32 %v2690, %v2690
      %v2707 = vmul.f32 %v2691, %v2691
      %2708 = vadd.xlane.f32.xlu0 %v2692
      %v2709 = vpop.xlane.xlu0 %2708
      %2710 = vadd.xlane.f32.xlu0 %v2693
      %v2711 = vpop.xlane.xlu0 %2710
      %2712 = vadd.xlane.f32.xlu0 %v2694
      %v2713 = vpop.xlane.xlu0 %2712
      %2714 = vadd.xlane.f32.xlu0 %v2695
      %v2715 = vpop.xlane.xlu0 %2714
      %2716 = vadd.xlane.f32.xlu0 %v2696
      %v2717 = vpop.xlane.xlu0 %2716
      %2718 = vadd.xlane.f32.xlu0 %v2697
      %v2719 = vpop.xlane.xlu0 %2718
      %2720 = vadd.xlane.f32.xlu0 %v2698
      %v2721 = vpop.xlane.xlu0 %2720
      %2722 = vadd.xlane.f32.xlu0 %v2699
      %v2723 = vpop.xlane.xlu0 %2722
      %2724 = vadd.xlane.f32.xlu0 %v2700
      %v2725 = vpop.xlane.xlu0 %2724
      %2726 = vadd.xlane.f32.xlu0 %v2701
      %v2727 = vpop.xlane.xlu0 %2726
      %2728 = vadd.xlane.f32.xlu0 %v2702
      %v2729 = vpop.xlane.xlu0 %2728
      %2730 = vadd.xlane.f32.xlu0 %v2703
      %v2731 = vpop.xlane.xlu0 %2730
      %2732 = vadd.xlane.f32.xlu0 %v2704
      %v2733 = vpop.xlane.xlu0 %2732
      %2734 = vadd.xlane.f32.xlu0 %v2705
      %v2735 = vpop.xlane.xlu0 %2734
      %2736 = vadd.xlane.f32.xlu0 %v2706
      %v2737 = vpop.xlane.xlu0 %2736
      %2738 = vadd.xlane.f32.xlu0 %v2707
      %v2739 = vpop.xlane.xlu0 %2738
      %v2740 = vmul.f32 %v2709, %v2659
      %v2741 = vmul.f32 %v2711, %v2659
      %v2742 = vmul.f32 %v2713, %v2659
      %v2743 = vmul.f32 %v2715, %v2659
      %v2744 = vmul.f32 %v2717, %v2659
      %v2745 = vmul.f32 %v2719, %v2659
      %v2746 = vmul.f32 %v2721, %v2659
      %v2747 = vmul.f32 %v2723, %v2659
      %v2748 = vmul.f32 %v2725, %v2659
      %v2749 = vmul.f32 %v2727, %v2659
      %v2750 = vmul.f32 %v2729, %v2659
      %v2751 = vmul.f32 %v2731, %v2659
      %v2752 = vmul.f32 %v2733, %v2659
      %v2753 = vmul.f32 %v2735, %v2659
      %v2754 = vmul.f32 %v2737, %v2659
      %v2755 = vmul.f32 %v2739, %v2659
      %v2756 = vadd.f32 %v2740, 1e-12
      %v2757 = vadd.f32 %v2741, 1e-12
      %v2758 = vadd.f32 %v2742, 1e-12
      %v2759 = vadd.f32 %v2743, 1e-12
      %v2760 = vadd.f32 %v2744, 1e-12
      %v2761 = vadd.f32 %v2745, 1e-12
      %v2762 = vadd.f32 %v2746, 1e-12
      %v2763 = vadd.f32 %v2747, 1e-12
      %v2764 = vadd.f32 %v2748, 1e-12
      %v2765 = vadd.f32 %v2749, 1e-12
      %v2766 = vadd.f32 %v2750, 1e-12
      %v2767 = vadd.f32 %v2751, 1e-12
      %v2768 = vadd.f32 %v2752, 1e-12
      %v2769 = vadd.f32 %v2753, 1e-12
      %v2770 = vadd.f32 %v2754, 1e-12
      %v2771 = vadd.f32 %v2755, 1e-12
      %v2772 = vrsqrt.pop %v2756
      %v2773 = vrsqrt.pop %v2757
      %v2774 = vrsqrt.pop %v2758
      %v2775 = vrsqrt.pop %v2759
      %v2776 = vrsqrt.pop %v2760
      %v2777 = vrsqrt.pop %v2761
      %v2778 = vrsqrt.pop %v2762
      %v2779 = vrsqrt.pop %v2763
      %v2780 = vrsqrt.pop %v2764
      %v2781 = vrsqrt.pop %v2765
      %v2782 = vrsqrt.pop %v2766
      %v2783 = vrsqrt.pop %v2767
      %v2784 = vrsqrt.pop %v2768
      %v2785 = vrsqrt.pop %v2769
      %v2786 = vrsqrt.pop %v2770
      %v2787 = vrsqrt.pop %v2771
      %v2788 = vmul.f32 %v2676, %v2772
      %v2789 = vmul.f32 %v2677, %v2773
      %v2790 = vmul.f32 %v2678, %v2774
      %v2791 = vmul.f32 %v2679, %v2775
      %v2792 = vmul.f32 %v2680, %v2776
      %v2793 = vmul.f32 %v2681, %v2777
      %v2794 = vmul.f32 %v2682, %v2778
      %v2795 = vmul.f32 %v2683, %v2779
      %v2796 = vmul.f32 %v2684, %v2780
      %v2797 = vmul.f32 %v2685, %v2781
      %v2798 = vmul.f32 %v2686, %v2782
      %v2799 = vmul.f32 %v2687, %v2783
      %v2800 = vmul.f32 %v2688, %v2784
      %v2801 = vmul.f32 %v2689, %v2785
      %v2802 = vmul.f32 %v2690, %v2786
      %v2803 = vmul.f32 %v2691, %v2787
      %v2804 = vlaneseq
      %v2805 = vshrl.u32 %v2804, 7
      %v2806 = vsub.s32 2, %v2805
      %v2807 = vrot.slane %v1030, %v2806
      %v2808 = vmul.f32 %v2788, %v2807
      %v2809 = vmul.f32 %v2789, %v2807
      %v2810 = vmul.f32 %v2790, %v2807
      %v2811 = vmul.f32 %v2791, %v2807
      %v2812 = vmul.f32 %v2792, %v2807
      %v2813 = vmul.f32 %v2793, %v2807
      %v2814 = vmul.f32 %v2794, %v2807
      %v2815 = vmul.f32 %v2795, %v2807
      %v2816 = vmul.f32 %v2796, %v2807
      %v2817 = vmul.f32 %v2797, %v2807
      %v2818 = vmul.f32 %v2798, %v2807
      %v2819 = vmul.f32 %v2799, %v2807
      %v2820 = vmul.f32 %v2800, %v2807
      %v2821 = vmul.f32 %v2801, %v2807
      %v2822 = vmul.f32 %v2802, %v2807
      %v2823 = vmul.f32 %v2803, %v2807
      %v2824 = vlaneseq
      %v2825 = vshrl.u32 %v2824, 7
      %v2826 = vsub.s32 3, %v2825
      %v2827 = vrot.slane %v1030, %v2826
      %v2828 = vadd.f32 %v2808, %v2827
      %v2829 = vadd.f32 %v2809, %v2827
      %v2830 = vadd.f32 %v2810, %v2827
      %v2831 = vadd.f32 %v2811, %v2827
      %v2832 = vadd.f32 %v2812, %v2827
      %v2833 = vadd.f32 %v2813, %v2827
      %v2834 = vadd.f32 %v2814, %v2827
      %v2835 = vadd.f32 %v2815, %v2827
      %v2836 = vadd.f32 %v2816, %v2827
      %v2837 = vadd.f32 %v2817, %v2827
      %v2838 = vadd.f32 %v2818, %v2827
      %v2839 = vadd.f32 %v2819, %v2827
      %v2840 = vadd.f32 %v2820, %v2827
      %v2841 = vadd.f32 %v2821, %v2827
      %v2842 = vadd.f32 %v2822, %v2827
      %v2843 = vadd.f32 %v2823, %v2827
      %v2844 = vpack.c.bf16 %v2829, %v2828
      %v2845 = vpack.c.bf16 %v2831, %v2830
      %v2846 = vpack.c.bf16 %v2833, %v2832
      %v2847 = vpack.c.bf16 %v2835, %v2834
      %v2848 = vpack.c.bf16 %v2837, %v2836
      %v2849 = vpack.c.bf16 %v2839, %v2838
      %v2850 = vpack.c.bf16 %v2841, %v2840
      %v2851 = vpack.c.bf16 %v2843, %v2842
      %v2852 = vld [vmem:[%s564] sm:$0xff]
      %v2853 = vld [vmem:[%s564 + $0x8] sm:$0xff]
      %v2854 = vld [vmem:[%s564 + $0x10] sm:$0xff]
      %v2855 = vld [vmem:[%s564 + $0x18] sm:$0xff]
      %v2856 = vld [vmem:[%s564 + $0x20] sm:$0xff]
      %v2857 = vld [vmem:[%s564 + $0x28] sm:$0xff]
      %v2858 = vld [vmem:[%s564 + $0x30] sm:$0xff]
      %v2859 = vld [vmem:[%s564 + $0x38] sm:$0xff]
      %v2860 = vld [vmem:[%s564 + $0x40] sm:$0xff]
      %v2861 = vld [vmem:[%s564 + $0x48] sm:$0xff]
      %v2862 = vld [vmem:[%s564 + $0x50] sm:$0xff]
      %v2863 = vld [vmem:[%s564 + $0x58] sm:$0xff]
      %v2864 = vld [vmem:[%s564 + $0x60] sm:$0xff]
      %v2865 = vld [vmem:[%s564 + $0x68] sm:$0xff]
      %v2866 = vld [vmem:[%s564 + $0x70] sm:$0xff]
      %v2867 = vld [vmem:[%s564 + $0x78] sm:$0xff]
      %v2868 = vlaneseq
      %v2869 = vshrl.u32 %v2868, 7
      %v2870 = vsub.s32 4, %v2869
      %v2871 = vrot.slane %v1030, %v2870
      %v2872 = vlaneseq
      %v2873 = vshrl.u32 %v2872, 7
      %v2874 = vsub.s32 4, %v2873
      %v2875 = vrot.slane %v1031, %v2874
      %v2892 = vunpack.c.l.b16 %v2852
      %v2893 = vunpack.c.h.b16 %v2852
      %v2894 = vunpack.c.l.b16 %v2853
      %v2895 = vunpack.c.h.b16 %v2853
      %v2896 = vunpack.c.l.b16 %v2854
      %v2897 = vunpack.c.h.b16 %v2854
      %v2898 = vunpack.c.l.b16 %v2855
      %v2899 = vunpack.c.h.b16 %v2855
      %v2900 = vunpack.c.l.b16 %v2856
      %v2901 = vunpack.c.h.b16 %v2856
      %v2902 = vunpack.c.l.b16 %v2857
      %v2903 = vunpack.c.h.b16 %v2857
      %v2904 = vunpack.c.l.b16 %v2858
      %v2905 = vunpack.c.h.b16 %v2858
      %v2906 = vunpack.c.l.b16 %v2859
      %v2907 = vunpack.c.h.b16 %v2859
      %v2908 = vunpack.c.l.b16 %v2860
      %v2909 = vunpack.c.h.b16 %v2860
      %v2910 = vunpack.c.l.b16 %v2861
      %v2911 = vunpack.c.h.b16 %v2861
      %v2912 = vunpack.c.l.b16 %v2862
      %v2913 = vunpack.c.h.b16 %v2862
      %v2914 = vunpack.c.l.b16 %v2863
      %v2915 = vunpack.c.h.b16 %v2863
      %v2916 = vunpack.c.l.b16 %v2864
      %v2917 = vunpack.c.h.b16 %v2864
      %v2918 = vunpack.c.l.b16 %v2865
      %v2919 = vunpack.c.h.b16 %v2865
      %v2920 = vunpack.c.l.b16 %v2866
      %v2921 = vunpack.c.h.b16 %v2866
      %v2922 = vunpack.c.l.b16 %v2867
      %v2923 = vunpack.c.h.b16 %v2867
      %v2924 = vpack.c.b16 %v2894, %v2892
      %v2925 = vpack.c.b16 %v2895, %v2893
      %v2926 = vpack.c.b16 %v2898, %v2896
      %v2927 = vpack.c.b16 %v2899, %v2897
      %v2928 = vpack.c.b16 %v2902, %v2900
      %v2929 = vpack.c.b16 %v2903, %v2901
      %v2930 = vpack.c.b16 %v2906, %v2904
      %v2931 = vpack.c.b16 %v2907, %v2905
      %v2932 = vpack.c.b16 %v2910, %v2908
      %v2933 = vpack.c.b16 %v2911, %v2909
      %v2934 = vpack.c.b16 %v2914, %v2912
      %v2935 = vpack.c.b16 %v2915, %v2913
      %v2936 = vpack.c.b16 %v2918, %v2916
      %v2937 = vpack.c.b16 %v2919, %v2917
      %v2938 = vpack.c.b16 %v2922, %v2920
      %v2939 = vpack.c.b16 %v2923, %v2921
      %2956 = vmatprep.subr.bf16.mxu0 %v2925
      %2957 = vmatpush1.bf16.msra.mxu0 %v2924
      %2958 = vmatprep.subr.bf16.mxu0 %v2927
      %2959 = vmatpush1.bf16.msra.mxu0 %v2926
      %2960 = vmatprep.subr.bf16.mxu0 %v2929
      %2961 = vmatpush1.bf16.msra.mxu0 %v2928
      %2962 = vmatprep.subr.bf16.mxu0 %v2931
      %2963 = vmatpush1.bf16.msra.mxu0 %v2930
      %2964 = vmatprep.subr.bf16.mxu0 %v2933
      %2965 = vmatpush1.bf16.msra.mxu0 %v2932
      %2966 = vmatprep.subr.bf16.mxu0 %v2935
      %2967 = vmatpush1.bf16.msra.mxu0 %v2934
      %2968 = vmatprep.subr.bf16.mxu0 %v2937
      %2969 = vmatpush1.bf16.msra.mxu0 %v2936
      %2970 = vmatprep.subr.bf16.mxu0 %v2939
      %2971 = vmatpush1.bf16.msra.mxu0 %v2938
      %2972 = vmatprep.subr.bf16.mxu0 0
      %2973 = vmatpush1.bf16.msra.mxu0 0
      %2974 = vmatprep.subr.bf16.mxu0 0
      %2975 = vmatpush1.bf16.msra.mxu0 0
      %2976 = vmatprep.subr.bf16.mxu0 0
      %2977 = vmatpush1.bf16.msra.mxu0 0
      %2978 = vmatprep.subr.bf16.mxu0 0
      %2979 = vmatpush1.bf16.msra.mxu0 0
      %2980 = vmatprep.subr.bf16.mxu0 0
      %2981 = vmatpush1.bf16.msra.mxu0 0
      %2982 = vmatprep.subr.bf16.mxu0 0
      %2983 = vmatpush1.bf16.msra.mxu0 0
      %2984 = vmatprep.subr.bf16.mxu0 0
      %2985 = vmatpush1.bf16.msra.mxu0 0
      %2986 = vmatprep.subr.bf16.mxu0 0
      %2987 = vmatpush1.bf16.msra.mxu0 0
      %2988 = vmatprep.mubr.bf16.mxu0 0
      %2989 = vmatmul.mubr.bf16.gmra.mrb[0].mxu0 %v2844
      %v2990 = vpop.f32.mrb[0].mxu0
      %v2991 = vadd.f32 %v2871, %v2990
      %v2992 = vpop.f32.mrb[0].mxu0
      %v2993 = vadd.f32 %v2875, %v2992
      %v2994 = vpop.f32.mrb[0].mxu0
      %v2995 = vadd.f32 %v2871, %v2994
      %v2996 = vpop.f32.mrb[0].mxu0
      %v2997 = vadd.f32 %v2875, %v2996
      %2998 = vmatprep.mubr.bf16.mxu0 0
      %2999 = vmatmul.mubr.bf16.gmra.mrb[0].mxu0 %v2845
      %v3000 = vpop.f32.mrb[0].mxu0
      %v3001 = vadd.f32 %v2871, %v3000
      %v3002 = vpop.f32.mrb[0].mxu0
      %v3003 = vadd.f32 %v2875, %v3002
      %v3004 = vpop.f32.mrb[0].mxu0
      %v3005 = vadd.f32 %v2871, %v3004
      %v3006 = vpop.f32.mrb[0].mxu0
      %v3007 = vadd.f32 %v2875, %v3006
      %3008 = vmatprep.mubr.bf16.mxu0 0
      %3009 = vmatmul.mubr.bf16.gmra.mrb[0].mxu0 %v2846
      %v3010 = vpop.f32.mrb[0].mxu0
      %v3011 = vadd.f32 %v2871, %v3010
      %v3012 = vpop.f32.mrb[0].mxu0
      %v3013 = vadd.f32 %v2875, %v3012
      %v3014 = vpop.f32.mrb[0].mxu0
      %v3015 = vadd.f32 %v2871, %v3014
      %v3016 = vpop.f32.mrb[0].mxu0
      %v3017 = vadd.f32 %v2875, %v3016
      %3018 = vmatprep.mubr.bf16.mxu0 0
      %3019 = vmatmul.mubr.bf16.gmra.mrb[0].mxu0 %v2847
      %v3020 = vpop.f32.mrb[0].mxu0
      %v3021 = vadd.f32 %v2871, %v3020
      %v3022 = vpop.f32.mrb[0].mxu0
      %v3023 = vadd.f32 %v2875, %v3022
      %v3024 = vpop.f32.mrb[0].mxu0
      %v3025 = vadd.f32 %v2871, %v3024
      %v3026 = vpop.f32.mrb[0].mxu0
      %v3027 = vadd.f32 %v2875, %v3026
      %3028 = vmatprep.mubr.bf16.mxu0 0
      %3029 = vmatmul.mubr.bf16.gmra.mrb[0].mxu0 %v2848
      %v3030 = vpop.f32.mrb[0].mxu0
      %v3031 = vadd.f32 %v2871, %v3030
      %v3032 = vpop.f32.mrb[0].mxu0
      %v3033 = vadd.f32 %v2875, %v3032
      %v3034 = vpop.f32.mrb[0].mxu0
      %v3035 = vadd.f32 %v2871, %v3034
      %v3036 = vpop.f32.mrb[0].mxu0
      %v3037 = vadd.f32 %v2875, %v3036
      %3038 = vmatprep.mubr.bf16.mxu0 0
      %3039 = vmatmul.mubr.bf16.gmra.mrb[0].mxu0 %v2849
      %v3040 = vpop.f32.mrb[0].mxu0
      %v3041 = vadd.f32 %v2871, %v3040
      %v3042 = vpop.f32.mrb[0].mxu0
      %v3043 = vadd.f32 %v2875, %v3042
      %v3044 = vpop.f32.mrb[0].mxu0
      %v3045 = vadd.f32 %v2871, %v3044
      %v3046 = vpop.f32.mrb[0].mxu0
      %v3047 = vadd.f32 %v2875, %v3046
      %3048 = vmatprep.mubr.bf16.mxu0 0
      %3049 = vmatmul.mubr.bf16.gmra.mrb[0].mxu0 %v2850
      %v3050 = vpop.f32.mrb[0].mxu0
      %v3051 = vadd.f32 %v2871, %v3050
      %v3052 = vpop.f32.mrb[0].mxu0
      %v3053 = vadd.f32 %v2875, %v3052
      %v3054 = vpop.f32.mrb[0].mxu0
      %v3055 = vadd.f32 %v2871, %v3054
      %v3056 = vpop.f32.mrb[0].mxu0
      %v3057 = vadd.f32 %v2875, %v3056
      %3058 = vmatprep.mubr.bf16.mxu0 0
      %3059 = vmatmul.mubr.bf16.gmra.mrb[0].mxu0 %v2851
      %v3060 = vpop.f32.mrb[0].mxu0
      %v3061 = vadd.f32 %v2871, %v3060
      %v3062 = vpop.f32.mrb[0].mxu0
      %v3063 = vadd.f32 %v2875, %v3062
      %v3064 = vpop.f32.mrb[0].mxu0
      %v3065 = vadd.f32 %v2871, %v3064
      %v3066 = vpop.f32.mrb[0].mxu0
      %v3067 = vadd.f32 %v2875, %v3066
      %3068 = vdwg.mxu0
      %v3069 = vmul.f32 %v2991, 0.5
      %v3070 = vmul.f32 %v2993, 0.5
      %v3071 = vmul.f32 %v2995, 0.5
      %v3072 = vmul.f32 %v2997, 0.5
      %v3073 = vmul.f32 %v3001, 0.5
      %v3074 = vmul.f32 %v3003, 0.5
      %v3075 = vmul.f32 %v3005, 0.5
      %v3076 = vmul.f32 %v3007, 0.5
      %v3077 = vmul.f32 %v3011, 0.5
      %v3078 = vmul.f32 %v3013, 0.5
      %v3079 = vmul.f32 %v3015, 0.5
      %v3080 = vmul.f32 %v3017, 0.5
      %v3081 = vmul.f32 %v3021, 0.5
      %v3082 = vmul.f32 %v3023, 0.5
      %v3083 = vmul.f32 %v3025, 0.5
      %v3084 = vmul.f32 %v3027, 0.5
      %v3085 = vmul.f32 %v3031, 0.5
      %v3086 = vmul.f32 %v3033, 0.5
      %v3087 = vmul.f32 %v3035, 0.5
      %v3088 = vmul.f32 %v3037, 0.5
      %v3089 = vmul.f32 %v3041, 0.5
      %v3090 = vmul.f32 %v3043, 0.5
      %v3091 = vmul.f32 %v3045, 0.5
      %v3092 = vmul.f32 %v3047, 0.5
      %v3093 = vmul.f32 %v3051, 0.5
      %v3094 = vmul.f32 %v3053, 0.5
      %v3095 = vmul.f32 %v3055, 0.5
      %v3096 = vmul.f32 %v3057, 0.5
      %v3097 = vmul.f32 %v3061, 0.5
      %v3098 = vmul.f32 %v3063, 0.5
      %v3099 = vmul.f32 %v3065, 0.5
      %v3100 = vmul.f32 %v3067, 0.5
      %v3101 = vmul.f32 %v2991, 0.044715
      %v3102 = vmul.f32 %v2993, 0.044715
      %v3103 = vmul.f32 %v2995, 0.044715
      %v3104 = vmul.f32 %v2997, 0.044715
      %v3105 = vmul.f32 %v3001, 0.044715
      %v3106 = vmul.f32 %v3003, 0.044715
      %v3107 = vmul.f32 %v3005, 0.044715
      %v3108 = vmul.f32 %v3007, 0.044715
      %v3109 = vmul.f32 %v3011, 0.044715
      %v3110 = vmul.f32 %v3013, 0.044715
      %v3111 = vmul.f32 %v3015, 0.044715
      %v3112 = vmul.f32 %v3017, 0.044715
      %v3113 = vmul.f32 %v3021, 0.044715
      %v3114 = vmul.f32 %v3023, 0.044715
      %v3115 = vmul.f32 %v3025, 0.044715
      %v3116 = vmul.f32 %v3027, 0.044715
      %v3117 = vmul.f32 %v3031, 0.044715
      %v3118 = vmul.f32 %v3033, 0.044715
      %v3119 = vmul.f32 %v3035, 0.044715
      %v3120 = vmul.f32 %v3037, 0.044715
      %v3121 = vmul.f32 %v3041, 0.044715
      %v3122 = vmul.f32 %v3043, 0.044715
      %v3123 = vmul.f32 %v3045, 0.044715
      %v3124 = vmul.f32 %v3047, 0.044715
      %v3125 = vmul.f32 %v3051, 0.044715
      %v3126 = vmul.f32 %v3053, 0.044715
      %v3127 = vmul.f32 %v3055, 0.044715
      %v3128 = vmul.f32 %v3057, 0.044715
      %v3129 = vmul.f32 %v3061, 0.044715
      %v3130 = vmul.f32 %v3063, 0.044715
      %v3131 = vmul.f32 %v3065, 0.044715
      %v3132 = vmul.f32 %v3067, 0.044715
      %v3133 = vmul.f32 %v3101, %v2991
      %v3134 = vmul.f32 %v3102, %v2993
      %v3135 = vmul.f32 %v3103, %v2995
      %v3136 = vmul.f32 %v3104, %v2997
      %v3137 = vmul.f32 %v3105, %v3001
      %v3138 = vmul.f32 %v3106, %v3003
      %v3139 = vmul.f32 %v3107, %v3005
      %v3140 = vmul.f32 %v3108, %v3007
      %v3141 = vmul.f32 %v3109, %v3011
      %v3142 = vmul.f32 %v3110, %v3013
      %v3143 = vmul.f32 %v3111, %v3015
      %v3144 = vmul.f32 %v3112, %v3017
      %v3145 = vmul.f32 %v3113, %v3021
      %v3146 = vmul.f32 %v3114, %v3023
      %v3147 = vmul.f32 %v3115, %v3025
      %v3148 = vmul.f32 %v3116, %v3027
      %v3149 = vmul.f32 %v3117, %v3031
      %v3150 = vmul.f32 %v3118, %v3033
      %v3151 = vmul.f32 %v3119, %v3035
      %v3152 = vmul.f32 %v3120, %v3037
      %v3153 = vmul.f32 %v3121, %v3041
      %v3154 = vmul.f32 %v3122, %v3043
      %v3155 = vmul.f32 %v3123, %v3045
      %v3156 = vmul.f32 %v3124, %v3047
      %v3157 = vmul.f32 %v3125, %v3051
      %v3158 = vmul.f32 %v3126, %v3053
      %v3159 = vmul.f32 %v3127, %v3055
      %v3160 = vmul.f32 %v3128, %v3057
      %v3161 = vmul.f32 %v3129, %v3061
      %v3162 = vmul.f32 %v3130, %v3063
      %v3163 = vmul.f32 %v3131, %v3065
      %v3164 = vmul.f32 %v3132, %v3067
      %v3165 = vmul.f32 %v3133, %v2991
      %v3166 = vmul.f32 %v3134, %v2993
      %v3167 = vmul.f32 %v3135, %v2995
      %v3168 = vmul.f32 %v3136, %v2997
      %v3169 = vmul.f32 %v3137, %v3001
      %v3170 = vmul.f32 %v3138, %v3003
      %v3171 = vmul.f32 %v3139, %v3005
      %v3172 = vmul.f32 %v3140, %v3007
      %v3173 = vmul.f32 %v3141, %v3011
      %v3174 = vmul.f32 %v3142, %v3013
      %v3175 = vmul.f32 %v3143, %v3015
      %v3176 = vmul.f32 %v3144, %v3017
      %v3177 = vmul.f32 %v3145, %v3021
      %v3178 = vmul.f32 %v3146, %v3023
      %v3179 = vmul.f32 %v3147, %v3025
      %v3180 = vmul.f32 %v3148, %v3027
      %v3181 = vmul.f32 %v3149, %v3031
      %v3182 = vmul.f32 %v3150, %v3033
      %v3183 = vmul.f32 %v3151, %v3035
      %v3184 = vmul.f32 %v3152, %v3037
      %v3185 = vmul.f32 %v3153, %v3041
      %v3186 = vmul.f32 %v3154, %v3043
      %v3187 = vmul.f32 %v3155, %v3045
      %v3188 = vmul.f32 %v3156, %v3047
      %v3189 = vmul.f32 %v3157, %v3051
      %v3190 = vmul.f32 %v3158, %v3053
      %v3191 = vmul.f32 %v3159, %v3055
      %v3192 = vmul.f32 %v3160, %v3057
      %v3193 = vmul.f32 %v3161, %v3061
      %v3194 = vmul.f32 %v3162, %v3063
      %v3195 = vmul.f32 %v3163, %v3065
      %v3196 = vmul.f32 %v3164, %v3067
      %v3197 = vadd.f32 %v2991, %v3165
      %v3198 = vadd.f32 %v2993, %v3166
      %v3199 = vadd.f32 %v2995, %v3167
      %v3200 = vadd.f32 %v2997, %v3168
      %v3201 = vadd.f32 %v3001, %v3169
      %v3202 = vadd.f32 %v3003, %v3170
      %v3203 = vadd.f32 %v3005, %v3171
      %v3204 = vadd.f32 %v3007, %v3172
      %v3205 = vadd.f32 %v3011, %v3173
      %v3206 = vadd.f32 %v3013, %v3174
      %v3207 = vadd.f32 %v3015, %v3175
      %v3208 = vadd.f32 %v3017, %v3176
      %v3209 = vadd.f32 %v3021, %v3177
      %v3210 = vadd.f32 %v3023, %v3178
      %v3211 = vadd.f32 %v3025, %v3179
      %v3212 = vadd.f32 %v3027, %v3180
      %v3213 = vadd.f32 %v3031, %v3181
      %v3214 = vadd.f32 %v3033, %v3182
      %v3215 = vadd.f32 %v3035, %v3183
      %v3216 = vadd.f32 %v3037, %v3184
      %v3217 = vadd.f32 %v3041, %v3185
      %v3218 = vadd.f32 %v3043, %v3186
      %v3219 = vadd.f32 %v3045, %v3187
      %v3220 = vadd.f32 %v3047, %v3188
      %v3221 = vadd.f32 %v3051, %v3189
      %v3222 = vadd.f32 %v3053, %v3190
      %v3223 = vadd.f32 %v3055, %v3191
      %v3224 = vadd.f32 %v3057, %v3192
      %v3225 = vadd.f32 %v3061, %v3193
      %v3226 = vadd.f32 %v3063, %v3194
      %v3227 = vadd.f32 %v3065, %v3195
      %v3228 = vadd.f32 %v3067, %v3196
      %v3229 = vmul.f32 %v3197, 0.7978846
      %v3230 = vmul.f32 %v3198, 0.7978846
      %v3231 = vmul.f32 %v3199, 0.7978846
      %v3232 = vmul.f32 %v3200, 0.7978846
      %v3233 = vmul.f32 %v3201, 0.7978846
      %v3234 = vmul.f32 %v3202, 0.7978846
      %v3235 = vmul.f32 %v3203, 0.7978846
      %v3236 = vmul.f32 %v3204, 0.7978846
      %v3237 = vmul.f32 %v3205, 0.7978846
      %v3238 = vmul.f32 %v3206, 0.7978846
      %v3239 = vmul.f32 %v3207, 0.7978846
      %v3240 = vmul.f32 %v3208, 0.7978846
      %v3241 = vmul.f32 %v3209, 0.7978846
      %v3242 = vmul.f32 %v3210, 0.7978846
      %v3243 = vmul.f32 %v3211, 0.7978846
      %v3244 = vmul.f32 %v3212, 0.7978846
      %v3245 = vmul.f32 %v3213, 0.7978846
      %v3246 = vmul.f32 %v3214, 0.7978846
      %v3247 = vmul.f32 %v3215, 0.7978846
      %v3248 = vmul.f32 %v3216, 0.7978846
      %v3249 = vmul.f32 %v3217, 0.7978846
      %v3250 = vmul.f32 %v3218, 0.7978846
      %v3251 = vmul.f32 %v3219, 0.7978846
      %v3252 = vmul.f32 %v3220, 0.7978846
      %v3253 = vmul.f32 %v3221, 0.7978846
      %v3254 = vmul.f32 %v3222, 0.7978846
      %v3255 = vmul.f32 %v3223, 0.7978846
      %v3256 = vmul.f32 %v3224, 0.7978846
      %v3257 = vmul.f32 %v3225, 0.7978846
      %v3258 = vmul.f32 %v3226, 0.7978846
      %v3259 = vmul.f32 %v3227, 0.7978846
      %v3260 = vmul.f32 %v3228, 0.7978846
      %v3261 = vtanh.pop %v3229
      %v3262 = vtanh.pop %v3230
      %v3263 = vtanh.pop %v3231
      %v3264 = vtanh.pop %v3232
      %v3265 = vtanh.pop %v3233
      %v3266 = vtanh.pop %v3234
      %v3267 = vtanh.pop %v3235
      %v3268 = vtanh.pop %v3236
      %v3269 = vtanh.pop %v3237
      %v3270 = vtanh.pop %v3238
      %v3271 = vtanh.pop %v3239
      %v3272 = vtanh.pop %v3240
      %v3273 = vtanh.pop %v3241
      %v3274 = vtanh.pop %v3242
      %v3275 = vtanh.pop %v3243
      %v3276 = vtanh.pop %v3244
      %v3277 = vtanh.pop %v3245
      %v3278 = vtanh.pop %v3246
      %v3279 = vtanh.pop %v3247
      %v3280 = vtanh.pop %v3248
      %v3281 = vtanh.pop %v3249
      %v3282 = vtanh.pop %v3250
      %v3283 = vtanh.pop %v3251
      %v3284 = vtanh.pop %v3252
      %v3285 = vtanh.pop %v3253
      %v3286 = vtanh.pop %v3254
      %v3287 = vtanh.pop %v3255
      %v3288 = vtanh.pop %v3256
      %v3289 = vtanh.pop %v3257
      %v3290 = vtanh.pop %v3258
      %v3291 = vtanh.pop %v3259
      %v3292 = vtanh.pop %v3260
      %v3293 = vadd.f32 %v3261, 1.0
      %v3294 = vadd.f32 %v3262, 1.0
      %v3295 = vadd.f32 %v3263, 1.0
      %v3296 = vadd.f32 %v3264, 1.0
      %v3297 = vadd.f32 %v3265, 1.0
      %v3298 = vadd.f32 %v3266, 1.0
      %v3299 = vadd.f32 %v3267, 1.0
      %v3300 = vadd.f32 %v3268, 1.0
      %v3301 = vadd.f32 %v3269, 1.0
      %v3302 = vadd.f32 %v3270, 1.0
      %v3303 = vadd.f32 %v3271, 1.0
      %v3304 = vadd.f32 %v3272, 1.0
      %v3305 = vadd.f32 %v3273, 1.0
      %v3306 = vadd.f32 %v3274, 1.0
      %v3307 = vadd.f32 %v3275, 1.0
      %v3308 = vadd.f32 %v3276, 1.0
      %v3309 = vadd.f32 %v3277, 1.0
      %v3310 = vadd.f32 %v3278, 1.0
      %v3311 = vadd.f32 %v3279, 1.0
      %v3312 = vadd.f32 %v3280, 1.0
      %v3313 = vadd.f32 %v3281, 1.0
      %v3314 = vadd.f32 %v3282, 1.0
      %v3315 = vadd.f32 %v3283, 1.0
      %v3316 = vadd.f32 %v3284, 1.0
      %v3317 = vadd.f32 %v3285, 1.0
      %v3318 = vadd.f32 %v3286, 1.0
      %v3319 = vadd.f32 %v3287, 1.0
      %v3320 = vadd.f32 %v3288, 1.0
      %v3321 = vadd.f32 %v3289, 1.0
      %v3322 = vadd.f32 %v3290, 1.0
      %v3323 = vadd.f32 %v3291, 1.0
      %v3324 = vadd.f32 %v3292, 1.0
      %v3325 = vmul.f32 %v3069, %v3293
      %v3326 = vmul.f32 %v3070, %v3294
      %v3327 = vmul.f32 %v3071, %v3295
      %v3328 = vmul.f32 %v3072, %v3296
      %v3329 = vmul.f32 %v3073, %v3297
      %v3330 = vmul.f32 %v3074, %v3298
      %v3331 = vmul.f32 %v3075, %v3299
      %v3332 = vmul.f32 %v3076, %v3300
      %v3333 = vmul.f32 %v3077, %v3301
      %v3334 = vmul.f32 %v3078, %v3302
      %v3335 = vmul.f32 %v3079, %v3303
      %v3336 = vmul.f32 %v3080, %v3304
      %v3337 = vmul.f32 %v3081, %v3305
      %v3338 = vmul.f32 %v3082, %v3306
      %v3339 = vmul.f32 %v3083, %v3307
      %v3340 = vmul.f32 %v3084, %v3308
      %v3341 = vmul.f32 %v3085, %v3309
      %v3342 = vmul.f32 %v3086, %v3310
      %v3343 = vmul.f32 %v3087, %v3311
      %v3344 = vmul.f32 %v3088, %v3312
      %v3345 = vmul.f32 %v3089, %v3313
      %v3346 = vmul.f32 %v3090, %v3314
      %v3347 = vmul.f32 %v3091, %v3315
      %v3348 = vmul.f32 %v3092, %v3316
      %v3349 = vmul.f32 %v3093, %v3317
      %v3350 = vmul.f32 %v3094, %v3318
      %v3351 = vmul.f32 %v3095, %v3319
      %v3352 = vmul.f32 %v3096, %v3320
      %v3353 = vmul.f32 %v3097, %v3321
      %v3354 = vmul.f32 %v3098, %v3322
      %v3355 = vmul.f32 %v3099, %v3323
      %v3356 = vmul.f32 %v3100, %v3324
      %v3357 = vpack.c.bf16 %v3327, %v3325
      %v3358 = vpack.c.bf16 %v3328, %v3326
      %v3359 = vpack.c.bf16 %v3331, %v3329
      %v3360 = vpack.c.bf16 %v3332, %v3330
      %v3361 = vpack.c.bf16 %v3335, %v3333
      %v3362 = vpack.c.bf16 %v3336, %v3334
      %v3363 = vpack.c.bf16 %v3339, %v3337
      %v3364 = vpack.c.bf16 %v3340, %v3338
      %v3365 = vpack.c.bf16 %v3343, %v3341
      %v3366 = vpack.c.bf16 %v3344, %v3342
      %v3367 = vpack.c.bf16 %v3347, %v3345
      %v3368 = vpack.c.bf16 %v3348, %v3346
      %v3369 = vpack.c.bf16 %v3351, %v3349
      %v3370 = vpack.c.bf16 %v3352, %v3350
      %v3371 = vpack.c.bf16 %v3355, %v3353
      %v3372 = vpack.c.bf16 %v3356, %v3354
      %v3373 = vld [vmem:[%s569] sm:$0xf]
      %v3374 = vld [vmem:[%s569 + $0x4] sm:$0xf]
      %v3375 = vld [vmem:[%s569 + $0x8] sm:$0xf]
      %v3376 = vld [vmem:[%s569 + $0xc] sm:$0xf]
      %v3377 = vld [vmem:[%s569 + $0x10] sm:$0xf]
      %v3378 = vld [vmem:[%s569 + $0x14] sm:$0xf]
      %v3379 = vld [vmem:[%s569 + $0x18] sm:$0xf]
      %v3380 = vld [vmem:[%s569 + $0x1c] sm:$0xf]
      %v3381 = vld [vmem:[%s569 + $0x20] sm:$0xf]
      %v3382 = vld [vmem:[%s569 + $0x24] sm:$0xf]
      %v3383 = vld [vmem:[%s569 + $0x28] sm:$0xf]
      %v3384 = vld [vmem:[%s569 + $0x2c] sm:$0xf]
      %v3385 = vld [vmem:[%s569 + $0x30] sm:$0xf]
      %v3386 = vld [vmem:[%s569 + $0x34] sm:$0xf]
      %v3387 = vld [vmem:[%s569 + $0x38] sm:$0xf]
      %v3388 = vld [vmem:[%s569 + $0x3c] sm:$0xf]
      %v3389 = vld [vmem:[%s569 + $0x40] sm:$0xf]
      %v3390 = vld [vmem:[%s569 + $0x44] sm:$0xf]
      %v3391 = vld [vmem:[%s569 + $0x48] sm:$0xf]
      %v3392 = vld [vmem:[%s569 + $0x4c] sm:$0xf]
      %v3393 = vld [vmem:[%s569 + $0x50] sm:$0xf]
      %v3394 = vld [vmem:[%s569 + $0x54] sm:$0xf]
      %v3395 = vld [vmem:[%s569 + $0x58] sm:$0xf]
      %v3396 = vld [vmem:[%s569 + $0x5c] sm:$0xf]
      %v3397 = vld [vmem:[%s569 + $0x60] sm:$0xf]
      %v3398 = vld [vmem:[%s569 + $0x64] sm:$0xf]
      %v3399 = vld [vmem:[%s569 + $0x68] sm:$0xf]
      %v3400 = vld [vmem:[%s569 + $0x6c] sm:$0xf]
      %v3401 = vld [vmem:[%s569 + $0x70] sm:$0xf]
      %v3402 = vld [vmem:[%s569 + $0x74] sm:$0xf]
      %v3403 = vld [vmem:[%s569 + $0x78] sm:$0xf]
      %v3404 = vld [vmem:[%s569 + $0x7c] sm:$0xf]
      %v3405 = vlaneseq
      %v3406 = vshrl.u32 %v3405, 7
      %v3407 = vsub.s32 5, %v3406
      %v3408 = vrot.slane %v1030, %v3407
      %v3441 = vunpack.c.l.b16 %v3373
      %v3442 = vunpack.c.l.b16 %v3374
      %v3443 = vunpack.c.l.b16 %v3375
      %v3444 = vunpack.c.l.b16 %v3376
      %v3445 = vunpack.c.l.b16 %v3377
      %v3446 = vunpack.c.l.b16 %v3378
      %v3447 = vunpack.c.l.b16 %v3379
      %v3448 = vunpack.c.l.b16 %v3380
      %v3449 = vunpack.c.l.b16 %v3381
      %v3450 = vunpack.c.l.b16 %v3382
      %v3451 = vunpack.c.l.b16 %v3383
      %v3452 = vunpack.c.l.b16 %v3384
      %v3453 = vunpack.c.l.b16 %v3385
      %v3454 = vunpack.c.l.b16 %v3386
      %v3455 = vunpack.c.l.b16 %v3387
      %v3456 = vunpack.c.l.b16 %v3388
      %v3457 = vunpack.c.l.b16 %v3389
      %v3458 = vunpack.c.l.b16 %v3390
      %v3459 = vunpack.c.l.b16 %v3391
      %v3460 = vunpack.c.l.b16 %v3392
      %v3461 = vunpack.c.l.b16 %v3393
      %v3462 = vunpack.c.l.b16 %v3394
      %v3463 = vunpack.c.l.b16 %v3395
      %v3464 = vunpack.c.l.b16 %v3396
      %v3465 = vunpack.c.l.b16 %v3397
      %v3466 = vunpack.c.l.b16 %v3398
      %v3467 = vunpack.c.l.b16 %v3399
      %v3468 = vunpack.c.l.b16 %v3400
      %v3469 = vunpack.c.l.b16 %v3401
      %v3470 = vunpack.c.l.b16 %v3402
      %v3471 = vunpack.c.l.b16 %v3403
      %v3472 = vunpack.c.l.b16 %v3404
      %v3473 = vpack.c.b16 %v3442, %v3441
      %v3474 = vpack.c.b16 %v3444, %v3443
      %v3475 = vpack.c.b16 %v3446, %v3445
      %v3476 = vpack.c.b16 %v3448, %v3447
      %v3477 = vpack.c.b16 %v3450, %v3449
      %v3478 = vpack.c.b16 %v3452, %v3451
      %v3479 = vpack.c.b16 %v3454, %v3453
      %v3480 = vpack.c.b16 %v3456, %v3455
      %v3481 = vpack.c.b16 %v3458, %v3457
      %v3482 = vpack.c.b16 %v3460, %v3459
      %v3483 = vpack.c.b16 %v3462, %v3461
      %v3484 = vpack.c.b16 %v3464, %v3463
      %v3485 = vpack.c.b16 %v3466, %v3465
      %v3486 = vpack.c.b16 %v3468, %v3467
      %v3487 = vpack.c.b16 %v3470, %v3469
      %v3488 = vpack.c.b16 %v3472, %v3471
      %3505 = vmatprep.subr.bf16.mxu0 0
      %3506 = vmatpush1.bf16.msra.mxu0 %v3473
      %3507 = vmatprep.subr.bf16.mxu0 0
      %3508 = vmatpush1.bf16.msra.mxu0 %v3474
      %3509 = vmatprep.subr.bf16.mxu0 0
      %3510 = vmatpush1.bf16.msra.mxu0 %v3475
      %3511 = vmatprep.subr.bf16.mxu0 0
      %3512 = vmatpush1.bf16.msra.mxu0 %v3476
      %3513 = vmatprep.subr.bf16.mxu0 0
      %3514 = vmatpush1.bf16.msra.mxu0 %v3477
      %3515 = vmatprep.subr.bf16.mxu0 0
      %3516 = vmatpush1.bf16.msra.mxu0 %v3478
      %3517 = vmatprep.subr.bf16.mxu0 0
      %3518 = vmatpush1.bf16.msra.mxu0 %v3479
      %3519 = vmatprep.subr.bf16.mxu0 0
      %3520 = vmatpush1.bf16.msra.mxu0 %v3480
      %3521 = vmatprep.subr.bf16.mxu0 0
      %3522 = vmatpush1.bf16.msra.mxu0 %v3481
      %3523 = vmatprep.subr.bf16.mxu0 0
      %3524 = vmatpush1.bf16.msra.mxu0 %v3482
      %3525 = vmatprep.subr.bf16.mxu0 0
      %3526 = vmatpush1.bf16.msra.mxu0 %v3483
      %3527 = vmatprep.subr.bf16.mxu0 0
      %3528 = vmatpush1.bf16.msra.mxu0 %v3484
      %3529 = vmatprep.subr.bf16.mxu0 0
      %3530 = vmatpush1.bf16.msra.mxu0 %v3485
      %3531 = vmatprep.subr.bf16.mxu0 0
      %3532 = vmatpush1.bf16.msra.mxu0 %v3486
      %3533 = vmatprep.subr.bf16.mxu0 0
      %3534 = vmatpush1.bf16.msra.mxu0 %v3487
      %3535 = vmatprep.subr.bf16.mxu0 0
      %3536 = vmatpush1.bf16.msra.mxu0 %v3488
      %3537 = vmatprep.mubr.bf16.mxu0 %v3358
      %3538 = vmatmul.mubr.bf16.gmra.mrb[0].mxu0 %v3357
      %v3539 = vpop.f32.mrb[0].mxu0
      %v3540 = vadd.f32 %v3408, %v3539
      %v3541 = vpop.f32.mrb[0].mxu0
      %v3542 = vpop.f32.mrb[0].mxu0
      %v3543 = vadd.f32 %v3408, %v3542
      %v3544 = vpop.f32.mrb[0].mxu0
      %3545 = vmatprep.mubr.bf16.mxu0 %v3360
      %3546 = vmatmul.mubr.bf16.gmra.mrb[0].mxu0 %v3359
      %v3547 = vpop.f32.mrb[0].mxu0
      %v3548 = vadd.f32 %v3408, %v3547
      %v3549 = vpop.f32.mrb[0].mxu0
      %v3550 = vpop.f32.mrb[0].mxu0
      %v3551 = vadd.f32 %v3408, %v3550
      %v3552 = vpop.f32.mrb[0].mxu0
      %3553 = vmatprep.mubr.bf16.mxu0 %v3362
      %3554 = vmatmul.mubr.bf16.gmra.mrb[0].mxu0 %v3361
      %v3555 = vpop.f32.mrb[0].mxu0
      %v3556 = vadd.f32 %v3408, %v3555
      %v3557 = vpop.f32.mrb[0].mxu0
      %v3558 = vpop.f32.mrb[0].mxu0
      %v3559 = vadd.f32 %v3408, %v3558
      %v3560 = vpop.f32.mrb[0].mxu0
      %3561 = vmatprep.mubr.bf16.mxu0 %v3364
      %3562 = vmatmul.mubr.bf16.gmra.mrb[0].mxu0 %v3363
      %v3563 = vpop.f32.mrb[0].mxu0
      %v3564 = vadd.f32 %v3408, %v3563
      %v3565 = vpop.f32.mrb[0].mxu0
      %v3566 = vpop.f32.mrb[0].mxu0
      %v3567 = vadd.f32 %v3408, %v3566
      %v3568 = vpop.f32.mrb[0].mxu0
      %3569 = vmatprep.mubr.bf16.mxu0 %v3366
      %3570 = vmatmul.mubr.bf16.gmra.mrb[0].mxu0 %v3365
      %v3571 = vpop.f32.mrb[0].mxu0
      %v3572 = vadd.f32 %v3408, %v3571
      %v3573 = vpop.f32.mrb[0].mxu0
      %v3574 = vpop.f32.mrb[0].mxu0
      %v3575 = vadd.f32 %v3408, %v3574
      %v3576 = vpop.f32.mrb[0].mxu0
      %3577 = vmatprep.mubr.bf16.mxu0 %v3368
      %3578 = vmatmul.mubr.bf16.gmra.mrb[0].mxu0 %v3367
      %v3579 = vpop.f32.mrb[0].mxu0
      %v3580 = vadd.f32 %v3408, %v3579
      %v3581 = vpop.f32.mrb[0].mxu0
      %v3582 = vpop.f32.mrb[0].mxu0
      %v3583 = vadd.f32 %v3408, %v3582
      %v3584 = vpop.f32.mrb[0].mxu0
      %3585 = vmatprep.mubr.bf16.mxu0 %v3370
      %3586 = vmatmul.mubr.bf16.gmra.mrb[0].mxu0 %v3369
      %v3587 = vpop.f32.mrb[0].mxu0
      %v3588 = vadd.f32 %v3408, %v3587
      %v3589 = vpop.f32.mrb[0].mxu0
      %v3590 = vpop.f32.mrb[0].mxu0
      %v3591 = vadd.f32 %v3408, %v3590
      %v3592 = vpop.f32.mrb[0].mxu0
      %3593 = vmatprep.mubr.bf16.mxu0 %v3372
      %3594 = vmatmul.mubr.bf16.gmra.mrb[0].mxu0 %v3371
      %v3595 = vpop.f32.mrb[0].mxu0
      %v3596 = vadd.f32 %v3408, %v3595
      %v3597 = vpop.f32.mrb[0].mxu0
      %v3598 = vpop.f32.mrb[0].mxu0
      %v3599 = vadd.f32 %v3408, %v3598
      %v3600 = vpop.f32.mrb[0].mxu0
      %3601 = vdwg.mxu0
      %v3602 = vadd.f32 %v3540, %v2828
      %v3603 = vadd.f32 %v3543, %v2829
      %v3604 = vadd.f32 %v3548, %v2830
      %v3605 = vadd.f32 %v3551, %v2831
      %v3606 = vadd.f32 %v3556, %v2832
      %v3607 = vadd.f32 %v3559, %v2833
      %v3608 = vadd.f32 %v3564, %v2834
      %v3609 = vadd.f32 %v3567, %v2835
      %v3610 = vadd.f32 %v3572, %v2836
      %v3611 = vadd.f32 %v3575, %v2837
      %v3612 = vadd.f32 %v3580, %v2838
      %v3613 = vadd.f32 %v3583, %v2839
      %v3614 = vadd.f32 %v3588, %v2840
      %v3615 = vadd.f32 %v3591, %v2841
      %v3616 = vadd.f32 %v3596, %v2842
      %v3617 = vadd.f32 %v3599, %v2843
      %3618 = vadd.xlane.f32.xlu0 %v3602
      %v3619 = vpop.xlane.xlu0 %3618
      %3620 = vadd.xlane.f32.xlu0 %v3603
      %v3621 = vpop.xlane.xlu0 %3620
      %3622 = vadd.xlane.f32.xlu0 %v3604
      %v3623 = vpop.xlane.xlu0 %3622
      %3624 = vadd.xlane.f32.xlu0 %v3605
      %v3625 = vpop.xlane.xlu0 %3624
      %3626 = vadd.xlane.f32.xlu0 %v3606
      %v3627 = vpop.xlane.xlu0 %3626
      %3628 = vadd.xlane.f32.xlu0 %v3607
      %v3629 = vpop.xlane.xlu0 %3628
      %3630 = vadd.xlane.f32.xlu0 %v3608
      %v3631 = vpop.xlane.xlu0 %3630
      %3632 = vadd.xlane.f32.xlu0 %v3609
      %v3633 = vpop.xlane.xlu0 %3632
      %3634 = vadd.xlane.f32.xlu0 %v3610
      %v3635 = vpop.xlane.xlu0 %3634
      %3636 = vadd.xlane.f32.xlu0 %v3611
      %v3637 = vpop.xlane.xlu0 %3636
      %3638 = vadd.xlane.f32.xlu0 %v3612
      %v3639 = vpop.xlane.xlu0 %3638
      %3640 = vadd.xlane.f32.xlu0 %v3613
      %v3641 = vpop.xlane.xlu0 %3640
      %3642 = vadd.xlane.f32.xlu0 %v3614
      %v3643 = vpop.xlane.xlu0 %3642
      %3644 = vadd.xlane.f32.xlu0 %v3615
      %v3645 = vpop.xlane.xlu0 %3644
      %3646 = vadd.xlane.f32.xlu0 %v3616
      %v3647 = vpop.xlane.xlu0 %3646
      %3648 = vadd.xlane.f32.xlu0 %v3617
      %v3649 = vpop.xlane.xlu0 %3648
      %v3650 = vmul.f32 %v3619, %v2659
      %v3651 = vmul.f32 %v3621, %v2659
      %v3652 = vmul.f32 %v3623, %v2659
      %v3653 = vmul.f32 %v3625, %v2659
      %v3654 = vmul.f32 %v3627, %v2659
      %v3655 = vmul.f32 %v3629, %v2659
      %v3656 = vmul.f32 %v3631, %v2659
      %v3657 = vmul.f32 %v3633, %v2659
      %v3658 = vmul.f32 %v3635, %v2659
      %v3659 = vmul.f32 %v3637, %v2659
      %v3660 = vmul.f32 %v3639, %v2659
      %v3661 = vmul.f32 %v3641, %v2659
      %v3662 = vmul.f32 %v3643, %v2659
      %v3663 = vmul.f32 %v3645, %v2659
      %v3664 = vmul.f32 %v3647, %v2659
      %v3665 = vmul.f32 %v3649, %v2659
      %v3666 = vsub.f32 %v3602, %v3650
      %v3667 = vsub.f32 %v3603, %v3651
      %v3668 = vsub.f32 %v3604, %v3652
      %v3669 = vsub.f32 %v3605, %v3653
      %v3670 = vsub.f32 %v3606, %v3654
      %v3671 = vsub.f32 %v3607, %v3655
      %v3672 = vsub.f32 %v3608, %v3656
      %v3673 = vsub.f32 %v3609, %v3657
      %v3674 = vsub.f32 %v3610, %v3658
      %v3675 = vsub.f32 %v3611, %v3659
      %v3676 = vsub.f32 %v3612, %v3660
      %v3677 = vsub.f32 %v3613, %v3661
      %v3678 = vsub.f32 %v3614, %v3662
      %v3679 = vsub.f32 %v3615, %v3663
      %v3680 = vsub.f32 %v3616, %v3664
      %v3681 = vsub.f32 %v3617, %v3665
      %v3682 = vmul.f32 %v3666, %v3666
      %v3683 = vmul.f32 %v3667, %v3667
      %v3684 = vmul.f32 %v3668, %v3668
      %v3685 = vmul.f32 %v3669, %v3669
      %v3686 = vmul.f32 %v3670, %v3670
      %v3687 = vmul.f32 %v3671, %v3671
      %v3688 = vmul.f32 %v3672, %v3672
      %v3689 = vmul.f32 %v3673, %v3673
      %v3690 = vmul.f32 %v3674, %v3674
      %v3691 = vmul.f32 %v3675, %v3675
      %v3692 = vmul.f32 %v3676, %v3676
      %v3693 = vmul.f32 %v3677, %v3677
      %v3694 = vmul.f32 %v3678, %v3678
      %v3695 = vmul.f32 %v3679, %v3679
      %v3696 = vmul.f32 %v3680, %v3680
      %v3697 = vmul.f32 %v3681, %v3681
      %3698 = vadd.xlane.f32.xlu0 %v3682
      %v3699 = vpop.xlane.xlu0 %3698
      %3700 = vadd.xlane.f32.xlu0 %v3683
      %v3701 = vpop.xlane.xlu0 %3700
      %3702 = vadd.xlane.f32.xlu0 %v3684
      %v3703 = vpop.xlane.xlu0 %3702
      %3704 = vadd.xlane.f32.xlu0 %v3685
      %v3705 = vpop.xlane.xlu0 %3704
      %3706 = vadd.xlane.f32.xlu0 %v3686
      %v3707 = vpop.xlane.xlu0 %3706
      %3708 = vadd.xlane.f32.xlu0 %v3687
      %v3709 = vpop.xlane.xlu0 %3708
      %3710 = vadd.xlane.f32.xlu0 %v3688
      %v3711 = vpop.xlane.xlu0 %3710
      %3712 = vadd.xlane.f32.xlu0 %v3689
      %v3713 = vpop.xlane.xlu0 %3712
      %3714 = vadd.xlane.f32.xlu0 %v3690
      %v3715 = vpop.xlane.xlu0 %3714
      %3716 = vadd.xlane.f32.xlu0 %v3691
      %v3717 = vpop.xlane.xlu0 %3716
      %3718 = vadd.xlane.f32.xlu0 %v3692
      %v3719 = vpop.xlane.xlu0 %3718
      %3720 = vadd.xlane.f32.xlu0 %v3693
      %v3721 = vpop.xlane.xlu0 %3720
      %3722 = vadd.xlane.f32.xlu0 %v3694
      %v3723 = vpop.xlane.xlu0 %3722
      %3724 = vadd.xlane.f32.xlu0 %v3695
      %v3725 = vpop.xlane.xlu0 %3724
      %3726 = vadd.xlane.f32.xlu0 %v3696
      %v3727 = vpop.xlane.xlu0 %3726
      %3728 = vadd.xlane.f32.xlu0 %v3697
      %v3729 = vpop.xlane.xlu0 %3728
      %v3730 = vmul.f32 %v3699, %v2659
      %v3731 = vmul.f32 %v3701, %v2659
      %v3732 = vmul.f32 %v3703, %v2659
      %v3733 = vmul.f32 %v3705, %v2659
      %v3734 = vmul.f32 %v3707, %v2659
      %v3735 = vmul.f32 %v3709, %v2659
      %v3736 = vmul.f32 %v3711, %v2659
      %v3737 = vmul.f32 %v3713, %v2659
      %v3738 = vmul.f32 %v3715, %v2659
      %v3739 = vmul.f32 %v3717, %v2659
      %v3740 = vmul.f32 %v3719, %v2659
      %v3741 = vmul.f32 %v3721, %v2659
      %v3742 = vmul.f32 %v3723, %v2659
      %v3743 = vmul.f32 %v3725, %v2659
      %v3744 = vmul.f32 %v3727, %v2659
      %v3745 = vmul.f32 %v3729, %v2659
      %v3746 = vadd.f32 %v3730, 1e-12
      %v3747 = vadd.f32 %v3731, 1e-12
      %v3748 = vadd.f32 %v3732, 1e-12
      %v3749 = vadd.f32 %v3733, 1e-12
      %v3750 = vadd.f32 %v3734, 1e-12
      %v3751 = vadd.f32 %v3735, 1e-12
      %v3752 = vadd.f32 %v3736, 1e-12
      %v3753 = vadd.f32 %v3737, 1e-12
      %v3754 = vadd.f32 %v3738, 1e-12
      %v3755 = vadd.f32 %v3739, 1e-12
      %v3756 = vadd.f32 %v3740, 1e-12
      %v3757 = vadd.f32 %v3741, 1e-12
      %v3758 = vadd.f32 %v3742, 1e-12
      %v3759 = vadd.f32 %v3743, 1e-12
      %v3760 = vadd.f32 %v3744, 1e-12
      %v3761 = vadd.f32 %v3745, 1e-12
      %v3762 = vrsqrt.pop %v3746
      %v3763 = vrsqrt.pop %v3747
      %v3764 = vrsqrt.pop %v3748
      %v3765 = vrsqrt.pop %v3749
      %v3766 = vrsqrt.pop %v3750
      %v3767 = vrsqrt.pop %v3751
      %v3768 = vrsqrt.pop %v3752
      %v3769 = vrsqrt.pop %v3753
      %v3770 = vrsqrt.pop %v3754
      %v3771 = vrsqrt.pop %v3755
      %v3772 = vrsqrt.pop %v3756
      %v3773 = vrsqrt.pop %v3757
      %v3774 = vrsqrt.pop %v3758
      %v3775 = vrsqrt.pop %v3759
      %v3776 = vrsqrt.pop %v3760
      %v3777 = vrsqrt.pop %v3761
      %v3778 = vmul.f32 %v3666, %v3762
      %v3779 = vmul.f32 %v3667, %v3763
      %v3780 = vmul.f32 %v3668, %v3764
      %v3781 = vmul.f32 %v3669, %v3765
      %v3782 = vmul.f32 %v3670, %v3766
      %v3783 = vmul.f32 %v3671, %v3767
      %v3784 = vmul.f32 %v3672, %v3768
      %v3785 = vmul.f32 %v3673, %v3769
      %v3786 = vmul.f32 %v3674, %v3770
      %v3787 = vmul.f32 %v3675, %v3771
      %v3788 = vmul.f32 %v3676, %v3772
      %v3789 = vmul.f32 %v3677, %v3773
      %v3790 = vmul.f32 %v3678, %v3774
      %v3791 = vmul.f32 %v3679, %v3775
      %v3792 = vmul.f32 %v3680, %v3776
      %v3793 = vmul.f32 %v3681, %v3777
      %v3794 = vlaneseq
      %v3795 = vshrl.u32 %v3794, 7
      %v3796 = vsub.s32 6, %v3795
      %v3797 = vrot.slane %v1030, %v3796
      %v3798 = vmul.f32 %v3778, %v3797
      %v3799 = vmul.f32 %v3779, %v3797
      %v3800 = vmul.f32 %v3780, %v3797
      %v3801 = vmul.f32 %v3781, %v3797
      %v3802 = vmul.f32 %v3782, %v3797
      %v3803 = vmul.f32 %v3783, %v3797
      %v3804 = vmul.f32 %v3784, %v3797
      %v3805 = vmul.f32 %v3785, %v3797
      %v3806 = vmul.f32 %v3786, %v3797
      %v3807 = vmul.f32 %v3787, %v3797
      %v3808 = vmul.f32 %v3788, %v3797
      %v3809 = vmul.f32 %v3789, %v3797
      %v3810 = vmul.f32 %v3790, %v3797
      %v3811 = vmul.f32 %v3791, %v3797
      %v3812 = vmul.f32 %v3792, %v3797
      %v3813 = vmul.f32 %v3793, %v3797
      %v3814 = vlaneseq
      %v3815 = vshrl.u32 %v3814, 7
      %v3816 = vsub.s32 7, %v3815
      %v3817 = vrot.slane %v1030, %v3816
      %v3818 = vadd.f32 %v3798, %v3817
      %v3819 = vadd.f32 %v3799, %v3817
      %v3820 = vadd.f32 %v3800, %v3817
      %v3821 = vadd.f32 %v3801, %v3817
      %v3822 = vadd.f32 %v3802, %v3817
      %v3823 = vadd.f32 %v3803, %v3817
      %v3824 = vadd.f32 %v3804, %v3817
      %v3825 = vadd.f32 %v3805, %v3817
      %v3826 = vadd.f32 %v3806, %v3817
      %v3827 = vadd.f32 %v3807, %v3817
      %v3828 = vadd.f32 %v3808, %v3817
      %v3829 = vadd.f32 %v3809, %v3817
      %v3830 = vadd.f32 %v3810, %v3817
      %v3831 = vadd.f32 %v3811, %v3817
      %v3832 = vadd.f32 %v3812, %v3817
      %v3833 = vadd.f32 %v3813, %v3817
      %3834 = vst [vmem:[#allocation2] sm:$0xff] %v3818
      %3835 = vst [vmem:[#allocation2 + $0x8] sm:$0xff] %v3819
      %3836 = vst [vmem:[#allocation2 + $0x10] sm:$0xff] %v3820
      %3837 = vst [vmem:[#allocation2 + $0x18] sm:$0xff] %v3821
      %3838 = vst [vmem:[#allocation2 + $0x20] sm:$0xff] %v3822
      %3839 = vst [vmem:[#allocation2 + $0x28] sm:$0xff] %v3823
      %3840 = vst [vmem:[#allocation2 + $0x30] sm:$0xff] %v3824
      %3841 = vst [vmem:[#allocation2 + $0x38] sm:$0xff] %v3825
      %3842 = vst [vmem:[#allocation2 + $0x40] sm:$0xff] %v3826
      %3843 = vst [vmem:[#allocation2 + $0x48] sm:$0xff] %v3827
      %3844 = vst [vmem:[#allocation2 + $0x50] sm:$0xff] %v3828
      %3845 = vst [vmem:[#allocation2 + $0x58] sm:$0xff] %v3829
      %3846 = vst [vmem:[#allocation2 + $0x60] sm:$0xff] %v3830
      %3847 = vst [vmem:[#allocation2 + $0x68] sm:$0xff] %v3831
      %3848 = vst [vmem:[#allocation2 + $0x70] sm:$0xff] %v3832
      %3849 = vst [vmem:[#allocation2 + $0x78] sm:$0xff] %v3833
      %p3850 = scmp.eq.s32.totalorder %s28, 1
      // Predicated region
      $region73: #{fewrel_forward.3} parent=67 // pred_check
        %p3851 = pneg %p3850
      $region74: #{fewrel_forward.3} parent=67 // pred_check_branch
        %3853 = sbr.rel (%p3851) target = $region76
      $region75: #{fewrel_forward.3} parent=67 // pred_region
        %v3854 = vpack.c.bf16 %v3818, %v3818
        %v3855 = vld [vmem:[%s10] sm:$0xf]
        %v3856 = vld [vmem:[%s10 + $0x4] sm:$0xf]
        %v3857 = vld [vmem:[%s10 + $0x8] sm:$0xf]
        %v3858 = vld [vmem:[%s10 + $0xc] sm:$0xf]
        %v3859 = vld [vmem:[%s10 + $0x10] sm:$0xf]
        %v3860 = vld [vmem:[%s10 + $0x14] sm:$0xf]
        %v3861 = vld [vmem:[%s10 + $0x18] sm:$0xf]
        %v3862 = vld [vmem:[%s10 + $0x1c] sm:$0xf]
        %v3863 = vld [vmem:[%s10 + $0x20] sm:$0xf]
        %v3864 = vld [vmem:[%s10 + $0x24] sm:$0xf]
        %v3865 = vld [vmem:[%s10 + $0x28] sm:$0xf]
        %v3866 = vld [vmem:[%s10 + $0x2c] sm:$0xf]
        %v3867 = vld [vmem:[%s10 + $0x30] sm:$0xf]
        %v3868 = vld [vmem:[%s10 + $0x34] sm:$0xf]
        %v3869 = vld [vmem:[%s10 + $0x38] sm:$0xf]
        %v3870 = vld [vmem:[%s10 + $0x3c] sm:$0xf]
        %v3887 = vunpack.c.l.b16 %v3855
        %v3888 = vunpack.c.l.b16 %v3856
        %v3889 = vunpack.c.l.b16 %v3857
        %v3890 = vunpack.c.l.b16 %v3858
        %v3891 = vunpack.c.l.b16 %v3859
        %v3892 = vunpack.c.l.b16 %v3860
        %v3893 = vunpack.c.l.b16 %v3861
        %v3894 = vunpack.c.l.b16 %v3862
        %v3895 = vunpack.c.l.b16 %v3863
        %v3896 = vunpack.c.l.b16 %v3864
        %v3897 = vunpack.c.l.b16 %v3865
        %v3898 = vunpack.c.l.b16 %v3866
        %v3899 = vunpack.c.l.b16 %v3867
        %v3900 = vunpack.c.l.b16 %v3868
        %v3901 = vunpack.c.l.b16 %v3869
        %v3902 = vunpack.c.l.b16 %v3870
        %v3903 = vpack.c.b16 %v3888, %v3887
        %v3904 = vpack.c.b16 %v3890, %v3889
        %v3905 = vpack.c.b16 %v3892, %v3891
        %v3906 = vpack.c.b16 %v3894, %v3893
        %v3907 = vpack.c.b16 %v3896, %v3895
        %v3908 = vpack.c.b16 %v3898, %v3897
        %v3909 = vpack.c.b16 %v3900, %v3899
        %v3910 = vpack.c.b16 %v3902, %v3901
        %v3920 = vrot.slane %v574, 2
        %3922 = vmatprep.subr.bf16.mxu0 0
        %3923 = vmatpush1.bf16.msra.mxu0 %v3903
        %3924 = vmatprep.subr.bf16.mxu0 0
        %3925 = vmatpush1.bf16.msra.mxu0 %v3904
        %3926 = vmatprep.subr.bf16.mxu0 0
        %3927 = vmatpush1.bf16.msra.mxu0 %v3905
        %3928 = vmatprep.subr.bf16.mxu0 0
        %3929 = vmatpush1.bf16.msra.mxu0 %v3906
        %3930 = vmatprep.subr.bf16.mxu0 0
        %3931 = vmatpush1.bf16.msra.mxu0 %v3907
        %3932 = vmatprep.subr.bf16.mxu0 0
        %3933 = vmatpush1.bf16.msra.mxu0 %v3908
        %3934 = vmatprep.subr.bf16.mxu0 0
        %3935 = vmatpush1.bf16.msra.mxu0 %v3909
        %3936 = vmatprep.subr.bf16.mxu0 0
        %3937 = vmatpush1.bf16.msra.mxu0 %v3910
        %3938 = vmatprep.subr.bf16.mxu0 0
        %3939 = vmatpush1.bf16.msra.mxu0 0
        %3940 = vmatprep.subr.bf16.mxu0 0
        %3941 = vmatpush1.bf16.msra.mxu0 0
        %3942 = vmatprep.subr.bf16.mxu0 0
        %3943 = vmatpush1.bf16.msra.mxu0 0
        %3944 = vmatprep.subr.bf16.mxu0 0
        %3945 = vmatpush1.bf16.msra.mxu0 0
        %3946 = vmatprep.subr.bf16.mxu0 0
        %3947 = vmatpush1.bf16.msra.mxu0 0
        %3948 = vmatprep.subr.bf16.mxu0 0
        %3949 = vmatpush1.bf16.msra.mxu0 0
        %3950 = vmatprep.subr.bf16.mxu0 0
        %3951 = vmatpush1.bf16.msra.mxu0 0
        %3952 = vmatprep.subr.bf16.mxu0 0
        %3953 = vmatpush1.bf16.msra.mxu0 0
        %3954 = vmatprep.mubr.bf16.mxu0 0
        %3955 = vmatmul.mubr.bf16.gmra.mrb[0].mxu0 %v3854
        %v3956 = vpop.f32.mrb[0].mxu0
        %v3957 = vadd.f32 %v3920, %v3956
        %v3958 = vpop.f32.mrb[0].mxu0
        %v3959 = vpop.f32.mrb[0].mxu0
        %v3960 = vpop.f32.mrb[0].mxu0
        %3961 = vdwg.mxu0
        %v3962 = vtanh.pop %v3957
        %v3963 = vpack.c.bf16 %v3962, %v3962
        %v3964 = vld [vmem:[%s11] sm:$0xf]
        %v3965 = vld [vmem:[%s11 + $0x4] sm:$0xf]
        %v3966 = vld [vmem:[%s11 + $0x8] sm:$0xf]
        %v3967 = vld [vmem:[%s11 + $0xc] sm:$0xf]
        %v3968 = vld [vmem:[%s11 + $0x10] sm:$0xf]
        %v3969 = vld [vmem:[%s11 + $0x14] sm:$0xf]
        %v3970 = vld [vmem:[%s11 + $0x18] sm:$0xf]
        %v3971 = vld [vmem:[%s11 + $0x1c] sm:$0xf]
        %v3972 = vld [vmem:[%s11 + $0x20] sm:$0xf]
        %v3973 = vld [vmem:[%s11 + $0x24] sm:$0xf]
        %v3974 = vld [vmem:[%s11 + $0x28] sm:$0xf]
        %v3975 = vld [vmem:[%s11 + $0x2c] sm:$0xf]
        %v3976 = vld [vmem:[%s11 + $0x30] sm:$0xf]
        %v3977 = vld [vmem:[%s11 + $0x34] sm:$0xf]
        %v3978 = vld [vmem:[%s11 + $0x38] sm:$0xf]
        %v3979 = vld [vmem:[%s11 + $0x3c] sm:$0xf]
        %v3996 = vunpack.c.l.b16 %v3964
        %v3997 = vunpack.c.l.b16 %v3965
        %v3998 = vunpack.c.l.b16 %v3966
        %v3999 = vunpack.c.l.b16 %v3967
        %v4000 = vunpack.c.l.b16 %v3968
        %v4001 = vunpack.c.l.b16 %v3969
        %v4002 = vunpack.c.l.b16 %v3970
        %v4003 = vunpack.c.l.b16 %v3971
        %v4004 = vunpack.c.l.b16 %v3972
        %v4005 = vunpack.c.l.b16 %v3973
        %v4006 = vunpack.c.l.b16 %v3974
        %v4007 = vunpack.c.l.b16 %v3975
        %v4008 = vunpack.c.l.b16 %v3976
        %v4009 = vunpack.c.l.b16 %v3977
        %v4010 = vunpack.c.l.b16 %v3978
        %v4011 = vunpack.c.l.b16 %v3979
        %v4012 = vpack.c.b16 %v3997, %v3996
        %v4013 = vpack.c.b16 %v3999, %v3998
        %v4014 = vpack.c.b16 %v4001, %v4000
        %v4015 = vpack.c.b16 %v4003, %v4002
        %v4016 = vpack.c.b16 %v4005, %v4004
        %v4017 = vpack.c.b16 %v4007, %v4006
        %v4018 = vpack.c.b16 %v4009, %v4008
        %v4019 = vpack.c.b16 %v4011, %v4010
        %v4028 = vrot.slane %v574, 3
        %4030 = vmatprep.subr.bf16.mxu0 0
        %4031 = vmatpush1.bf16.msra.mxu0 %v4012
        %4032 = vmatprep.subr.bf16.mxu0 0
        %4033 = vmatpush1.bf16.msra.mxu0 %v4013
        %4034 = vmatprep.subr.bf16.mxu0 0
        %4035 = vmatpush1.bf16.msra.mxu0 %v4014
        %4036 = vmatprep.subr.bf16.mxu0 0
        %4037 = vmatpush1.bf16.msra.mxu0 %v4015
        %4038 = vmatprep.subr.bf16.mxu0 0
        %4039 = vmatpush1.bf16.msra.mxu0 %v4016
        %4040 = vmatprep.subr.bf16.mxu0 0
        %4041 = vmatpush1.bf16.msra.mxu0 %v4017
        %4042 = vmatprep.subr.bf16.mxu0 0
        %4043 = vmatpush1.bf16.msra.mxu0 %v4018
        %4044 = vmatprep.subr.bf16.mxu0 0
        %4045 = vmatpush1.bf16.msra.mxu0 %v4019
        %4046 = vmatprep.subr.bf16.mxu0 0
        %4047 = vmatpush1.bf16.msra.mxu0 0
        %4048 = vmatprep.subr.bf16.mxu0 0
        %4049 = vmatpush1.bf16.msra.mxu0 0
        %4050 = vmatprep.subr.bf16.mxu0 0
        %4051 = vmatpush1.bf16.msra.mxu0 0
        %4052 = vmatprep.subr.bf16.mxu0 0
        %4053 = vmatpush1.bf16.msra.mxu0 0
        %4054 = vmatprep.subr.bf16.mxu0 0
        %4055 = vmatpush1.bf16.msra.mxu0 0
        %4056 = vmatprep.subr.bf16.mxu0 0
        %4057 = vmatpush1.bf16.msra.mxu0 0
        %4058 = vmatprep.subr.bf16.mxu0 0
        %4059 = vmatpush1.bf16.msra.mxu0 0
        %4060 = vmatprep.subr.bf16.mxu0 0
        %4061 = vmatpush1.bf16.msra.mxu0 0
        %4062 = vmatprep.mubr.bf16.mxu0 0
        %4063 = vmatmul.mubr.bf16.gmra.mrb[0].mxu0 %v3963
        %v4064 = vpop.f32.mrb[0].mxu0
        %v4065 = vadd.f32 %v4028, %v4064
        %v4066 = vpop.f32.mrb[0].mxu0
        %v4067 = vpop.f32.mrb[0].mxu0
        %v4068 = vpop.f32.mrb[0].mxu0
        %4069 = vdwg.mxu0
        %4070 = vst [vmem:[%s572] sm:$0x1] %v4065
      $region76: #{fewrel_forward.3} parent=67 // pred_fallthru
        _
      %p4071 = scmp.lt.s32.totalorder %s27, 1
      %s4072 = scalar_select %p4071, %s27, 1
      %s4073 = scalar_lea.vmem %s12, %s4072
      // Predicated region
      $region77: #{fewrel_forward.3} parent=67 // pred_check
        %p4074 = pneg %p350
      $region78: #{fewrel_forward.3} parent=67 // pred_check_branch
        %4076 = sbr.rel (%p4074) target = $region80
      $region79: #{fewrel_forward.3} parent=67 // pred_region
        _
      $region80: #{fewrel_forward.3} parent=67 // pred_fallthru
        _
    $region68: #{fewrel_forward.3} parent=5 // pred_fallthru
      _
    %p4077 = scmp.le.s32.totalorder 2, %s18
    // Predicated region
    $region81: #{fewrel_forward.3} parent=5 // pred_check
      %p4078 = pneg %p4077
    $region82: #{fewrel_forward.3} parent=5 // pred_check_branch
      %4080 = sbr.rel (%p4078) target = $region84
    $region83: #{fewrel_forward.3} parent=5 // pred_region
      %s4081 = ssub.s32 %s18, 2
      // Predicated region
      $region85: #{fewrel_forward.3} parent=83 // pred_check
        %p4082 = pneg %p356
      $region86: #{fewrel_forward.3} parent=83 // pred_check_branch
        %4084 = sbr.rel (%p4082) target = $region88
      $region87: #{fewrel_forward.3} parent=83 // pred_region
        %p4085 = scmp.lt.s32.totalorder %s29, 1
        %s4086 = scalar_select %p4085, %s29, 1
        %s4087 = scalar_lea.vmem %s12, %s4086
      $region88: #{fewrel_forward.3} parent=83 // pred_fallthru
        _
    $region84: #{fewrel_forward.3} parent=5 // pred_fallthru
      _
  $region6: #{fewrel_forward.3} parent=0 // loop_footer
    %s22 = sadd.s32 1, %s18
  $region7: #{fewrel_forward.3} parent=0 // loop_footer_branch
    %17 = sbr.rel target = $region3
  $region8: #{fewrel_forward.3} parent=0 // loop_exit
    _

</llo_original>
